<compile_context>
chip_gen: v5e
topology: v5e:2x2
jax: 0.10.0
libtpu: 0.0.40
codegen_flags: <defaults>
</compile_context>

<pallas_src>
import numpy as np
import jax
import jax.numpy as jnp
from jax import lax
from jax.experimental import pallas as pl
from jax.experimental.pallas import tpu as pltpu

CODE = 128  # the PyTorch forward hardcodes shape_codes[:, :128] / [:, 128:]


def _round_up(a, m):
    return ((a + m - 1) // m) * m


def _out_dims(cfg):
    out_dim = 4 if cfg["use_viewdirs"] else cfg["output_ch"]
    return out_dim, max(128, _round_up(out_dim, 128))


def _vmem_limit_bytes():
    # Explicit scoped-VMEM budget, safe on every generation
    # (v5e/v6e: 128 MiB physical, v7x: only 64 MiB physical).
    try:
        cap = int(pltpu.get_tpu_info().vmem_capacity_bytes)
    except Exception:
        cap = 64 * 1024 * 1024
    return int(max(16 * 1024 * 1024, min(48 * 1024 * 1024, (cap * 3) // 4)))


# ---------------------------------------------------------------------------
# Kernel
# ---------------------------------------------------------------------------
def make_nerf_kernel(D, W, skips, use_viewdirs):
    """Pallas kernel for one batch tile of the NeRF MLP."""

    def kernel(*refs):
        out_ref = refs[-1]
        idx = 0
        pts = refs[idx][...]; idx += 1            # [TN, pad8(input_ch)]        bf16
        codes = refs[idx][...]; idx += 1          # [TN, 256]                   bf16
        if use_viewdirs:
            views = refs[idx][...]; idx += 1      # [TN, pad8(input_ch_views)]  bf16
        params = refs[idx:-1]

        p = [0]

        def nxt():
            r = params[p[0]][...]
            p[0] += 1
            return r

        def mm(a, b):                             # MXU pass, f32 accumulation
            return jnp.dot(a, b, preferred_element_type=jnp.float32)

        def act(v):                               # relu in f32, bf16 for next MXU pass
            return jnp.maximum(v, 0.0).astype(jnp.bfloat16)

        code_a = codes[:, :CODE]

        # pts_linears[0] on cat([pts, codes[:, :128]])  (split-weight form)
        w0p, w0c, b0 = nxt(), nxt(), nxt()
        h = act(mm(pts, w0p) + mm(code_a, w0c) + b0)

        # pts_linears[1..D-1]; layer i consumes cat([pts, codes, h]) iff (i-1) in skips
        for i in range(1, D):
            if (i - 1) in skips:
                wAp, wAc, wB, b = nxt(), nxt(), nxt(), nxt()
                h = act(mm(pts, wAp) + mm(code_a, wAc) + mm(h, wB) + b)
            else:
                w, b = nxt(), nxt()
                h = act(mm(h, w) + b)

        if use_viewdirs:
            code_b = codes[:, CODE:]
            # fused feature+alpha head: one MXU pass, alpha lives in column W
            wfa, bfa = nxt(), nxt()
            fa = mm(h, wfa) + bfa                        # [TN, W+1] f32
            feature = fa[:, :W].astype(jnp.bfloat16)
            alpha = fa[:, W:W + 1]                       # [TN, 1]  f32
            # views_linears[0] on cat([feature, views, codes[:, 128:]])
            wvF, wvV, wvC, bv = nxt(), nxt(), nxt(), nxt()
            h2 = act(mm(feature, wvF) + mm(views, wvV) + mm(code_b, wvC) + bv)
            # rgb head is lane-padded (cols 0..2 = rgb, rest 0); alpha -> column 3
            wr, br = nxt(), nxt()
            out = mm(h2, wr) + br                        # [TN, OUT_PAD] f32
            col = lax.broadcasted_iota(jnp.int32, out.shape, 1)
            out = jnp.where(col == 3, alpha, out)
            out_ref[...] = out.astype(out_ref.dtype)
        else:
            wo, bo = nxt(), nxt()                        # lane-padded output head
            out_ref[...] = (mm(h, wo) + bo).astype(out_ref.dtype)

    return kernel


# ---------------------------------------------------------------------------
# Parameter packing (PyTorch layout -> kernel operands)
# ---------------------------------------------------------------------------
def pack_params(params, cfg):
    """Convert PyTorch-layout params (weights [in,out], biases [1,out], f32) into
    the kernel operand list: bf16 weights (concats pre-split per source, tiny
    input widths zero-padded to 8, heads fused / lane-padded), f32 biases."""
    D, W = cfg["D"], cfg["W"]
    skips = cfg["skips"]
    ic, icv = cfg["input_ch"], cfg["input_ch_views"]
    use_viewdirs = cfg["use_viewdirs"]
    out_dim, out_pad = _out_dims(cfg)
    pc, vc = _round_up(ic, 8), _round_up(icv, 8)

    def wq(a):  # weight dtype (MXU-native)
        return a.astype(jnp.bfloat16)

    def bq(a):  # bias stays f32 (added to the f32 accumulator)
        return a.astype(jnp.float32)

    def pad_rows(a, rows):
        return jnp.pad(a, ((0, rows - a.shape[0]), (0, 0)))

    it = iter(params)
    packed = []

    # pts_linears[0]: input rows = [pts(ic), codes(:128)]
    w0, b0 = next(it), next(it)
    packed += [wq(pad_rows(w0[:ic], pc)), wq(w0[ic:]), bq(b0)]

    for i in range(1, D):
        wi, bi = next(it), next(it)
        if (i - 1) in skips:   # rows = [pts(ic), codes(128), h(W)]
            packed += [wq(pad_rows(wi[:ic], pc)),
                       wq(wi[ic:ic + CODE]),
                       wq(wi[ic + CODE:]),
                       bq(bi)]
        else:
            packed += [wq(wi), bq(bi)]

    if use_viewdirs:
        wf, bf = next(it), next(it)            # feature_linear [W, W]
        wa, ba = next(it), next(it)            # alpha_linear   [W, 1]
        packed += [wq(jnp.concatenate([wf, wa], axis=1)),     # fused [W, W+1]
                   bq(jnp.concatenate([bf, ba], axis=1))]
        wv, bv = next(it), next(it)            # views_linears[0]: rows = [feature, views, codes]
        packed += [wq(wv[:W]),
                   wq(pad_rows(wv[W:W + icv], vc)),
                   wq(wv[W + icv:]),
                   bq(bv)]
        wr, br = next(it), next(it)            # rgb_linear [W//2, 3] -> lane-pad
        wr_p = jnp.zeros((W // 2, out_pad), jnp.float32).at[:, :3].set(wr)
        br_p = jnp.zeros((1, out_pad), jnp.float32).at[:, :3].set(br)
        packed += [wq(wr_p), bq(br_p)]
    else:
        wo, bo = next(it), next(it)            # output_linear [W, output_ch] -> lane-pad
        wo_p = jnp.zeros((W, out_pad), jnp.float32).at[:, :out_dim].set(wo)
        bo_p = jnp.zeros((1, out_pad), jnp.float32).at[:, :out_dim].set(bo)
        packed += [wq(wo_p), bq(bo_p)]
    return packed


# ---------------------------------------------------------------------------
# Wrapper
# ---------------------------------------------------------------------------
def nerf_forward_pallas(x, shape_codes, params, cfg, tile_n=512):
    input_ch = cfg["input_ch"]
    input_ch_views = cfg["input_ch_views"]
    D, W = cfg["D"], cfg["W"]
    skips = cfg["skips"]
    use_viewdirs = cfg["use_viewdirs"]
    out_dim, out_pad = _out_dims(cfg)

    # The PyTorch forward hardcodes a 128/128 split of shape_codes.
    assert shape_codes.shape[-1] == 2 * CODE, "forward assumes shape_codes has 256 columns"

    packed = pack_params(params, cfg)

    N = x.shape[0]
    # Batch tile: as large as requested (fills the MXU M dim, amortizes per-step
    # overhead) but capped to keep >= 2 grid steps so both v7x TensorCores get
    # work; multiple of 8 for sublane alignment.
    half = max(8, _round_up((N + 1) // 2, 8))
    tn = max(8, (min(int(tile_n), half) // 8) * 8)
    n_pad = (-N) % tn
    N_p = N + n_pad

    pc = _round_up(input_ch, 8)
    vc = _round_up(input_ch_views, 8)

    def prep(a, width):
        return jnp.pad(a, ((0, n_pad), (0, width - a.shape[1]))).astype(jnp.bfloat16)

    operands = [prep(x[:, :input_ch], pc), prep(shape_codes, shape_codes.shape[1])]
    in_specs = [pl.BlockSpec((tn, pc), lambda i: (i, 0)),
                pl.BlockSpec((tn, shape_codes.shape[1]), lambda i: (i, 0))]
    if use_viewdirs:
        operands.append(prep(x[:, input_ch:input_ch + input_ch_views], vc))
        in_specs.append(pl.BlockSpec((tn, vc), lambda i: (i, 0)))
    for prm in packed:  # whole weights resident in VMEM (constant index_map)
        operands.append(prm)
        in_specs.append(pl.BlockSpec(prm.shape, lambda i: (0, 0)))

    out = pl.pallas_call(
        make_nerf_kernel(D, W, skips, use_viewdirs),
        out_shape=jax.ShapeDtypeStruct((N_p, out_pad), jnp.float32),
        grid=(N_p // tn,),
        in_specs=in_specs,
        out_specs=pl.BlockSpec((tn, out_pad), lambda i: (i, 0)),
        compiler_params=pltpu.CompilerParams(
            dimension_semantics=("parallel",),
            vmem_limit_bytes=_vmem_limit_bytes()),
    )(*operands)
    return out[:N, :out_dim]


# ---------------------------------------------------------------------------
# Deterministic init (torch nn.Linear default: U(-1/sqrt(in), 1/sqrt(in)));
# weights stored transposed as [in, out], biases as [1, out], all f32.
# ---------------------------------------------------------------------------
def init_params(key, cfg):
    D, W = cfg["D"], cfg["W"]
    input_ch = cfg["input_ch"]
    input_ch_views = cfg["input_ch_views"]
    skips = cfg["skips"]
    use_viewdirs = cfg["use_viewdirs"]
    output_ch = cfg["output_ch"]
    C_pts = input_ch + CODE

    keys = iter(jax.random.split(key, 2 * (D + 8)))

    def linear(fan_in, fan_out):
        kw, kb = jax.random.split(next(keys))
        bound = 1.0 / np.sqrt(fan_in)
        w = jax.random.uniform(kw, (fan_in, fan_out), jnp.float32, -bound, bound)
        b = jax.random.uniform(kb, (1, fan_out), jnp.float32, -bound, bound)
        return [w, b]

    params = linear(C_pts, W)
    for i in range(1, D):
        fin = C_pts + W if (i - 1) in skips else W
        params += linear(fin, W)
    if use_viewdirs:
        params += linear(W, W)                               # feature_linear
        params += linear(W, 1)                               # alpha_linear
        params += linear(W + input_ch_views + CODE, W // 2)  # views_linears[0]
        params += linear(W // 2, 3)                          # rgb_linear
    else:
        params += linear(W, output_ch)                       # output_linear
    return params


# ---------------------------------------------------------------------------
# Pure-JAX f32 reference mirroring the PyTorch forward (real concatenations)
# ---------------------------------------------------------------------------
def nerf_forward_ref(x, shape_codes, params, cfg):
    input_ch = cfg["input_ch"]
    input_ch_views = cfg["input_ch_views"]
    D = cfg["D"]
    skips = cfg["skips"]
    use_viewdirs = cfg["use_viewdirs"]

    input_pts = x[:, :input_ch]
    input_views = x[:, input_ch:input_ch + input_ch_views]

    it = iter(params)
    h = jnp.concatenate([input_pts, shape_codes[:, :CODE]], axis=-1)
    for i in range(D):
        w, b = next(it), next(it)
        h = jax.nn.relu(h @ w + b)
        if i in skips:
            h = jnp.concatenate([input_pts, shape_codes[:, :CODE], h], axis=-1)

    if use_viewdirs:
        wf, bf = next(it), next(it)
        wa, ba = next(it), next(it)
        alpha = h @ wa + ba
        feature = h @ wf + bf
        hh = jnp.concatenate([feature, input_views, shape_codes[:, CODE:]], axis=-1)
        wv, bv = next(it), next(it)
        hh = jax.nn.relu(hh @ wv + bv)
        wr, br = next(it), next(it)
        rgb = hh @ wr + br
        return jnp.concatenate([rgb, alpha], axis=-1)
    wo, bo = next(it), next(it)
    return h @ wo + bo


# ---------------------------------------------------------------------------
if __name__ == "__main__":
    key = jax.random.PRNGKey(0)
    k_x, k_c, k_p1, k_p2 = jax.random.split(key, 4)

    # Small config consistent with the module (forward hardcodes a 128-wide
    # shape-code split, so input_code_ch=128 and shape_codes has 256 cols).
    N = 300
    base_cfg = dict(D=4, W=256, input_ch=3, input_ch_views=3,
                    input_code_ch=128, output_ch=4, skips=[2])

    x = jax.random.normal(
        k_x, (N, base_cfg["input_ch"] + base_cfg["input_ch_views"]), jnp.float32)
    shape_codes = jax.random.normal(k_c, (N, 256), jnp.float32)

    ok = True
    msgs = []
    for use_viewdirs, kp in [(False, k_p1), (True, k_p2)]:
        cfg = dict(base_cfg, use_viewdirs=use_viewdirs)
        params = init_params(kp, cfg)
        out = jax.block_until_ready(nerf_forward_pallas(x, shape_codes, params, cfg))
        ref = jax.block_until_ready(nerf_forward_ref(x, shape_codes, params, cfg))
        err = float(jnp.max(jnp.abs(out - ref)))
        if out.shape != ref.shape or not np.allclose(
                np.asarray(out), np.asarray(ref), rtol=2e-2, atol=2e-2):
            ok = False
            msgs.append(f"use_viewdirs={use_viewdirs}: max|err|={err:.4e} "
                        f"shapes {out.shape} vs {ref.shape}")

    if ok:
        print("KERNEL_OK")
    else:
        print("KERNEL_MISMATCH: " + "; ".join(msgs))
</pallas_src>

<mosaic_0001>
module attributes {stable_mosaic.version = 11 : i64} {
  func.func @kernel(%arg0: i32, %arg1: memref<152x8xbf16, #tpu.memory_space<vmem>>, %arg2: memref<152x256xbf16, #tpu.memory_space<vmem>>, %arg3: memref<8x256xbf16, #tpu.memory_space<vmem>>, %arg4: memref<128x256xbf16, #tpu.memory_space<vmem>>, %arg5: memref<1x256xf32, #tpu.memory_space<vmem>>, %arg6: memref<256x256xbf16, #tpu.memory_space<vmem>>, %arg7: memref<1x256xf32, #tpu.memory_space<vmem>>, %arg8: memref<256x256xbf16, #tpu.memory_space<vmem>>, %arg9: memref<1x256xf32, #tpu.memory_space<vmem>>, %arg10: memref<8x256xbf16, #tpu.memory_space<vmem>>, %arg11: memref<128x256xbf16, #tpu.memory_space<vmem>>, %arg12: memref<256x256xbf16, #tpu.memory_space<vmem>>, %arg13: memref<1x256xf32, #tpu.memory_space<vmem>>, %arg14: memref<256x128xbf16, #tpu.memory_space<vmem>>, %arg15: memref<1x128xf32, #tpu.memory_space<vmem>>, %arg16: memref<152x128xf32, #tpu.memory_space<vmem>>) attributes {dimension_semantics = [#tpu.dimension_semantics<parallel>], iteration_bounds = array<i64: 2>, scalar_prefetch = 0 : i64, scratch_operands = 0 : i64, tpu.core_type = #tpu.core_type<tc>, window_params = [{transform_indices = @transform_0, window_bounds = array<i64: 152, 8>}, {transform_indices = @transform_1, window_bounds = array<i64: 152, 256>}, {pipeline_mode = #tpu.pipeline_mode<synchronous>, transform_indices = @transform_2, window_bounds = array<i64: 8, 256>}, {pipeline_mode = #tpu.pipeline_mode<synchronous>, transform_indices = @transform_3, window_bounds = array<i64: 128, 256>}, {pipeline_mode = #tpu.pipeline_mode<synchronous>, transform_indices = @transform_4, window_bounds = array<i64: 1, 256>}, {pipeline_mode = #tpu.pipeline_mode<synchronous>, transform_indices = @transform_5, window_bounds = array<i64: 256, 256>}, {pipeline_mode = #tpu.pipeline_mode<synchronous>, transform_indices = @transform_6, window_bounds = array<i64: 1, 256>}, {pipeline_mode = #tpu.pipeline_mode<synchronous>, transform_indices = @transform_7, window_bounds = array<i64: 256, 256>}, {pipeline_mode = #tpu.pipeline_mode<synchronous>, transform_indices = @transform_8, window_bounds = array<i64: 1, 256>}, {pipeline_mode = #tpu.pipeline_mode<synchronous>, transform_indices = @transform_9, window_bounds = array<i64: 8, 256>}, {pipeline_mode = #tpu.pipeline_mode<synchronous>, transform_indices = @transform_10, window_bounds = array<i64: 128, 256>}, {pipeline_mode = #tpu.pipeline_mode<synchronous>, transform_indices = @transform_11, window_bounds = array<i64: 256, 256>}, {pipeline_mode = #tpu.pipeline_mode<synchronous>, transform_indices = @transform_12, window_bounds = array<i64: 1, 256>}, {pipeline_mode = #tpu.pipeline_mode<synchronous>, transform_indices = @transform_13, window_bounds = array<i64: 256, 128>}, {pipeline_mode = #tpu.pipeline_mode<synchronous>, transform_indices = @transform_14, window_bounds = array<i64: 1, 128>}, {transform_indices = @transform_15, window_bounds = array<i64: 152, 128>}]} {
    %c0 = arith.constant 0 : index
    %c0_0 = arith.constant 0 : index
    %0 = vector.load %arg1[%c0, %c0_0] : memref<152x8xbf16, #tpu.memory_space<vmem>>, vector<152x8xbf16>
    %c0_1 = arith.constant 0 : index
    %c0_2 = arith.constant 0 : index
    %1 = vector.load %arg2[%c0_1, %c0_2] : memref<152x256xbf16, #tpu.memory_space<vmem>>, vector<152x256xbf16>
    %2 = vector.extract_strided_slice %1 {offsets = [0, 0], sizes = [152, 128], strides = [1, 1]} : vector<152x256xbf16> to vector<152x128xbf16>
    %c0_3 = arith.constant 0 : index
    %c0_4 = arith.constant 0 : index
    %3 = vector.load %arg3[%c0_3, %c0_4] : memref<8x256xbf16, #tpu.memory_space<vmem>>, vector<8x256xbf16>
    %c0_5 = arith.constant 0 : index
    %c0_6 = arith.constant 0 : index
    %4 = vector.load %arg4[%c0_5, %c0_6] : memref<128x256xbf16, #tpu.memory_space<vmem>>, vector<128x256xbf16>
    %c0_7 = arith.constant 0 : index
    %c0_8 = arith.constant 0 : index
    %5 = vector.load %arg5[%c0_7, %c0_8] : memref<1x256xf32, #tpu.memory_space<vmem>>, vector<1x256xf32>
    %cst = arith.constant dense<0.000000e+00> : vector<152x256xf32>
    %6 = tpu.matmul %0, %3, %cst {dimension_numbers = #tpu.dot_dimension_numbers<[1], [0], [0], [1], [0, 0, 1, 1], [], []>} : vector<152x8xbf16>, vector<8x256xbf16>, vector<152x256xf32> -> vector<152x256xf32>
    %cst_9 = arith.constant dense<0.000000e+00> : vector<152x256xf32>
    %7 = tpu.matmul %2, %4, %cst_9 {dimension_numbers = #tpu.dot_dimension_numbers<[1], [0], [0], [1], [0, 0, 1, 1], [], []>} : vector<152x128xbf16>, vector<128x256xbf16>, vector<152x256xf32> -> vector<152x256xf32>
    %8 = arith.addf %6, %7 : vector<152x256xf32>
    %9 = vector.broadcast %5 : vector<1x256xf32> to vector<152x256xf32>
    %10 = arith.addf %8, %9 : vector<152x256xf32>
    %cst_10 = arith.constant 0.000000e+00 : f32
    %11 = vector.broadcast %cst_10 : f32 to vector<152x256xf32>
    %12 = arith.maximumf %10, %11 : vector<152x256xf32>
    %13 = arith.truncf %12 : vector<152x256xf32> to vector<152x256xbf16>
    %c0_11 = arith.constant 0 : index
    %c0_12 = arith.constant 0 : index
    %14 = vector.load %arg6[%c0_11, %c0_12] : memref<256x256xbf16, #tpu.memory_space<vmem>>, vector<256x256xbf16>
    %c0_13 = arith.constant 0 : index
    %c0_14 = arith.constant 0 : index
    %15 = vector.load %arg7[%c0_13, %c0_14] : memref<1x256xf32, #tpu.memory_space<vmem>>, vector<1x256xf32>
    %cst_15 = arith.constant dense<0.000000e+00> : vector<152x256xf32>
    %16 = tpu.matmul %13, %14, %cst_15 {dimension_numbers = #tpu.dot_dimension_numbers<[1], [0], [0], [1], [0, 0, 1, 1], [], []>} : vector<152x256xbf16>, vector<256x256xbf16>, vector<152x256xf32> -> vector<152x256xf32>
    %17 = vector.broadcast %15 : vector<1x256xf32> to vector<152x256xf32>
    %18 = arith.addf %16, %17 : vector<152x256xf32>
    %cst_16 = arith.constant 0.000000e+00 : f32
    %19 = vector.broadcast %cst_16 : f32 to vector<152x256xf32>
    %20 = arith.maximumf %18, %19 : vector<152x256xf32>
    %21 = arith.truncf %20 : vector<152x256xf32> to vector<152x256xbf16>
    %c0_17 = arith.constant 0 : index
    %c0_18 = arith.constant 0 : index
    %22 = vector.load %arg8[%c0_17, %c0_18] : memref<256x256xbf16, #tpu.memory_space<vmem>>, vector<256x256xbf16>
    %c0_19 = arith.constant 0 : index
    %c0_20 = arith.constant 0 : index
    %23 = vector.load %arg9[%c0_19, %c0_20] : memref<1x256xf32, #tpu.memory_space<vmem>>, vector<1x256xf32>
    %cst_21 = arith.constant dense<0.000000e+00> : vector<152x256xf32>
    %24 = tpu.matmul %21, %22, %cst_21 {dimension_numbers = #tpu.dot_dimension_numbers<[1], [0], [0], [1], [0, 0, 1, 1], [], []>} : vector<152x256xbf16>, vector<256x256xbf16>, vector<152x256xf32> -> vector<152x256xf32>
    %25 = vector.broadcast %23 : vector<1x256xf32> to vector<152x256xf32>
    %26 = arith.addf %24, %25 : vector<152x256xf32>
    %cst_22 = arith.constant 0.000000e+00 : f32
    %27 = vector.broadcast %cst_22 : f32 to vector<152x256xf32>
    %28 = arith.maximumf %26, %27 : vector<152x256xf32>
    %29 = arith.truncf %28 : vector<152x256xf32> to vector<152x256xbf16>
    %c0_23 = arith.constant 0 : index
    %c0_24 = arith.constant 0 : index
    %30 = vector.load %arg10[%c0_23, %c0_24] : memref<8x256xbf16, #tpu.memory_space<vmem>>, vector<8x256xbf16>
    %c0_25 = arith.constant 0 : index
    %c0_26 = arith.constant 0 : index
    %31 = vector.load %arg11[%c0_25, %c0_26] : memref<128x256xbf16, #tpu.memory_space<vmem>>, vector<128x256xbf16>
    %c0_27 = arith.constant 0 : index
    %c0_28 = arith.constant 0 : index
    %32 = vector.load %arg12[%c0_27, %c0_28] : memref<256x256xbf16, #tpu.memory_space<vmem>>, vector<256x256xbf16>
    %c0_29 = arith.constant 0 : index
    %c0_30 = arith.constant 0 : index
    %33 = vector.load %arg13[%c0_29, %c0_30] : memref<1x256xf32, #tpu.memory_space<vmem>>, vector<1x256xf32>
    %cst_31 = arith.constant dense<0.000000e+00> : vector<152x256xf32>
    %34 = tpu.matmul %0, %30, %cst_31 {dimension_numbers = #tpu.dot_dimension_numbers<[1], [0], [0], [1], [0, 0, 1, 1], [], []>} : vector<152x8xbf16>, vector<8x256xbf16>, vector<152x256xf32> -> vector<152x256xf32>
    %cst_32 = arith.constant dense<0.000000e+00> : vector<152x256xf32>
    %35 = tpu.matmul %2, %31, %cst_32 {dimension_numbers = #tpu.dot_dimension_numbers<[1], [0], [0], [1], [0, 0, 1, 1], [], []>} : vector<152x128xbf16>, vector<128x256xbf16>, vector<152x256xf32> -> vector<152x256xf32>
    %36 = arith.addf %34, %35 : vector<152x256xf32>
    %cst_33 = arith.constant dense<0.000000e+00> : vector<152x256xf32>
    %37 = tpu.matmul %29, %32, %cst_33 {dimension_numbers = #tpu.dot_dimension_numbers<[1], [0], [0], [1], [0, 0, 1, 1], [], []>} : vector<152x256xbf16>, vector<256x256xbf16>, vector<152x256xf32> -> vector<152x256xf32>
    %38 = arith.addf %36, %37 : vector<152x256xf32>
    %39 = vector.broadcast %33 : vector<1x256xf32> to vector<152x256xf32>
    %40 = arith.addf %38, %39 : vector<152x256xf32>
    %cst_34 = arith.constant 0.000000e+00 : f32
    %41 = vector.broadcast %cst_34 : f32 to vector<152x256xf32>
    %42 = arith.maximumf %40, %41 : vector<152x256xf32>
    %43 = arith.truncf %42 : vector<152x256xf32> to vector<152x256xbf16>
    %c0_35 = arith.constant 0 : index
    %c0_36 = arith.constant 0 : index
    %44 = vector.load %arg14[%c0_35, %c0_36] : memref<256x128xbf16, #tpu.memory_space<vmem>>, vector<256x128xbf16>
    %c0_37 = arith.constant 0 : index
    %c0_38 = arith.constant 0 : index
    %45 = vector.load %arg15[%c0_37, %c0_38] : memref<1x128xf32, #tpu.memory_space<vmem>>, vector<1x128xf32>
    %cst_39 = arith.constant dense<0.000000e+00> : vector<152x128xf32>
    %46 = tpu.matmul %43, %44, %cst_39 {dimension_numbers = #tpu.dot_dimension_numbers<[1], [0], [0], [1], [0, 0, 1, 1], [], []>} : vector<152x256xbf16>, vector<256x128xbf16>, vector<152x128xf32> -> vector<152x128xf32>
    %47 = vector.broadcast %45 : vector<1x128xf32> to vector<152x128xf32>
    %48 = arith.addf %46, %47 : vector<152x128xf32>
    %c0_40 = arith.constant 0 : index
    %c0_41 = arith.constant 0 : index
    %49 = vector.load %arg16[%c0_40, %c0_41] : memref<152x128xf32, #tpu.memory_space<vmem>>, vector<152x128xf32>
    tpu.vector_store %arg16[%c0_40, %c0_41], %48 {strides = array<i32>} : memref<152x128xf32, #tpu.memory_space<vmem>>, vector<152x128xf32>,
    return
  }
  func.func @transform_0(%arg0: i32) -> (i32, i32) {
    %c0_i32 = arith.constant 0 : i32
    %c0_i32_0 = arith.constant 0 : i32
    return %arg0, %c0_i32 : i32, i32
  }
  func.func @transform_1(%arg0: i32) -> (i32, i32) {
    %c0_i32 = arith.constant 0 : i32
    %c0_i32_0 = arith.constant 0 : i32
    return %arg0, %c0_i32 : i32, i32
  }
  func.func @transform_2(%arg0: i32) -> (i32, i32) {
    %c0_i32 = arith.constant 0 : i32
    %c0_i32_0 = arith.constant 0 : i32
    %c0_i32_1 = arith.constant 0 : i32
    return %c0_i32, %c0_i32_0 : i32, i32
  }
  func.func @transform_3(%arg0: i32) -> (i32, i32) {
    %c0_i32 = arith.constant 0 : i32
    %c0_i32_0 = arith.constant 0 : i32
    %c0_i32_1 = arith.constant 0 : i32
    return %c0_i32, %c0_i32_0 : i32, i32
  }
  func.func @transform_4(%arg0: i32) -> (i32, i32) {
    %c0_i32 = arith.constant 0 : i32
    %c0_i32_0 = arith.constant 0 : i32
    %c0_i32_1 = arith.constant 0 : i32
    return %c0_i32, %c0_i32_0 : i32, i32
  }
  func.func @transform_5(%arg0: i32) -> (i32, i32) {
    %c0_i32 = arith.constant 0 : i32
    %c0_i32_0 = arith.constant 0 : i32
    %c0_i32_1 = arith.constant 0 : i32
    return %c0_i32, %c0_i32_0 : i32, i32
  }
  func.func @transform_6(%arg0: i32) -> (i32, i32) {
    %c0_i32 = arith.constant 0 : i32
    %c0_i32_0 = arith.constant 0 : i32
    %c0_i32_1 = arith.constant 0 : i32
    return %c0_i32, %c0_i32_0 : i32, i32
  }
  func.func @transform_7(%arg0: i32) -> (i32, i32) {
    %c0_i32 = arith.constant 0 : i32
    %c0_i32_0 = arith.constant 0 : i32
    %c0_i32_1 = arith.constant 0 : i32
    return %c0_i32, %c0_i32_0 : i32, i32
  }
  func.func @transform_8(%arg0: i32) -> (i32, i32) {
    %c0_i32 = arith.constant 0 : i32
    %c0_i32_0 = arith.constant 0 : i32
    %c0_i32_1 = arith.constant 0 : i32
    return %c0_i32, %c0_i32_0 : i32, i32
  }
  func.func @transform_9(%arg0: i32) -> (i32, i32) {
    %c0_i32 = arith.constant 0 : i32
    %c0_i32_0 = arith.constant 0 : i32
    %c0_i32_1 = arith.constant 0 : i32
    return %c0_i32, %c0_i32_0 : i32, i32
  }
  func.func @transform_10(%arg0: i32) -> (i32, i32) {
    %c0_i32 = arith.constant 0 : i32
    %c0_i32_0 = arith.constant 0 : i32
    %c0_i32_1 = arith.constant 0 : i32
    return %c0_i32, %c0_i32_0 : i32, i32
  }
  func.func @transform_11(%arg0: i32) -> (i32, i32) {
    %c0_i32 = arith.constant 0 : i32
    %c0_i32_0 = arith.constant 0 : i32
    %c0_i32_1 = arith.constant 0 : i32
    return %c0_i32, %c0_i32_0 : i32, i32
  }
  func.func @transform_12(%arg0: i32) -> (i32, i32) {
    %c0_i32 = arith.constant 0 : i32
    %c0_i32_0 = arith.constant 0 : i32
    %c0_i32_1 = arith.constant 0 : i32
    return %c0_i32, %c0_i32_0 : i32, i32
  }
  func.func @transform_13(%arg0: i32) -> (i32, i32) {
    %c0_i32 = arith.constant 0 : i32
    %c0_i32_0 = arith.constant 0 : i32
    %c0_i32_1 = arith.constant 0 : i32
    return %c0_i32, %c0_i32_0 : i32, i32
  }
  func.func @transform_14(%arg0: i32) -> (i32, i32) {
    %c0_i32 = arith.constant 0 : i32
    %c0_i32_0 = arith.constant 0 : i32
    %c0_i32_1 = arith.constant 0 : i32
    return %c0_i32, %c0_i32_0 : i32, i32
  }
  func.func @transform_15(%arg0: i32) -> (i32, i32) {
    %c0_i32 = arith.constant 0 : i32
    %c0_i32_0 = arith.constant 0 : i32
    return %arg0, %c0_i32 : i32, i32
  }
}

</mosaic_0001>

<llo_original>
// kernel: tpu_custom_call.1
$region0: #{tpu_custom_call.1}
  #allocation0 [shape = 'u32[]', space=smem, size = 0x4, offset = 0x4, fixed_abs, tag = 'smem constant byte address 0x4 - core index']
  #allocation1 [shape = 'u32[72,128]{1,0:T(1,128)}', space=vmem, size = 0x9000, scoped, tag = 'internal scratch']
  %s0 = inlined_call_operand.vmem [shape: bf16[304,8], index: 0, kind: input, shape index: {}]
  %s1 = inlined_call_operand.hbm [shape: bf16[304,256], index: 1, kind: input, shape index: {}]
  %s2 = inlined_call_operand.vmem [shape: bf16[8,256], index: 2, kind: input, shape index: {}]
  %s3 = inlined_call_operand.vmem [shape: bf16[128,256], index: 3, kind: input, shape index: {}]
  %s4 = inlined_call_operand.vmem [shape: f32[1,256], index: 4, kind: input, shape index: {}]
  %s5 = inlined_call_operand.hbm [shape: bf16[256,256], index: 5, kind: input, shape index: {}]
  %s6 = inlined_call_operand.vmem [shape: f32[1,256], index: 6, kind: input, shape index: {}]
  %s7 = inlined_call_operand.hbm [shape: bf16[256,256], index: 7, kind: input, shape index: {}]
  %s8 = inlined_call_operand.vmem [shape: f32[1,256], index: 8, kind: input, shape index: {}]
  %s9 = inlined_call_operand.vmem [shape: bf16[8,256], index: 9, kind: input, shape index: {}]
  %s10 = inlined_call_operand.hbm [shape: bf16[128,256], index: 10, kind: input, shape index: {}]
  %s11 = inlined_call_operand.hbm [shape: bf16[256,256], index: 11, kind: input, shape index: {}]
  %s12 = inlined_call_operand.vmem [shape: f32[1,256], index: 12, kind: input, shape index: {}]
  %s13 = inlined_call_operand.hbm [shape: bf16[256,128], index: 13, kind: input, shape index: {}]
  %s14 = inlined_call_operand.vmem [shape: f32[1,128], index: 14, kind: input, shape index: {}]
  %s15 = inlined_call_operand.hbm [shape: f32[304,128], index: 15, kind: output, shape index: {}]
  %s16 = sld [smem:[#allocation0]]
  $region117: #{tpu_custom_call.1} parent=0
    _
  %s18 = ssub.s32 1, %s16
  %s19 = scalar_select 0, %s18, %s16
  $region1: #{tpu_custom_call.1} parent=0
    #allocation2 [shape = 'u8[155648]{0}', space=vmem, size = 0x26000, scoped, tag = 'input window, operand 1']
    #allocation3 [shape = 's32[2]{0}', space=sflag, size = 0x8, scoped, tag = 'scoped memory for tpu_custom_call.1']
    #allocation4 [shape = 's32[2]{0}', space=sflag, size = 0x8, scoped, tag = 'scoped memory for tpu_custom_call.1']
    #allocation5 [shape = 'u8[131072]{0}', space=vmem, size = 0x20000, scoped, tag = 'input window, operand 5, single buffered']
    #allocation6 [shape = 's32[1]{0}', space=sflag, size = 0x4, scoped, tag = 'scoped memory for tpu_custom_call.1']
    #allocation7 [shape = 'u8[131072]{0}', space=vmem, size = 0x20000, scoped, tag = 'input window, operand 7, single buffered']
    #allocation8 [shape = 'u8[65536]{0}', space=vmem, size = 0x10000, scoped, tag = 'input window, operand 10, single buffered']
    #allocation9 [shape = 's32[1]{0}', space=sflag, size = 0x4, scoped, tag = 'scoped memory for tpu_custom_call.1']
    #allocation10 [shape = 'u8[131072]{0}', space=vmem, size = 0x20000, scoped, tag = 'input window, operand 11, single buffered']
    #allocation11 [shape = 'u8[65536]{0}', space=vmem, size = 0x10000, scoped, tag = 'input window, operand 13, single buffered']
    #allocation12 [shape = 's32[1]{0}', space=sflag, size = 0x4, scoped, tag = 'scoped memory for tpu_custom_call.1']
    #allocation13 [shape = 'u8[155648]{0}', space=vmem, size = 0x26000, scoped, tag = 'output window, operand 0']
    %20 = vsyncpa [#allocation3], 0
    %s21 = scalar_lea.sflag [#allocation3], 1
    %22 = vsyncpa %s21, 0
    %23 = vsyncpa [#allocation6], 0
    %24 = vsyncpa [#allocation9], 0
    %25 = vsyncpa [#allocation12], 0
    %26 = vsyncpa [#allocation4], 0
    %s27 = scalar_lea.sflag [#allocation4], 1
    %28 = vsyncpa %s27, 0
    loop: start=0, step=1, limit=4
    $region2: #{tpu_custom_call.1} parent=1 // loop_pre_header
      _
    $region3: #{tpu_custom_call.1} parent=1 // loop_header
      %s30 = sphi 0, %s34
      %p31 = scmp.ge.s32.totalorder %s30, 4
      %s40 = sphi 0, %s42
      %s43 = sphi 0, %s40
      %s44 = sphi 0, %s43
      %s60 = sphi 0, %s44
      %s66 = sphi 0, %s68
      %s69 = sphi 0, %s66
      %s70 = sphi 0, %s69
      %s86 = sphi 0, %s70
      %s90 = sphi 0, %s90
      %s92 = sphi 0, %s90
      %s93 = sphi 0, %s92
      %s107 = sphi 0, %s93
      %s111 = sphi 0, %s111
      %s113 = sphi 0, %s111
      %s114 = sphi 0, %s113
      %s128 = sphi 0, %s114
      %s132 = sphi 0, %s132
      %s134 = sphi 0, %s132
      %s135 = sphi 0, %s134
      %s149 = sphi 0, %s135
      %s153 = sphi 0, %s153
      %s155 = sphi 0, %s153
      %s156 = sphi 0, %s155
      %s170 = sphi 0, %s156
      %s174 = sphi 0, %s174
      %s176 = sphi 0, %s174
      %s177 = sphi 0, %s176
      %s191 = sphi 0, %s177
      %s195 = sphi 0, %s195
      %s197 = sphi 0, %s195
      %s198 = sphi 0, %s197
      %s212 = sphi 0, %s198
      %s216 = sphi 0, %s216
      %s218 = sphi 0, %s216
      %s219 = sphi 0, %s218
      %s233 = sphi 0, %s219
      %s237 = sphi 0, %s237
      %s239 = sphi 0, %s237
      %s240 = sphi 0, %s239
      %s254 = sphi 0, %s240
      %s258 = sphi 0, %s258
      %s260 = sphi 0, %s258
      %s261 = sphi 0, %s260
      %s275 = sphi 0, %s261
      %s279 = sphi 0, %s279
      %s281 = sphi 0, %s279
      %s282 = sphi 0, %s281
      %s296 = sphi 0, %s282
      %s300 = sphi 0, %s300
      %s302 = sphi 0, %s300
      %s303 = sphi 0, %s302
      %s317 = sphi 0, %s303
      %s321 = sphi 0, %s321
      %s323 = sphi 0, %s321
      %s324 = sphi 0, %s323
      %s338 = sphi 0, %s324
      %s342 = sphi 0, %s342
      %s344 = sphi 0, %s342
      %s345 = sphi 0, %s344
      %s359 = sphi 0, %s345
      %s365 = sphi 0, %s367
      %s368 = sphi 0, %s365
      %s369 = sphi 0, %s368
      %s385 = sphi 0, %s369
    $region4: #{tpu_custom_call.1} parent=1 // loop_header_branch
      %33 = sbr.rel (%p31) target = $region8
    $region5: #{tpu_custom_call.1} parent=1 // loop_body
      %s35 = ssub.s32 %s30, 1
      %s36 = ssub.s32 %s30, 2
      %s37 = sadd.s32 %s30, 1
      %s38 = ssub.s32 %s30, %s37
      %p39 = scmp.eq.s32.totalorder %s38, 0
      %s41 = sadd.s32 %s40, 1
      %s42 = scalar_select %p39, %s40, %s41
      %p45 = pneg %p39
      %p46 = scmp.eq.s32.totalorder %s30, 1
      %p47 = por %p45, %p46
      %p48 = scmp.ne.s32.totalorder %s40, %s43
      %p49 = scmp.eq.s32.totalorder %s30, 0
      %p50 = por %p48, %p49
      %p51 = scmp.ne.s32.totalorder %s40, %s43
      %p52 = scmp.eq.s32.totalorder %s35, 1
      %p53 = por %p51, %p52
      %p54 = scmp.ne.s32.totalorder %s43, %s44
      %p55 = scmp.eq.s32.totalorder %s35, 0
      %p56 = por %p54, %p55
      %p57 = scmp.ne.s32.totalorder %s43, %s44
      %p58 = scmp.eq.s32.totalorder %s36, 1
      %p59 = por %p57, %p58
      %p61 = scmp.ne.s32.totalorder %s44, %s60
      %p62 = scmp.eq.s32.totalorder %s36, 0
      %p63 = por %p61, %p62
      %s64 = ssub.s32 %s30, %s37
      %p65 = scmp.eq.s32.totalorder %s64, 0
      %s67 = sadd.s32 %s66, 1
      %s68 = scalar_select %p65, %s66, %s67
      %p71 = pneg %p65
      %p72 = scmp.eq.s32.totalorder %s30, 1
      %p73 = por %p71, %p72
      %p74 = scmp.ne.s32.totalorder %s66, %s69
      %p75 = scmp.eq.s32.totalorder %s30, 0
      %p76 = por %p74, %p75
      %p77 = scmp.ne.s32.totalorder %s66, %s69
      %p78 = scmp.eq.s32.totalorder %s35, 1
      %p79 = por %p77, %p78
      %p80 = scmp.ne.s32.totalorder %s69, %s70
      %p81 = scmp.eq.s32.totalorder %s35, 0
      %p82 = por %p80, %p81
      %p83 = scmp.ne.s32.totalorder %s69, %s70
      %p84 = scmp.eq.s32.totalorder %s36, 1
      %p85 = por %p83, %p84
      %p87 = scmp.ne.s32.totalorder %s70, %s86
      %p88 = scmp.eq.s32.totalorder %s36, 0
      %p89 = por %p87, %p88
      %s91 = sadd.s32 %s90, 1
      %p94 = scmp.eq.s32.totalorder %s30, 1
      %p95 = scmp.ne.s32.totalorder %s90, %s92
      %p96 = scmp.eq.s32.totalorder %s30, 0
      %p97 = por %p95, %p96
      %p98 = scmp.ne.s32.totalorder %s90, %s92
      %p99 = scmp.eq.s32.totalorder %s35, 1
      %p100 = por %p98, %p99
      %p101 = scmp.ne.s32.totalorder %s92, %s93
      %p102 = scmp.eq.s32.totalorder %s35, 0
      %p103 = por %p101, %p102
      %p104 = scmp.ne.s32.totalorder %s92, %s93
      %p105 = scmp.eq.s32.totalorder %s36, 1
      %p106 = por %p104, %p105
      %p108 = scmp.ne.s32.totalorder %s93, %s107
      %p109 = scmp.eq.s32.totalorder %s36, 0
      %p110 = por %p108, %p109
      %s112 = sadd.s32 %s111, 1
      %p115 = scmp.eq.s32.totalorder %s30, 1
      %p116 = scmp.ne.s32.totalorder %s111, %s113
      %p117 = scmp.eq.s32.totalorder %s30, 0
      %p118 = por %p116, %p117
      %p119 = scmp.ne.s32.totalorder %s111, %s113
      %p120 = scmp.eq.s32.totalorder %s35, 1
      %p121 = por %p119, %p120
      %p122 = scmp.ne.s32.totalorder %s113, %s114
      %p123 = scmp.eq.s32.totalorder %s35, 0
      %p124 = por %p122, %p123
      %p125 = scmp.ne.s32.totalorder %s113, %s114
      %p126 = scmp.eq.s32.totalorder %s36, 1
      %p127 = por %p125, %p126
      %p129 = scmp.ne.s32.totalorder %s114, %s128
      %p130 = scmp.eq.s32.totalorder %s36, 0
      %p131 = por %p129, %p130
      %s133 = sadd.s32 %s132, 1
      %p136 = scmp.eq.s32.totalorder %s30, 1
      %p137 = scmp.ne.s32.totalorder %s132, %s134
      %p138 = scmp.eq.s32.totalorder %s30, 0
      %p139 = por %p137, %p138
      %p140 = scmp.ne.s32.totalorder %s132, %s134
      %p141 = scmp.eq.s32.totalorder %s35, 1
      %p142 = por %p140, %p141
      %p143 = scmp.ne.s32.totalorder %s134, %s135
      %p144 = scmp.eq.s32.totalorder %s35, 0
      %p145 = por %p143, %p144
      %p146 = scmp.ne.s32.totalorder %s134, %s135
      %p147 = scmp.eq.s32.totalorder %s36, 1
      %p148 = por %p146, %p147
      %p150 = scmp.ne.s32.totalorder %s135, %s149
      %p151 = scmp.eq.s32.totalorder %s36, 0
      %p152 = por %p150, %p151
      %s154 = sadd.s32 %s153, 1
      %p157 = scmp.eq.s32.totalorder %s30, 1
      %p158 = scmp.ne.s32.totalorder %s153, %s155
      %p159 = scmp.eq.s32.totalorder %s30, 0
      %p160 = por %p158, %p159
      %p161 = scmp.ne.s32.totalorder %s153, %s155
      %p162 = scmp.eq.s32.totalorder %s35, 1
      %p163 = por %p161, %p162
      %p164 = scmp.ne.s32.totalorder %s155, %s156
      %p165 = scmp.eq.s32.totalorder %s35, 0
      %p166 = por %p164, %p165
      %p167 = scmp.ne.s32.totalorder %s155, %s156
      %p168 = scmp.eq.s32.totalorder %s36, 1
      %p169 = por %p167, %p168
      %p171 = scmp.ne.s32.totalorder %s156, %s170
      %p172 = scmp.eq.s32.totalorder %s36, 0
      %p173 = por %p171, %p172
      %s175 = sadd.s32 %s174, 1
      %p178 = scmp.eq.s32.totalorder %s30, 1
      %p179 = scmp.ne.s32.totalorder %s174, %s176
      %p180 = scmp.eq.s32.totalorder %s30, 0
      %p181 = por %p179, %p180
      %p182 = scmp.ne.s32.totalorder %s174, %s176
      %p183 = scmp.eq.s32.totalorder %s35, 1
      %p184 = por %p182, %p183
      %p185 = scmp.ne.s32.totalorder %s176, %s177
      %p186 = scmp.eq.s32.totalorder %s35, 0
      %p187 = por %p185, %p186
      %p188 = scmp.ne.s32.totalorder %s176, %s177
      %p189 = scmp.eq.s32.totalorder %s36, 1
      %p190 = por %p188, %p189
      %p192 = scmp.ne.s32.totalorder %s177, %s191
      %p193 = scmp.eq.s32.totalorder %s36, 0
      %p194 = por %p192, %p193
      %s196 = sadd.s32 %s195, 1
      %p199 = scmp.eq.s32.totalorder %s30, 1
      %p200 = scmp.ne.s32.totalorder %s195, %s197
      %p201 = scmp.eq.s32.totalorder %s30, 0
      %p202 = por %p200, %p201
      %p203 = scmp.ne.s32.totalorder %s195, %s197
      %p204 = scmp.eq.s32.totalorder %s35, 1
      %p205 = por %p203, %p204
      %p206 = scmp.ne.s32.totalorder %s197, %s198
      %p207 = scmp.eq.s32.totalorder %s35, 0
      %p208 = por %p206, %p207
      %p209 = scmp.ne.s32.totalorder %s197, %s198
      %p210 = scmp.eq.s32.totalorder %s36, 1
      %p211 = por %p209, %p210
      %p213 = scmp.ne.s32.totalorder %s198, %s212
      %p214 = scmp.eq.s32.totalorder %s36, 0
      %p215 = por %p213, %p214
      %s217 = sadd.s32 %s216, 1
      %p220 = scmp.eq.s32.totalorder %s30, 1
      %p221 = scmp.ne.s32.totalorder %s216, %s218
      %p222 = scmp.eq.s32.totalorder %s30, 0
      %p223 = por %p221, %p222
      %p224 = scmp.ne.s32.totalorder %s216, %s218
      %p225 = scmp.eq.s32.totalorder %s35, 1
      %p226 = por %p224, %p225
      %p227 = scmp.ne.s32.totalorder %s218, %s219
      %p228 = scmp.eq.s32.totalorder %s35, 0
      %p229 = por %p227, %p228
      %p230 = scmp.ne.s32.totalorder %s218, %s219
      %p231 = scmp.eq.s32.totalorder %s36, 1
      %p232 = por %p230, %p231
      %p234 = scmp.ne.s32.totalorder %s219, %s233
      %p235 = scmp.eq.s32.totalorder %s36, 0
      %p236 = por %p234, %p235
      %s238 = sadd.s32 %s237, 1
      %p241 = scmp.eq.s32.totalorder %s30, 1
      %p242 = scmp.ne.s32.totalorder %s237, %s239
      %p243 = scmp.eq.s32.totalorder %s30, 0
      %p244 = por %p242, %p243
      %p245 = scmp.ne.s32.totalorder %s237, %s239
      %p246 = scmp.eq.s32.totalorder %s35, 1
      %p247 = por %p245, %p246
      %p248 = scmp.ne.s32.totalorder %s239, %s240
      %p249 = scmp.eq.s32.totalorder %s35, 0
      %p250 = por %p248, %p249
      %p251 = scmp.ne.s32.totalorder %s239, %s240
      %p252 = scmp.eq.s32.totalorder %s36, 1
      %p253 = por %p251, %p252
      %p255 = scmp.ne.s32.totalorder %s240, %s254
      %p256 = scmp.eq.s32.totalorder %s36, 0
      %p257 = por %p255, %p256
      %s259 = sadd.s32 %s258, 1
      %p262 = scmp.eq.s32.totalorder %s30, 1
      %p263 = scmp.ne.s32.totalorder %s258, %s260
      %p264 = scmp.eq.s32.totalorder %s30, 0
      %p265 = por %p263, %p264
      %p266 = scmp.ne.s32.totalorder %s258, %s260
      %p267 = scmp.eq.s32.totalorder %s35, 1
      %p268 = por %p266, %p267
      %p269 = scmp.ne.s32.totalorder %s260, %s261
      %p270 = scmp.eq.s32.totalorder %s35, 0
      %p271 = por %p269, %p270
      %p272 = scmp.ne.s32.totalorder %s260, %s261
      %p273 = scmp.eq.s32.totalorder %s36, 1
      %p274 = por %p272, %p273
      %p276 = scmp.ne.s32.totalorder %s261, %s275
      %p277 = scmp.eq.s32.totalorder %s36, 0
      %p278 = por %p276, %p277
      %s280 = sadd.s32 %s279, 1
      %p283 = scmp.eq.s32.totalorder %s30, 1
      %p284 = scmp.ne.s32.totalorder %s279, %s281
      %p285 = scmp.eq.s32.totalorder %s30, 0
      %p286 = por %p284, %p285
      %p287 = scmp.ne.s32.totalorder %s279, %s281
      %p288 = scmp.eq.s32.totalorder %s35, 1
      %p289 = por %p287, %p288
      %p290 = scmp.ne.s32.totalorder %s281, %s282
      %p291 = scmp.eq.s32.totalorder %s35, 0
      %p292 = por %p290, %p291
      %p293 = scmp.ne.s32.totalorder %s281, %s282
      %p294 = scmp.eq.s32.totalorder %s36, 1
      %p295 = por %p293, %p294
      %p297 = scmp.ne.s32.totalorder %s282, %s296
      %p298 = scmp.eq.s32.totalorder %s36, 0
      %p299 = por %p297, %p298
      %s301 = sadd.s32 %s300, 1
      %p304 = scmp.eq.s32.totalorder %s30, 1
      %p305 = scmp.ne.s32.totalorder %s300, %s302
      %p306 = scmp.eq.s32.totalorder %s30, 0
      %p307 = por %p305, %p306
      %p308 = scmp.ne.s32.totalorder %s300, %s302
      %p309 = scmp.eq.s32.totalorder %s35, 1
      %p310 = por %p308, %p309
      %p311 = scmp.ne.s32.totalorder %s302, %s303
      %p312 = scmp.eq.s32.totalorder %s35, 0
      %p313 = por %p311, %p312
      %p314 = scmp.ne.s32.totalorder %s302, %s303
      %p315 = scmp.eq.s32.totalorder %s36, 1
      %p316 = por %p314, %p315
      %p318 = scmp.ne.s32.totalorder %s303, %s317
      %p319 = scmp.eq.s32.totalorder %s36, 0
      %p320 = por %p318, %p319
      %s322 = sadd.s32 %s321, 1
      %p325 = scmp.eq.s32.totalorder %s30, 1
      %p326 = scmp.ne.s32.totalorder %s321, %s323
      %p327 = scmp.eq.s32.totalorder %s30, 0
      %p328 = por %p326, %p327
      %p329 = scmp.ne.s32.totalorder %s321, %s323
      %p330 = scmp.eq.s32.totalorder %s35, 1
      %p331 = por %p329, %p330
      %p332 = scmp.ne.s32.totalorder %s323, %s324
      %p333 = scmp.eq.s32.totalorder %s35, 0
      %p334 = por %p332, %p333
      %p335 = scmp.ne.s32.totalorder %s323, %s324
      %p336 = scmp.eq.s32.totalorder %s36, 1
      %p337 = por %p335, %p336
      %p339 = scmp.ne.s32.totalorder %s324, %s338
      %p340 = scmp.eq.s32.totalorder %s36, 0
      %p341 = por %p339, %p340
      %s343 = sadd.s32 %s342, 1
      %p346 = scmp.eq.s32.totalorder %s30, 1
      %p347 = scmp.ne.s32.totalorder %s342, %s344
      %p348 = scmp.eq.s32.totalorder %s30, 0
      %p349 = por %p347, %p348
      %p350 = scmp.ne.s32.totalorder %s342, %s344
      %p351 = scmp.eq.s32.totalorder %s35, 1
      %p352 = por %p350, %p351
      %p353 = scmp.ne.s32.totalorder %s344, %s345
      %p354 = scmp.eq.s32.totalorder %s35, 0
      %p355 = por %p353, %p354
      %p356 = scmp.ne.s32.totalorder %s344, %s345
      %p357 = scmp.eq.s32.totalorder %s36, 1
      %p358 = por %p356, %p357
      %p360 = scmp.ne.s32.totalorder %s345, %s359
      %p361 = scmp.eq.s32.totalorder %s36, 0
      %p362 = por %p360, %p361
      %s363 = ssub.s32 %s30, %s37
      %p364 = scmp.eq.s32.totalorder %s363, 0
      %s366 = sadd.s32 %s365, 1
      %s367 = scalar_select %p364, %s365, %s366
      %p370 = pneg %p364
      %p371 = scmp.eq.s32.totalorder %s30, 1
      %p372 = por %p370, %p371
      %p373 = scmp.ne.s32.totalorder %s365, %s368
      %p374 = scmp.eq.s32.totalorder %s30, 0
      %p375 = por %p373, %p374
      %p376 = scmp.ne.s32.totalorder %s365, %s368
      %p377 = scmp.eq.s32.totalorder %s35, 1
      %p378 = por %p376, %p377
      %p379 = scmp.ne.s32.totalorder %s368, %s369
      %p380 = scmp.eq.s32.totalorder %s35, 0
      %p381 = por %p379, %p380
      %p382 = scmp.ne.s32.totalorder %s368, %s369
      %p383 = scmp.eq.s32.totalorder %s36, 1
      %p384 = por %p382, %p383
      %p386 = scmp.ne.s32.totalorder %s369, %s385
      %p387 = scmp.eq.s32.totalorder %s36, 0
      %p388 = por %p386, %p387
      %p389 = scmp.le.s32.totalorder 1, %s30
      %p390 = scmp.lt.s32.totalorder %s30, 3
      %p391 = pnand %p389, %p390
      %p392 = pneg %p391
      // Predicated region
      $region9: #{tpu_custom_call.1} parent=5 // pred_check
        _
      $region10: #{tpu_custom_call.1} parent=5 // pred_check_branch
        %394 = sbr.rel (%p391) target = $region12
      $region11: #{tpu_custom_call.1} parent=5 // pred_region
        %s395 = ssub.s32 %s30, 1
        // Predicated region
        $region13: #{tpu_custom_call.1} parent=11 // pred_check
          %p396 = pneg %p103
        $region14: #{tpu_custom_call.1} parent=11 // pred_check_branch
          %398 = sbr.rel (%p396) target = $region16
        $region15: #{tpu_custom_call.1} parent=11 // pred_region
          _
        $region16: #{tpu_custom_call.1} parent=11 // pred_fallthru
          _
        // Predicated region
        $region17: #{tpu_custom_call.1} parent=11 // pred_check
          %p399 = pneg %p124
        $region18: #{tpu_custom_call.1} parent=11 // pred_check_branch
          %401 = sbr.rel (%p399) target = $region20
        $region19: #{tpu_custom_call.1} parent=11 // pred_region
          _
        $region20: #{tpu_custom_call.1} parent=11 // pred_fallthru
          _
        // Predicated region
        $region21: #{tpu_custom_call.1} parent=11 // pred_check
          %p402 = pneg %p145
        $region22: #{tpu_custom_call.1} parent=11 // pred_check_branch
          %404 = sbr.rel (%p402) target = $region24
        $region23: #{tpu_custom_call.1} parent=11 // pred_region
          _
        $region24: #{tpu_custom_call.1} parent=11 // pred_fallthru
          _
        // Predicated region
        $region25: #{tpu_custom_call.1} parent=11 // pred_check
          %p405 = pneg %p166
        $region26: #{tpu_custom_call.1} parent=11 // pred_check_branch
          %407 = sbr.rel (%p405) target = $region28
        $region27: #{tpu_custom_call.1} parent=11 // pred_region
          %409 = vsyncadd [#allocation6], 0
          %s410 = sshll.u32 %s5, 4
          %s411 = int_to_ptr.hbm [resolvable:$true] %s410
          %s412 = sshll.u32 [#allocation5], 4
          %s413 = int_to_ptr.vmem [resolvable:$true] %s412
          %418 = dma.hbm_to_vmem [thread:$0]  %s411, 4096, %s413, [#allocation6], 128, 128, 8
        $region28: #{tpu_custom_call.1} parent=11 // pred_fallthru
          _
        // Predicated region
        $region29: #{tpu_custom_call.1} parent=11 // pred_check
          %p419 = pneg %p187
        $region30: #{tpu_custom_call.1} parent=11 // pred_check_branch
          %421 = sbr.rel (%p419) target = $region32
        $region31: #{tpu_custom_call.1} parent=11 // pred_region
          _
        $region32: #{tpu_custom_call.1} parent=11 // pred_fallthru
          _
        // Predicated region
        $region33: #{tpu_custom_call.1} parent=11 // pred_check
          %p422 = pneg %p208
        $region34: #{tpu_custom_call.1} parent=11 // pred_check_branch
          %424 = sbr.rel (%p422) target = $region36
        $region35: #{tpu_custom_call.1} parent=11 // pred_region
          %426 = vsyncadd [#allocation6], 0
          %s427 = sshll.u32 %s7, 4
          %s428 = int_to_ptr.hbm [resolvable:$true] %s427
          %s429 = sshll.u32 [#allocation7], 4
          %s430 = int_to_ptr.vmem [resolvable:$true] %s429
          %435 = dma.hbm_to_vmem [thread:$0]  %s428, 4096, %s430, [#allocation6], 128, 128, 8
        $region36: #{tpu_custom_call.1} parent=11 // pred_fallthru
          _
        // Predicated region
        $region37: #{tpu_custom_call.1} parent=11 // pred_check
          %p436 = pneg %p229
        $region38: #{tpu_custom_call.1} parent=11 // pred_check_branch
          %438 = sbr.rel (%p436) target = $region40
        $region39: #{tpu_custom_call.1} parent=11 // pred_region
          _
        $region40: #{tpu_custom_call.1} parent=11 // pred_fallthru
          _
        // Predicated region
        $region41: #{tpu_custom_call.1} parent=11 // pred_check
          %p439 = pneg %p250
        $region42: #{tpu_custom_call.1} parent=11 // pred_check_branch
          %441 = sbr.rel (%p439) target = $region44
        $region43: #{tpu_custom_call.1} parent=11 // pred_region
          _
        $region44: #{tpu_custom_call.1} parent=11 // pred_fallthru
          _
        // Predicated region
        $region45: #{tpu_custom_call.1} parent=11 // pred_check
          %p442 = pneg %p271
        $region46: #{tpu_custom_call.1} parent=11 // pred_check_branch
          %444 = sbr.rel (%p442) target = $region48
        $region47: #{tpu_custom_call.1} parent=11 // pred_region
          %446 = vsyncadd [#allocation9], 0
          %s447 = sshll.u32 %s10, 4
          %s448 = int_to_ptr.hbm [resolvable:$true] %s447
          %s449 = sshll.u32 [#allocation8], 4
          %s450 = int_to_ptr.vmem [resolvable:$true] %s449
          %455 = dma.hbm_to_vmem [thread:$0]  %s448, 2048, %s450, [#allocation9], 128, 128, 8
        $region48: #{tpu_custom_call.1} parent=11 // pred_fallthru
          _
        // Predicated region
        $region49: #{tpu_custom_call.1} parent=11 // pred_check
          %p456 = pneg %p292
        $region50: #{tpu_custom_call.1} parent=11 // pred_check_branch
          %458 = sbr.rel (%p456) target = $region52
        $region51: #{tpu_custom_call.1} parent=11 // pred_region
          %460 = vsyncadd [#allocation9], 0
          %s461 = sshll.u32 %s11, 4
          %s462 = int_to_ptr.hbm [resolvable:$true] %s461
          %s463 = sshll.u32 [#allocation10], 4
          %s464 = int_to_ptr.vmem [resolvable:$true] %s463
          %469 = dma.hbm_to_vmem [thread:$0]  %s462, 4096, %s464, [#allocation9], 128, 128, 8
        $region52: #{tpu_custom_call.1} parent=11 // pred_fallthru
          _
        // Predicated region
        $region53: #{tpu_custom_call.1} parent=11 // pred_check
          %p470 = pneg %p313
        $region54: #{tpu_custom_call.1} parent=11 // pred_check_branch
          %472 = sbr.rel (%p470) target = $region56
        $region55: #{tpu_custom_call.1} parent=11 // pred_region
          _
        $region56: #{tpu_custom_call.1} parent=11 // pred_fallthru
          _
        // Predicated region
        $region57: #{tpu_custom_call.1} parent=11 // pred_check
          %p473 = pneg %p334
        $region58: #{tpu_custom_call.1} parent=11 // pred_check_branch
          %475 = sbr.rel (%p473) target = $region60
        $region59: #{tpu_custom_call.1} parent=11 // pred_region
          %477 = vsyncadd [#allocation12], 0
          %s478 = sshll.u32 %s13, 4
          %s479 = int_to_ptr.hbm [resolvable:$true] %s478
          %s480 = sshll.u32 [#allocation11], 4
          %s481 = int_to_ptr.vmem [resolvable:$true] %s480
          %486 = dma.hbm_to_vmem [thread:$0]  %s479, 2048, %s481, [#allocation12], 64, 64, 4
        $region60: #{tpu_custom_call.1} parent=11 // pred_fallthru
          _
        // Predicated region
        $region61: #{tpu_custom_call.1} parent=11 // pred_check
          %p487 = pneg %p355
        $region62: #{tpu_custom_call.1} parent=11 // pred_check_branch
          %489 = sbr.rel (%p487) target = $region64
        $region63: #{tpu_custom_call.1} parent=11 // pred_region
          _
        $region64: #{tpu_custom_call.1} parent=11 // pred_fallthru
          _
      $region12: #{tpu_custom_call.1} parent=5 // pred_fallthru
        _
      %p490 = scmp.lt.s32.totalorder %s30, 2
      // Predicated region
      $region65: #{tpu_custom_call.1} parent=5 // pred_check
        %p491 = pneg %p490
      $region66: #{tpu_custom_call.1} parent=5 // pred_check_branch
        %493 = sbr.rel (%p491) target = $region68
      $region67: #{tpu_custom_call.1} parent=5 // pred_region
        // Predicated region
        $region69: #{tpu_custom_call.1} parent=67 // pred_check
          %p494 = pneg %p50
        $region70: #{tpu_custom_call.1} parent=67 // pred_check_branch
          %496 = sbr.rel (%p494) target = $region72
        $region71: #{tpu_custom_call.1} parent=67 // pred_region
          %s497 = smul.u32 19, %s30
          %p498 = scmp.lt.s32.totalorder %s497, 37
          %s499 = scalar_select %p498, %s497, 37
          %s500 = smul.addr %s499, 4
          %s501 = scalar_lea.vmem %s0, %s500
          %s502 = smul.u32 19, %s30
        $region72: #{tpu_custom_call.1} parent=67 // pred_fallthru
          _
        // Predicated region
        $region73: #{tpu_custom_call.1} parent=67 // pred_check
          %p503 = pneg %p76
        $region74: #{tpu_custom_call.1} parent=67 // pred_check_branch
          %505 = sbr.rel (%p503) target = $region76
        $region75: #{tpu_custom_call.1} parent=67 // pred_region
          %s506 = sand.u32 %s66, 1
          %s507 = scalar_lea.sflag [#allocation3], %s506
          %s508 = sand.u32 %s66, 1
          %s509 = smul.addr %s508, 152
          %s510 = scalar_lea.vmem [#allocation2], %s509
          %s511 = smul.u32 19, %s30
          %513 = vsyncadd %s507, 0
          %s514 = smul.addr %s511, 2
          %s515 = smul.addr %s514, 4
          %s516 = scalar_lea.hbm %s1, %s515
          %s517 = sshll.u32 %s516, 4
          %s518 = int_to_ptr.hbm [resolvable:$true] %s517
          %s519 = sshll.u32 %s510, 4
          %s520 = int_to_ptr.vmem [resolvable:$true] %s519
          %525 = dma.hbm_to_vmem [thread:$0]  %s518, 2432, %s520, %s507, 128, 128, 8
        $region76: #{tpu_custom_call.1} parent=67 // pred_fallthru
          _
      $region68: #{tpu_custom_call.1} parent=5 // pred_fallthru
        _
      %p526 = scmp.le.s32.totalorder 1, %s30
      %p527 = scmp.lt.s32.totalorder %s30, 3
      %p528 = pnand %p526, %p527
      %p529 = pneg %p528
      // Predicated region
      $region77: #{tpu_custom_call.1} parent=5 // pred_check
        _
      $region78: #{tpu_custom_call.1} parent=5 // pred_check_branch
        %531 = sbr.rel (%p528) target = $region80
      $region79: #{tpu_custom_call.1} parent=5 // pred_region
        %s532 = ssub.s32 %s30, 1
        %s533 = sand.u32 %s69, 1
        %s534 = scalar_lea.sflag [#allocation3], %s533
        %s535 = sand.u32 %s69, 1
        %s536 = smul.addr %s535, 152
        %s537 = scalar_lea.vmem [#allocation2], %s536
        // Predicated region
        $region81: #{tpu_custom_call.1} parent=79 // pred_check
          %p538 = pneg %p82
        $region82: #{tpu_custom_call.1} parent=79 // pred_check_branch
          %540 = sbr.rel (%p538) target = $region84
        $region83: #{tpu_custom_call.1} parent=79 // pred_region
          %542 = dma.done %s534, 2432
        $region84: #{tpu_custom_call.1} parent=79 // pred_fallthru
          _
        // Predicated region
        $region85: #{tpu_custom_call.1} parent=79 // pred_check
          %p543 = pneg %p166
        $region86: #{tpu_custom_call.1} parent=79 // pred_check_branch
          %545 = sbr.rel (%p543) target = $region88
        $region87: #{tpu_custom_call.1} parent=79 // pred_region
          %547 = dma.done [#allocation6], 4096
        $region88: #{tpu_custom_call.1} parent=79 // pred_fallthru
          _
        // Predicated region
        $region89: #{tpu_custom_call.1} parent=79 // pred_check
          %p548 = pneg %p208
        $region90: #{tpu_custom_call.1} parent=79 // pred_check_branch
          %550 = sbr.rel (%p548) target = $region92
        $region91: #{tpu_custom_call.1} parent=79 // pred_region
          %552 = dma.done [#allocation6], 4096
        $region92: #{tpu_custom_call.1} parent=79 // pred_fallthru
          _
        // Predicated region
        $region93: #{tpu_custom_call.1} parent=79 // pred_check
          %p553 = pneg %p271
        $region94: #{tpu_custom_call.1} parent=79 // pred_check_branch
          %555 = sbr.rel (%p553) target = $region96
        $region95: #{tpu_custom_call.1} parent=79 // pred_region
          %557 = dma.done [#allocation9], 2048
        $region96: #{tpu_custom_call.1} parent=79 // pred_fallthru
          _
        // Predicated region
        $region97: #{tpu_custom_call.1} parent=79 // pred_check
          %p558 = pneg %p292
        $region98: #{tpu_custom_call.1} parent=79 // pred_check_branch
          %560 = sbr.rel (%p558) target = $region100
        $region99: #{tpu_custom_call.1} parent=79 // pred_region
          %562 = dma.done [#allocation9], 4096
        $region100: #{tpu_custom_call.1} parent=79 // pred_fallthru
          _
        // Predicated region
        $region101: #{tpu_custom_call.1} parent=79 // pred_check
          %p563 = pneg %p334
        $region102: #{tpu_custom_call.1} parent=79 // pred_check_branch
          %565 = sbr.rel (%p563) target = $region104
        $region103: #{tpu_custom_call.1} parent=79 // pred_region
          %567 = dma.done [#allocation12], 2048
        $region104: #{tpu_custom_call.1} parent=79 // pred_fallthru
          _
        %s568 = smul.u32 19, %s35
        %p569 = scmp.lt.s32.totalorder %s568, 37
        %s570 = scalar_select %p569, %s568, 37
        %s571 = smul.addr %s570, 4
        %s572 = scalar_lea.vmem %s0, %s571
        %p573 = pneg %p56
        %p574 = pneg %p53
        %s575 = sand.u32 %s69, 1
        %s576 = scalar_lea.sflag [#allocation3], %s575
        %s577 = sand.u32 %s69, 1
        %s578 = smul.addr %s577, 152
        %s579 = scalar_lea.vmem [#allocation2], %s578
        %p580 = pneg %p82
        %p581 = pneg %p79
        %p582 = pneg %p103
        %p583 = pneg %p100
        %p584 = pneg %p124
        %p585 = pneg %p121
        %p586 = pneg %p145
        %p587 = pneg %p142
        %p588 = pneg %p166
        %p589 = pneg %p163
        %p590 = pneg %p187
        %p591 = pneg %p184
        %p592 = pneg %p208
        %p593 = pneg %p205
        %p594 = pneg %p229
        %p595 = pneg %p226
        %p596 = pneg %p250
        %p597 = pneg %p247
        %p598 = pneg %p271
        %p599 = pneg %p268
        %p600 = pneg %p292
        %p601 = pneg %p289
        %p602 = pneg %p313
        %p603 = pneg %p310
        %p604 = pneg %p334
        %p605 = pneg %p331
        %p606 = pneg %p355
        %p607 = pneg %p352
        %p608 = pneg %p381
        %p609 = pneg %p378
        %s610 = sand.u32 %s368, 1
        %s611 = scalar_lea.sflag [#allocation4], %s610
        %s612 = sand.u32 %s368, 1
        %s613 = smul.addr %s612, 152
        %s614 = scalar_lea.vmem [#allocation13], %s613
        %s615 = smul.u32 19, %s35
        %p616 = scmp.lt.s32.totalorder %s615, 37
        %s617 = scalar_select %p616, %s615, 37
        %s618 = smul.addr %s617, 4
        %s619 = scalar_lea.vmem %s0, %s618
        %s620 = smul.u32 19, %s35
        %s621 = smul.u32 19, %s35
        %s622 = smul.u32 19, %s35
        %v624 = vld [vmem:[%s619] sm:$0xf]
        %v625 = vld [vmem:[%s619 + $0x4] sm:$0xf]
        %v626 = vld [vmem:[%s619 + $0x8] sm:$0xf]
        %v627 = vld [vmem:[%s619 + $0xc] sm:$0xf]
        %v628 = vld [vmem:[%s619 + $0x10] sm:$0xf]
        %v629 = vld [vmem:[%s619 + $0x14] sm:$0xf]
        %v630 = vld [vmem:[%s619 + $0x18] sm:$0xf]
        %v631 = vld [vmem:[%s619 + $0x1c] sm:$0xf]
        %v632 = vld [vmem:[%s619 + $0x20] sm:$0xf]
        %v633 = vld [vmem:[%s619 + $0x24] sm:$0xf]
        %v634 = vld [vmem:[%s619 + $0x28] sm:$0xf]
        %v635 = vld [vmem:[%s619 + $0x2c] sm:$0xf]
        %v636 = vld [vmem:[%s619 + $0x30] sm:$0xf]
        %v637 = vld [vmem:[%s619 + $0x34] sm:$0xf]
        %v638 = vld [vmem:[%s619 + $0x38] sm:$0xf]
        %v639 = vld [vmem:[%s619 + $0x3c] sm:$0xf]
        %v640 = vld [vmem:[%s619 + $0x40] sm:$0xf]
        %v641 = vld [vmem:[%s619 + $0x44] sm:$0xf]
        %v642 = vld [vmem:[%s619 + $0x48] sm:$0xf]
        %v643 = vld [vmem:[%s537] sm:$0xff]
        %v644 = vld [vmem:[%s537 + $0x8] sm:$0xff]
        %v645 = vld [vmem:[%s537 + $0x10] sm:$0xff]
        %v646 = vld [vmem:[%s537 + $0x18] sm:$0xff]
        %v647 = vld [vmem:[%s537 + $0x20] sm:$0xff]
        %v648 = vld [vmem:[%s537 + $0x28] sm:$0xff]
        %v649 = vld [vmem:[%s537 + $0x30] sm:$0xff]
        %v650 = vld [vmem:[%s537 + $0x38] sm:$0xff]
        %v651 = vld [vmem:[%s537 + $0x40] sm:$0xff]
        %v652 = vld [vmem:[%s537 + $0x48] sm:$0xff]
        %v653 = vld [vmem:[%s537 + $0x50] sm:$0xff]
        %v654 = vld [vmem:[%s537 + $0x58] sm:$0xff]
        %v655 = vld [vmem:[%s537 + $0x60] sm:$0xff]
        %v656 = vld [vmem:[%s537 + $0x68] sm:$0xff]
        %v657 = vld [vmem:[%s537 + $0x70] sm:$0xff]
        %v658 = vld [vmem:[%s537 + $0x78] sm:$0xff]
        %v659 = vld [vmem:[%s537 + $0x80] sm:$0xff]
        %v660 = vld [vmem:[%s537 + $0x88] sm:$0xff]
        %v661 = vld [vmem:[%s537 + $0x90] sm:$0xff]
        %v662 = vld [vmem:[%s2] sm:$0xff]
        %v663 = vld [vmem:[%s3] sm:$0xff]
        %v664 = vld [vmem:[%s3 + $0x8] sm:$0xff]
        %v665 = vld [vmem:[%s3 + $0x10] sm:$0xff]
        %v666 = vld [vmem:[%s3 + $0x18] sm:$0xff]
        %v667 = vld [vmem:[%s3 + $0x20] sm:$0xff]
        %v668 = vld [vmem:[%s3 + $0x28] sm:$0xff]
        %v669 = vld [vmem:[%s3 + $0x30] sm:$0xff]
        %v670 = vld [vmem:[%s3 + $0x38] sm:$0xff]
        %v671 = vld [vmem:[%s3 + $0x40] sm:$0xff]
        %v672 = vld [vmem:[%s3 + $0x48] sm:$0xff]
        %v673 = vld [vmem:[%s3 + $0x50] sm:$0xff]
        %v674 = vld [vmem:[%s3 + $0x58] sm:$0xff]
        %v675 = vld [vmem:[%s3 + $0x60] sm:$0xff]
        %v676 = vld [vmem:[%s3 + $0x68] sm:$0xff]
        %v677 = vld [vmem:[%s3 + $0x70] sm:$0xff]
        %v678 = vld [vmem:[%s3 + $0x78] sm:$0xff]
        %v679 = vld [vmem:[%s4] sm:$0x3]
        %v699 = vunpack.c.l.b16 %v643
        %v700 = vunpack.c.l.b16 %v644
        %v701 = vunpack.c.l.b16 %v645
        %v702 = vunpack.c.l.b16 %v646
        %v703 = vunpack.c.l.b16 %v647
        %v704 = vunpack.c.l.b16 %v648
        %v705 = vunpack.c.l.b16 %v649
        %v706 = vunpack.c.l.b16 %v650
        %v707 = vunpack.c.l.b16 %v651
        %v708 = vunpack.c.l.b16 %v652
        %v709 = vunpack.c.l.b16 %v653
        %v710 = vunpack.c.l.b16 %v654
        %v711 = vunpack.c.l.b16 %v655
        %v712 = vunpack.c.l.b16 %v656
        %v713 = vunpack.c.l.b16 %v657
        %v714 = vunpack.c.l.b16 %v658
        %v715 = vunpack.c.l.b16 %v659
        %v716 = vunpack.c.l.b16 %v660
        %v717 = vunpack.c.l.b16 %v661
        %v718 = vpack.c.b16 %v700, %v699
        %v719 = vpack.c.b16 %v702, %v701
        %v720 = vpack.c.b16 %v704, %v703
        %v721 = vpack.c.b16 %v706, %v705
        %v722 = vpack.c.b16 %v708, %v707
        %v723 = vpack.c.b16 %v710, %v709
        %v724 = vpack.c.b16 %v712, %v711
        %v725 = vpack.c.b16 %v714, %v713
        %v726 = vpack.c.b16 %v716, %v715
        %v727 = vpack.c.b16 %v717, %v717
        %v754 = vunpack.c.l.b16 %v663
        %v755 = vunpack.c.h.b16 %v663
        %v756 = vunpack.c.l.b16 %v664
        %v757 = vunpack.c.h.b16 %v664
        %v758 = vunpack.c.l.b16 %v665
        %v759 = vunpack.c.h.b16 %v665
        %v760 = vunpack.c.l.b16 %v666
        %v761 = vunpack.c.h.b16 %v666
        %v762 = vunpack.c.l.b16 %v667
        %v763 = vunpack.c.h.b16 %v667
        %v764 = vunpack.c.l.b16 %v668
        %v765 = vunpack.c.h.b16 %v668
        %v766 = vunpack.c.l.b16 %v669
        %v767 = vunpack.c.h.b16 %v669
        %v768 = vunpack.c.l.b16 %v670
        %v769 = vunpack.c.h.b16 %v670
        %v770 = vunpack.c.l.b16 %v671
        %v771 = vunpack.c.h.b16 %v671
        %v772 = vunpack.c.l.b16 %v672
        %v773 = vunpack.c.h.b16 %v672
        %v774 = vunpack.c.l.b16 %v673
        %v775 = vunpack.c.h.b16 %v673
        %v776 = vunpack.c.l.b16 %v674
        %v777 = vunpack.c.h.b16 %v674
        %v778 = vunpack.c.l.b16 %v675
        %v779 = vunpack.c.h.b16 %v675
        %v780 = vunpack.c.l.b16 %v676
        %v781 = vunpack.c.h.b16 %v676
        %v782 = vunpack.c.l.b16 %v677
        %v783 = vunpack.c.h.b16 %v677
        %v784 = vunpack.c.l.b16 %v678
        %v785 = vunpack.c.h.b16 %v678
        %v786 = vpack.c.b16 %v756, %v754
        %v787 = vpack.c.b16 %v757, %v755
        %v788 = vpack.c.b16 %v760, %v758
        %v789 = vpack.c.b16 %v761, %v759
        %v790 = vpack.c.b16 %v764, %v762
        %v791 = vpack.c.b16 %v765, %v763
        %v792 = vpack.c.b16 %v768, %v766
        %v793 = vpack.c.b16 %v769, %v767
        %v794 = vpack.c.b16 %v772, %v770
        %v795 = vpack.c.b16 %v773, %v771
        %v796 = vpack.c.b16 %v776, %v774
        %v797 = vpack.c.b16 %v777, %v775
        %v798 = vpack.c.b16 %v780, %v778
        %v799 = vpack.c.b16 %v781, %v779
        %v800 = vpack.c.b16 %v784, %v782
        %v801 = vpack.c.b16 %v785, %v783
        %818 = vmatpush.bf16.msra.mxu0 %v800
        %819 = vmatpush.bf16.msra.mxu0 %v798
        %820 = vmatpush.bf16.msra.mxu0 %v796
        %821 = vmatpush.bf16.msra.mxu0 %v794
        %822 = vmatpush.bf16.msra.mxu0 %v792
        %823 = vmatpush.bf16.msra.mxu0 %v790
        %824 = vmatpush.bf16.msra.mxu0 %v788
        %825 = vmatpush.bf16.msra.mxu0 %v786
        %826 = vmatmul.bf16.gmra.mxu0 %v718
        %v827 = vpop.f32.mrf.mxu0
        %v828 = vadd.f32 0.0, %v827
        %v829 = vpop.f32.mrf.mxu0
        %v830 = vadd.f32 0.0, %v829
        %831 = vmatmul.bf16.gmra.mxu0 %v719
        %v832 = vpop.f32.mrf.mxu0
        %v833 = vadd.f32 0.0, %v832
        %v834 = vpop.f32.mrf.mxu0
        %v835 = vadd.f32 0.0, %v834
        %836 = vmatmul.bf16.gmra.mxu0 %v720
        %v837 = vpop.f32.mrf.mxu0
        %v838 = vadd.f32 0.0, %v837
        %v839 = vpop.f32.mrf.mxu0
        %v840 = vadd.f32 0.0, %v839
        %841 = vmatmul.bf16.gmra.mxu0 %v721
        %v842 = vpop.f32.mrf.mxu0
        %v843 = vadd.f32 0.0, %v842
        %v844 = vpop.f32.mrf.mxu0
        %v845 = vadd.f32 0.0, %v844
        %846 = vmatmul.bf16.gmra.mxu0 %v722
        %v847 = vpop.f32.mrf.mxu0
        %v848 = vadd.f32 0.0, %v847
        %v849 = vpop.f32.mrf.mxu0
        %v850 = vadd.f32 0.0, %v849
        %851 = vmatmul.bf16.gmra.mxu0 %v723
        %v852 = vpop.f32.mrf.mxu0
        %v853 = vadd.f32 0.0, %v852
        %v854 = vpop.f32.mrf.mxu0
        %v855 = vadd.f32 0.0, %v854
        %856 = vmatmul.bf16.gmra.mxu0 %v724
        %v857 = vpop.f32.mrf.mxu0
        %v858 = vadd.f32 0.0, %v857
        %v859 = vpop.f32.mrf.mxu0
        %v860 = vadd.f32 0.0, %v859
        %861 = vmatmul.bf16.gmra.mxu0 %v725
        %v862 = vpop.f32.mrf.mxu0
        %v863 = vadd.f32 0.0, %v862
        %v864 = vpop.f32.mrf.mxu0
        %v865 = vadd.f32 0.0, %v864
        %866 = vmatmul.bf16.gmra.mxu0 %v726
        %v867 = vpop.f32.mrf.mxu0
        %v868 = vadd.f32 0.0, %v867
        %v869 = vpop.f32.mrf.mxu0
        %v870 = vadd.f32 0.0, %v869
        %871 = vmatmul.bf16.gmra.mxu0 %v727
        %v872 = vpop.f32.mrf.mxu0
        %v873 = vadd.f32 0.0, %v872
        %v874 = vpop.f32.mrf.mxu0
        %875 = vdwg.mxu0
        %876 = vmatpush.bf16.msra.mxu0 %v801
        %877 = vmatpush.bf16.msra.mxu0 %v799
        %878 = vmatpush.bf16.msra.mxu0 %v797
        %879 = vmatpush.bf16.msra.mxu0 %v795
        %880 = vmatpush.bf16.msra.mxu0 %v793
        %881 = vmatpush.bf16.msra.mxu0 %v791
        %882 = vmatpush.bf16.msra.mxu0 %v789
        %883 = vmatpush.bf16.msra.mxu0 %v787
        %884 = vmatmul.bf16.gmra.mxu0 %v718
        %v885 = vpop.f32.mrf.mxu0
        %v886 = vadd.f32 0.0, %v885
        %v887 = vpop.f32.mrf.mxu0
        %v888 = vadd.f32 0.0, %v887
        %889 = vmatmul.bf16.gmra.mxu0 %v719
        %v890 = vpop.f32.mrf.mxu0
        %v891 = vadd.f32 0.0, %v890
        %v892 = vpop.f32.mrf.mxu0
        %v893 = vadd.f32 0.0, %v892
        %894 = vmatmul.bf16.gmra.mxu0 %v720
        %v895 = vpop.f32.mrf.mxu0
        %v896 = vadd.f32 0.0, %v895
        %v897 = vpop.f32.mrf.mxu0
        %v898 = vadd.f32 0.0, %v897
        %899 = vmatmul.bf16.gmra.mxu0 %v721
        %v900 = vpop.f32.mrf.mxu0
        %v901 = vadd.f32 0.0, %v900
        %v902 = vpop.f32.mrf.mxu0
        %v903 = vadd.f32 0.0, %v902
        %904 = vmatmul.bf16.gmra.mxu0 %v722
        %v905 = vpop.f32.mrf.mxu0
        %v906 = vadd.f32 0.0, %v905
        %v907 = vpop.f32.mrf.mxu0
        %v908 = vadd.f32 0.0, %v907
        %909 = vmatmul.bf16.gmra.mxu0 %v723
        %v910 = vpop.f32.mrf.mxu0
        %v911 = vadd.f32 0.0, %v910
        %v912 = vpop.f32.mrf.mxu0
        %v913 = vadd.f32 0.0, %v912
        %914 = vmatmul.bf16.gmra.mxu0 %v724
        %v915 = vpop.f32.mrf.mxu0
        %v916 = vadd.f32 0.0, %v915
        %v917 = vpop.f32.mrf.mxu0
        %v918 = vadd.f32 0.0, %v917
        %919 = vmatmul.bf16.gmra.mxu0 %v725
        %v920 = vpop.f32.mrf.mxu0
        %v921 = vadd.f32 0.0, %v920
        %v922 = vpop.f32.mrf.mxu0
        %v923 = vadd.f32 0.0, %v922
        %924 = vmatmul.bf16.gmra.mxu0 %v726
        %v925 = vpop.f32.mrf.mxu0
        %v926 = vadd.f32 0.0, %v925
        %v927 = vpop.f32.mrf.mxu0
        %v928 = vadd.f32 0.0, %v927
        %929 = vmatmul.bf16.gmra.mxu0 %v727
        %v930 = vpop.f32.mrf.mxu0
        %v931 = vadd.f32 0.0, %v930
        %v932 = vpop.f32.mrf.mxu0
        %933 = vdwg.mxu0
        %v953 = vunpack.c.l.b16 %v624
        %v954 = vunpack.c.l.b16 %v625
        %v955 = vunpack.c.l.b16 %v626
        %v956 = vunpack.c.l.b16 %v627
        %v957 = vunpack.c.l.b16 %v628
        %v958 = vunpack.c.l.b16 %v629
        %v959 = vunpack.c.l.b16 %v630
        %v960 = vunpack.c.l.b16 %v631
        %v961 = vunpack.c.l.b16 %v632
        %v962 = vunpack.c.l.b16 %v633
        %v963 = vunpack.c.l.b16 %v634
        %v964 = vunpack.c.l.b16 %v635
        %v965 = vunpack.c.l.b16 %v636
        %v966 = vunpack.c.l.b16 %v637
        %v967 = vunpack.c.l.b16 %v638
        %v968 = vunpack.c.l.b16 %v639
        %v969 = vunpack.c.l.b16 %v640
        %v970 = vunpack.c.l.b16 %v641
        %v971 = vunpack.c.l.b16 %v642
        %v972 = vpack.c.b16 %v954, %v953
        %v973 = vpack.c.b16 %v956, %v955
        %v974 = vpack.c.b16 %v958, %v957
        %v975 = vpack.c.b16 %v960, %v959
        %v976 = vpack.c.b16 %v962, %v961
        %v977 = vpack.c.b16 %v964, %v963
        %v978 = vpack.c.b16 %v966, %v965
        %v979 = vpack.c.b16 %v968, %v967
        %v980 = vpack.c.b16 %v970, %v969
        %v981 = vpack.c.b16 %v971, %v971
        %v983 = vunpack.c.l.b16 %v662
        %v984 = vunpack.c.h.b16 %v662
        %v985 = vpack.c.b16 %v983, %v983
        %v986 = vpack.c.b16 %v984, %v984
        %vm987 = vcmask 64512
        %v989 = vsel %vm987, %v972, 0
        %v992 = vsel %vm987, %v973, 0
        %v995 = vsel %vm987, %v974, 0
        %v998 = vsel %vm987, %v975, 0
        %v1001 = vsel %vm987, %v976, 0
        %v1004 = vsel %vm987, %v977, 0
        %v1007 = vsel %vm987, %v978, 0
        %v1010 = vsel %vm987, %v979, 0
        %v1013 = vsel %vm987, %v980, 0
        %v1016 = vsel %vm987, %v981, 0
        %vm1018 = vcmask 1043456
        %v1020 = vsel %vm1018, %v985, 0
        %v1023 = vsel %vm1018, %v986, 0
        %1025 = vmatpush.bf16.msra.mxu0 0
        %1026 = vmatpush.bf16.msra.mxu0 0
        %1027 = vmatpush.bf16.msra.mxu0 0
        %1028 = vmatpush.bf16.msra.mxu0 0
        %1029 = vmatpush.bf16.msra.mxu0 0
        %1030 = vmatpush.bf16.msra.mxu0 0
        %1031 = vmatpush.bf16.msra.mxu0 0
        %1032 = vmatpush.bf16.msra.mxu0 %v1020
        %1033 = vmatmul.bf16.gmra.mxu0 %v989
        %v1034 = vpop.f32.mrf.mxu0
        %v1035 = vadd.f32 %v828, %v1034
        %v1036 = vpop.f32.mrf.mxu0
        %v1037 = vadd.f32 %v830, %v1036
        %1038 = vmatmul.bf16.gmra.mxu0 %v992
        %v1039 = vpop.f32.mrf.mxu0
        %v1040 = vadd.f32 %v833, %v1039
        %v1041 = vpop.f32.mrf.mxu0
        %v1042 = vadd.f32 %v835, %v1041
        %1043 = vmatmul.bf16.gmra.mxu0 %v995
        %v1044 = vpop.f32.mrf.mxu0
        %v1045 = vadd.f32 %v838, %v1044
        %v1046 = vpop.f32.mrf.mxu0
        %v1047 = vadd.f32 %v840, %v1046
        %1048 = vmatmul.bf16.gmra.mxu0 %v998
        %v1049 = vpop.f32.mrf.mxu0
        %v1050 = vadd.f32 %v843, %v1049
        %v1051 = vpop.f32.mrf.mxu0
        %v1052 = vadd.f32 %v845, %v1051
        %1053 = vmatmul.bf16.gmra.mxu0 %v1001
        %v1054 = vpop.f32.mrf.mxu0
        %v1055 = vadd.f32 %v848, %v1054
        %v1056 = vpop.f32.mrf.mxu0
        %v1057 = vadd.f32 %v850, %v1056
        %1058 = vmatmul.bf16.gmra.mxu0 %v1004
        %v1059 = vpop.f32.mrf.mxu0
        %v1060 = vadd.f32 %v853, %v1059
        %v1061 = vpop.f32.mrf.mxu0
        %v1062 = vadd.f32 %v855, %v1061
        %1063 = vmatmul.bf16.gmra.mxu0 %v1007
        %v1064 = vpop.f32.mrf.mxu0
        %v1065 = vadd.f32 %v858, %v1064
        %v1066 = vpop.f32.mrf.mxu0
        %v1067 = vadd.f32 %v860, %v1066
        %1068 = vmatmul.bf16.gmra.mxu0 %v1010
        %v1069 = vpop.f32.mrf.mxu0
        %v1070 = vadd.f32 %v863, %v1069
        %v1071 = vpop.f32.mrf.mxu0
        %v1072 = vadd.f32 %v865, %v1071
        %1073 = vmatmul.bf16.gmra.mxu0 %v1013
        %v1074 = vpop.f32.mrf.mxu0
        %v1075 = vadd.f32 %v868, %v1074
        %v1076 = vpop.f32.mrf.mxu0
        %v1077 = vadd.f32 %v870, %v1076
        %1078 = vmatmul.bf16.gmra.mxu0 %v1016
        %v1079 = vpop.f32.mrf.mxu0
        %v1080 = vadd.f32 %v873, %v1079
        %v1081 = vpop.f32.mrf.mxu0
        %1082 = vdwg.mxu0
        %1083 = vmatpush.bf16.msra.mxu0 0
        %1084 = vmatpush.bf16.msra.mxu0 0
        %1085 = vmatpush.bf16.msra.mxu0 0
        %1086 = vmatpush.bf16.msra.mxu0 0
        %1087 = vmatpush.bf16.msra.mxu0 0
        %1088 = vmatpush.bf16.msra.mxu0 0
        %1089 = vmatpush.bf16.msra.mxu0 0
        %1090 = vmatpush.bf16.msra.mxu0 %v1023
        %1091 = vmatmul.bf16.gmra.mxu0 %v989
        %v1092 = vpop.f32.mrf.mxu0
        %v1093 = vadd.f32 %v886, %v1092
        %v1094 = vpop.f32.mrf.mxu0
        %v1095 = vadd.f32 %v888, %v1094
        %1096 = vmatmul.bf16.gmra.mxu0 %v992
        %v1097 = vpop.f32.mrf.mxu0
        %v1098 = vadd.f32 %v891, %v1097
        %v1099 = vpop.f32.mrf.mxu0
        %v1100 = vadd.f32 %v893, %v1099
        %1101 = vmatmul.bf16.gmra.mxu0 %v995
        %v1102 = vpop.f32.mrf.mxu0
        %v1103 = vadd.f32 %v896, %v1102
        %v1104 = vpop.f32.mrf.mxu0
        %v1105 = vadd.f32 %v898, %v1104
        %1106 = vmatmul.bf16.gmra.mxu0 %v998
        %v1107 = vpop.f32.mrf.mxu0
        %v1108 = vadd.f32 %v901, %v1107
        %v1109 = vpop.f32.mrf.mxu0
        %v1110 = vadd.f32 %v903, %v1109
        %1111 = vmatmul.bf16.gmra.mxu0 %v1001
        %v1112 = vpop.f32.mrf.mxu0
        %v1113 = vadd.f32 %v906, %v1112
        %v1114 = vpop.f32.mrf.mxu0
        %v1115 = vadd.f32 %v908, %v1114
        %1116 = vmatmul.bf16.gmra.mxu0 %v1004
        %v1117 = vpop.f32.mrf.mxu0
        %v1118 = vadd.f32 %v911, %v1117
        %v1119 = vpop.f32.mrf.mxu0
        %v1120 = vadd.f32 %v913, %v1119
        %1121 = vmatmul.bf16.gmra.mxu0 %v1007
        %v1122 = vpop.f32.mrf.mxu0
        %v1123 = vadd.f32 %v916, %v1122
        %v1124 = vpop.f32.mrf.mxu0
        %v1125 = vadd.f32 %v918, %v1124
        %1126 = vmatmul.bf16.gmra.mxu0 %v1010
        %v1127 = vpop.f32.mrf.mxu0
        %v1128 = vadd.f32 %v921, %v1127
        %v1129 = vpop.f32.mrf.mxu0
        %v1130 = vadd.f32 %v923, %v1129
        %1131 = vmatmul.bf16.gmra.mxu0 %v1013
        %v1132 = vpop.f32.mrf.mxu0
        %v1133 = vadd.f32 %v926, %v1132
        %v1134 = vpop.f32.mrf.mxu0
        %v1135 = vadd.f32 %v928, %v1134
        %1136 = vmatmul.bf16.gmra.mxu0 %v1016
        %v1137 = vpop.f32.mrf.mxu0
        %v1138 = vadd.f32 %v931, %v1137
        %v1139 = vpop.f32.mrf.mxu0
        %1140 = vdwg.mxu0
        %v1142 = vperm.slane %v679, 0
        %v1143 = vperm.slane %v679, 1
        %v1146 = vadd.f32 %v1035, %v1142
        %v1147 = vadd.f32 %v1093, %v1143
        %v1148 = vadd.f32 %v1037, %v1142
        %v1149 = vadd.f32 %v1095, %v1143
        %v1150 = vadd.f32 %v1040, %v1142
        %v1151 = vadd.f32 %v1098, %v1143
        %v1152 = vadd.f32 %v1042, %v1142
        %v1153 = vadd.f32 %v1100, %v1143
        %v1154 = vadd.f32 %v1045, %v1142
        %v1155 = vadd.f32 %v1103, %v1143
        %v1156 = vadd.f32 %v1047, %v1142
        %v1157 = vadd.f32 %v1105, %v1143
        %v1158 = vadd.f32 %v1050, %v1142
        %v1159 = vadd.f32 %v1108, %v1143
        %v1160 = vadd.f32 %v1052, %v1142
        %v1161 = vadd.f32 %v1110, %v1143
        %v1162 = vadd.f32 %v1055, %v1142
        %v1163 = vadd.f32 %v1113, %v1143
        %v1164 = vadd.f32 %v1057, %v1142
        %v1165 = vadd.f32 %v1115, %v1143
        %v1166 = vadd.f32 %v1060, %v1142
        %v1167 = vadd.f32 %v1118, %v1143
        %v1168 = vadd.f32 %v1062, %v1142
        %v1169 = vadd.f32 %v1120, %v1143
        %v1170 = vadd.f32 %v1065, %v1142
        %v1171 = vadd.f32 %v1123, %v1143
        %v1172 = vadd.f32 %v1067, %v1142
        %v1173 = vadd.f32 %v1125, %v1143
        %v1174 = vadd.f32 %v1070, %v1142
        %v1175 = vadd.f32 %v1128, %v1143
        %v1176 = vadd.f32 %v1072, %v1142
        %v1177 = vadd.f32 %v1130, %v1143
        %v1178 = vadd.f32 %v1075, %v1142
        %v1179 = vadd.f32 %v1133, %v1143
        %v1180 = vadd.f32 %v1077, %v1142
        %v1181 = vadd.f32 %v1135, %v1143
        %v1182 = vadd.f32 %v1080, %v1142
        %v1183 = vadd.f32 %v1138, %v1143
        %v1184 = vmax.f32 %v1146, 0.0
        %v1185 = vmax.f32 %v1147, 0.0
        %v1186 = vmax.f32 %v1148, 0.0
        %v1187 = vmax.f32 %v1149, 0.0
        %v1188 = vmax.f32 %v1150, 0.0
        %v1189 = vmax.f32 %v1151, 0.0
        %v1190 = vmax.f32 %v1152, 0.0
        %v1191 = vmax.f32 %v1153, 0.0
        %v1192 = vmax.f32 %v1154, 0.0
        %v1193 = vmax.f32 %v1155, 0.0
        %v1194 = vmax.f32 %v1156, 0.0
        %v1195 = vmax.f32 %v1157, 0.0
        %v1196 = vmax.f32 %v1158, 0.0
        %v1197 = vmax.f32 %v1159, 0.0
        %v1198 = vmax.f32 %v1160, 0.0
        %v1199 = vmax.f32 %v1161, 0.0
        %v1200 = vmax.f32 %v1162, 0.0
        %v1201 = vmax.f32 %v1163, 0.0
        %v1202 = vmax.f32 %v1164, 0.0
        %v1203 = vmax.f32 %v1165, 0.0
        %v1204 = vmax.f32 %v1166, 0.0
        %v1205 = vmax.f32 %v1167, 0.0
        %v1206 = vmax.f32 %v1168, 0.0
        %v1207 = vmax.f32 %v1169, 0.0
        %v1208 = vmax.f32 %v1170, 0.0
        %v1209 = vmax.f32 %v1171, 0.0
        %v1210 = vmax.f32 %v1172, 0.0
        %v1211 = vmax.f32 %v1173, 0.0
        %v1212 = vmax.f32 %v1174, 0.0
        %v1213 = vmax.f32 %v1175, 0.0
        %v1214 = vmax.f32 %v1176, 0.0
        %v1215 = vmax.f32 %v1177, 0.0
        %v1216 = vmax.f32 %v1178, 0.0
        %v1217 = vmax.f32 %v1179, 0.0
        %v1218 = vmax.f32 %v1180, 0.0
        %v1219 = vmax.f32 %v1181, 0.0
        %v1220 = vmax.f32 %v1182, 0.0
        %v1221 = vmax.f32 %v1183, 0.0
        %v1222 = vpack.c.bf16 %v1186, %v1184
        %v1223 = vpack.c.bf16 %v1187, %v1185
        %v1224 = vpack.c.bf16 %v1190, %v1188
        %v1225 = vpack.c.bf16 %v1191, %v1189
        %v1226 = vpack.c.bf16 %v1194, %v1192
        %v1227 = vpack.c.bf16 %v1195, %v1193
        %v1228 = vpack.c.bf16 %v1198, %v1196
        %v1229 = vpack.c.bf16 %v1199, %v1197
        %v1230 = vpack.c.bf16 %v1202, %v1200
        %v1231 = vpack.c.bf16 %v1203, %v1201
        %v1232 = vpack.c.bf16 %v1206, %v1204
        %v1233 = vpack.c.bf16 %v1207, %v1205
        %v1234 = vpack.c.bf16 %v1210, %v1208
        %v1235 = vpack.c.bf16 %v1211, %v1209
        %v1236 = vpack.c.bf16 %v1214, %v1212
        %v1237 = vpack.c.bf16 %v1215, %v1213
        %v1238 = vpack.c.bf16 %v1218, %v1216
        %v1239 = vpack.c.bf16 %v1219, %v1217
        %v1240 = vpack.c.bf16 %v1220, %v1220
        %v1241 = vpack.c.bf16 %v1221, %v1221
        %v1242 = vld [vmem:[#allocation5] sm:$0xff]
        %v1243 = vld [vmem:[#allocation5 + $0x8] sm:$0xff]
        %v1244 = vld [vmem:[#allocation5 + $0x10] sm:$0xff]
        %v1245 = vld [vmem:[#allocation5 + $0x18] sm:$0xff]
        %v1246 = vld [vmem:[#allocation5 + $0x20] sm:$0xff]
        %v1247 = vld [vmem:[#allocation5 + $0x28] sm:$0xff]
        %v1248 = vld [vmem:[#allocation5 + $0x30] sm:$0xff]
        %v1249 = vld [vmem:[#allocation5 + $0x38] sm:$0xff]
        %v1250 = vld [vmem:[#allocation5 + $0x40] sm:$0xff]
        %v1251 = vld [vmem:[#allocation5 + $0x48] sm:$0xff]
        %v1252 = vld [vmem:[#allocation5 + $0x50] sm:$0xff]
        %v1253 = vld [vmem:[#allocation5 + $0x58] sm:$0xff]
        %v1254 = vld [vmem:[#allocation5 + $0x60] sm:$0xff]
        %v1255 = vld [vmem:[#allocation5 + $0x68] sm:$0xff]
        %v1256 = vld [vmem:[#allocation5 + $0x70] sm:$0xff]
        %v1257 = vld [vmem:[#allocation5 + $0x78] sm:$0xff]
        %v1258 = vld [vmem:[#allocation5 + $0x80] sm:$0xff]
        %v1259 = vld [vmem:[#allocation5 + $0x88] sm:$0xff]
        %v1260 = vld [vmem:[#allocation5 + $0x90] sm:$0xff]
        %v1261 = vld [vmem:[#allocation5 + $0x98] sm:$0xff]
        %v1262 = vld [vmem:[#allocation5 + $0xa0] sm:$0xff]
        %v1263 = vld [vmem:[#allocation5 + $0xa8] sm:$0xff]
        %v1264 = vld [vmem:[#allocation5 + $0xb0] sm:$0xff]
        %v1265 = vld [vmem:[#allocation5 + $0xb8] sm:$0xff]
        %v1266 = vld [vmem:[#allocation5 + $0xc0] sm:$0xff]
        %v1267 = vld [vmem:[#allocation5 + $0xc8] sm:$0xff]
        %v1268 = vld [vmem:[#allocation5 + $0xd0] sm:$0xff]
        %v1269 = vld [vmem:[#allocation5 + $0xd8] sm:$0xff]
        %v1270 = vld [vmem:[#allocation5 + $0xe0] sm:$0xff]
        %v1271 = vld [vmem:[#allocation5 + $0xe8] sm:$0xff]
        %v1272 = vld [vmem:[#allocation5 + $0xf0] sm:$0xff]
        %v1273 = vld [vmem:[#allocation5 + $0xf8] sm:$0xff]
        %v1274 = vld [vmem:[%s6] sm:$0x3]
        %v1276 = vperm.slane %v1274, 0
        %v1277 = vperm.slane %v1274, 1
        %v1312 = vunpack.c.l.b16 %v1242
        %v1313 = vunpack.c.h.b16 %v1242
        %v1314 = vunpack.c.l.b16 %v1243
        %v1315 = vunpack.c.h.b16 %v1243
        %v1316 = vunpack.c.l.b16 %v1244
        %v1317 = vunpack.c.h.b16 %v1244
        %v1318 = vunpack.c.l.b16 %v1245
        %v1319 = vunpack.c.h.b16 %v1245
        %v1320 = vunpack.c.l.b16 %v1246
        %v1321 = vunpack.c.h.b16 %v1246
        %v1322 = vunpack.c.l.b16 %v1247
        %v1323 = vunpack.c.h.b16 %v1247
        %v1324 = vunpack.c.l.b16 %v1248
        %v1325 = vunpack.c.h.b16 %v1248
        %v1326 = vunpack.c.l.b16 %v1249
        %v1327 = vunpack.c.h.b16 %v1249
        %v1328 = vunpack.c.l.b16 %v1250
        %v1329 = vunpack.c.h.b16 %v1250
        %v1330 = vunpack.c.l.b16 %v1251
        %v1331 = vunpack.c.h.b16 %v1251
        %v1332 = vunpack.c.l.b16 %v1252
        %v1333 = vunpack.c.h.b16 %v1252
        %v1334 = vunpack.c.l.b16 %v1253
        %v1335 = vunpack.c.h.b16 %v1253
        %v1336 = vunpack.c.l.b16 %v1254
        %v1337 = vunpack.c.h.b16 %v1254
        %v1338 = vunpack.c.l.b16 %v1255
        %v1339 = vunpack.c.h.b16 %v1255
        %v1340 = vunpack.c.l.b16 %v1256
        %v1341 = vunpack.c.h.b16 %v1256
        %v1342 = vunpack.c.l.b16 %v1257
        %v1343 = vunpack.c.h.b16 %v1257
        %v1344 = vunpack.c.l.b16 %v1258
        %v1345 = vunpack.c.h.b16 %v1258
        %v1346 = vunpack.c.l.b16 %v1259
        %v1347 = vunpack.c.h.b16 %v1259
        %v1348 = vunpack.c.l.b16 %v1260
        %v1349 = vunpack.c.h.b16 %v1260
        %v1350 = vunpack.c.l.b16 %v1261
        %v1351 = vunpack.c.h.b16 %v1261
        %v1352 = vunpack.c.l.b16 %v1262
        %v1353 = vunpack.c.h.b16 %v1262
        %v1354 = vunpack.c.l.b16 %v1263
        %v1355 = vunpack.c.h.b16 %v1263
        %v1356 = vunpack.c.l.b16 %v1264
        %v1357 = vunpack.c.h.b16 %v1264
        %v1358 = vunpack.c.l.b16 %v1265
        %v1359 = vunpack.c.h.b16 %v1265
        %v1360 = vunpack.c.l.b16 %v1266
        %v1361 = vunpack.c.h.b16 %v1266
        %v1362 = vunpack.c.l.b16 %v1267
        %v1363 = vunpack.c.h.b16 %v1267
        %v1364 = vunpack.c.l.b16 %v1268
        %v1365 = vunpack.c.h.b16 %v1268
        %v1366 = vunpack.c.l.b16 %v1269
        %v1367 = vunpack.c.h.b16 %v1269
        %v1368 = vunpack.c.l.b16 %v1270
        %v1369 = vunpack.c.h.b16 %v1270
        %v1370 = vunpack.c.l.b16 %v1271
        %v1371 = vunpack.c.h.b16 %v1271
        %v1372 = vunpack.c.l.b16 %v1272
        %v1373 = vunpack.c.h.b16 %v1272
        %v1374 = vunpack.c.l.b16 %v1273
        %v1375 = vunpack.c.h.b16 %v1273
        %v1376 = vpack.c.b16 %v1314, %v1312
        %v1377 = vpack.c.b16 %v1315, %v1313
        %v1378 = vpack.c.b16 %v1318, %v1316
        %v1379 = vpack.c.b16 %v1319, %v1317
        %v1380 = vpack.c.b16 %v1322, %v1320
        %v1381 = vpack.c.b16 %v1323, %v1321
        %v1382 = vpack.c.b16 %v1326, %v1324
        %v1383 = vpack.c.b16 %v1327, %v1325
        %v1384 = vpack.c.b16 %v1330, %v1328
        %v1385 = vpack.c.b16 %v1331, %v1329
        %v1386 = vpack.c.b16 %v1334, %v1332
        %v1387 = vpack.c.b16 %v1335, %v1333
        %v1388 = vpack.c.b16 %v1338, %v1336
        %v1389 = vpack.c.b16 %v1339, %v1337
        %v1390 = vpack.c.b16 %v1342, %v1340
        %v1391 = vpack.c.b16 %v1343, %v1341
        %v1392 = vpack.c.b16 %v1346, %v1344
        %v1393 = vpack.c.b16 %v1347, %v1345
        %v1394 = vpack.c.b16 %v1350, %v1348
        %v1395 = vpack.c.b16 %v1351, %v1349
        %v1396 = vpack.c.b16 %v1354, %v1352
        %v1397 = vpack.c.b16 %v1355, %v1353
        %v1398 = vpack.c.b16 %v1358, %v1356
        %v1399 = vpack.c.b16 %v1359, %v1357
        %v1400 = vpack.c.b16 %v1362, %v1360
        %v1401 = vpack.c.b16 %v1363, %v1361
        %v1402 = vpack.c.b16 %v1366, %v1364
        %v1403 = vpack.c.b16 %v1367, %v1365
        %v1404 = vpack.c.b16 %v1370, %v1368
        %v1405 = vpack.c.b16 %v1371, %v1369
        %v1406 = vpack.c.b16 %v1374, %v1372
        %v1407 = vpack.c.b16 %v1375, %v1373
        %1440 = vmatpush.bf16.msra.mxu0 %v1390
        %1441 = vmatpush.bf16.msra.mxu0 %v1388
        %1442 = vmatpush.bf16.msra.mxu0 %v1386
        %1443 = vmatpush.bf16.msra.mxu0 %v1384
        %1444 = vmatpush.bf16.msra.mxu0 %v1382
        %1445 = vmatpush.bf16.msra.mxu0 %v1380
        %1446 = vmatpush.bf16.msra.mxu0 %v1378
        %1447 = vmatpush.bf16.msra.mxu0 %v1376
        %1448 = vmatmul.bf16.gmra.mxu0 %v1222
        %v1449 = vpop.f32.mrf.mxu0
        %v1450 = vadd.f32 %v1276, %v1449
        %v1451 = vpop.f32.mrf.mxu0
        %v1452 = vadd.f32 %v1276, %v1451
        %1453 = vmatmul.bf16.gmra.mxu0 %v1224
        %v1454 = vpop.f32.mrf.mxu0
        %v1455 = vadd.f32 %v1276, %v1454
        %v1456 = vpop.f32.mrf.mxu0
        %v1457 = vadd.f32 %v1276, %v1456
        %1458 = vmatmul.bf16.gmra.mxu0 %v1226
        %v1459 = vpop.f32.mrf.mxu0
        %v1460 = vadd.f32 %v1276, %v1459
        %v1461 = vpop.f32.mrf.mxu0
        %v1462 = vadd.f32 %v1276, %v1461
        %1463 = vmatmul.bf16.gmra.mxu0 %v1228
        %v1464 = vpop.f32.mrf.mxu0
        %v1465 = vadd.f32 %v1276, %v1464
        %v1466 = vpop.f32.mrf.mxu0
        %v1467 = vadd.f32 %v1276, %v1466
        %1468 = vmatmul.bf16.gmra.mxu0 %v1230
        %v1469 = vpop.f32.mrf.mxu0
        %v1470 = vadd.f32 %v1276, %v1469
        %v1471 = vpop.f32.mrf.mxu0
        %v1472 = vadd.f32 %v1276, %v1471
        %1473 = vmatmul.bf16.gmra.mxu0 %v1232
        %v1474 = vpop.f32.mrf.mxu0
        %v1475 = vadd.f32 %v1276, %v1474
        %v1476 = vpop.f32.mrf.mxu0
        %v1477 = vadd.f32 %v1276, %v1476
        %1478 = vmatmul.bf16.gmra.mxu0 %v1234
        %v1479 = vpop.f32.mrf.mxu0
        %v1480 = vadd.f32 %v1276, %v1479
        %v1481 = vpop.f32.mrf.mxu0
        %v1482 = vadd.f32 %v1276, %v1481
        %1483 = vmatmul.bf16.gmra.mxu0 %v1236
        %v1484 = vpop.f32.mrf.mxu0
        %v1485 = vadd.f32 %v1276, %v1484
        %v1486 = vpop.f32.mrf.mxu0
        %v1487 = vadd.f32 %v1276, %v1486
        %1488 = vmatmul.bf16.gmra.mxu0 %v1238
        %v1489 = vpop.f32.mrf.mxu0
        %v1490 = vadd.f32 %v1276, %v1489
        %v1491 = vpop.f32.mrf.mxu0
        %v1492 = vadd.f32 %v1276, %v1491
        %1493 = vmatmul.bf16.gmra.mxu0 %v1240
        %v1494 = vpop.f32.mrf.mxu0
        %v1495 = vadd.f32 %v1276, %v1494
        %v1496 = vpop.f32.mrf.mxu0
        %1497 = vdwg.mxu0
        %1498 = vmatpush.bf16.msra.mxu0 %v1406
        %1499 = vmatpush.bf16.msra.mxu0 %v1404
        %1500 = vmatpush.bf16.msra.mxu0 %v1402
        %1501 = vmatpush.bf16.msra.mxu0 %v1400
        %1502 = vmatpush.bf16.msra.mxu0 %v1398
        %1503 = vmatpush.bf16.msra.mxu0 %v1396
        %1504 = vmatpush.bf16.msra.mxu0 %v1394
        %1505 = vmatpush.bf16.msra.mxu0 %v1392
        %1506 = vmatmul.bf16.gmra.mxu0 %v1223
        %v1507 = vpop.f32.mrf.mxu0
        %v1508 = vadd.f32 %v1450, %v1507
        %v1509 = vpop.f32.mrf.mxu0
        %v1510 = vadd.f32 %v1452, %v1509
        %1511 = vmatmul.bf16.gmra.mxu0 %v1225
        %v1512 = vpop.f32.mrf.mxu0
        %v1513 = vadd.f32 %v1455, %v1512
        %v1514 = vpop.f32.mrf.mxu0
        %v1515 = vadd.f32 %v1457, %v1514
        %1516 = vmatmul.bf16.gmra.mxu0 %v1227
        %v1517 = vpop.f32.mrf.mxu0
        %v1518 = vadd.f32 %v1460, %v1517
        %v1519 = vpop.f32.mrf.mxu0
        %v1520 = vadd.f32 %v1462, %v1519
        %1521 = vmatmul.bf16.gmra.mxu0 %v1229
        %v1522 = vpop.f32.mrf.mxu0
        %v1523 = vadd.f32 %v1465, %v1522
        %v1524 = vpop.f32.mrf.mxu0
        %v1525 = vadd.f32 %v1467, %v1524
        %1526 = vmatmul.bf16.gmra.mxu0 %v1231
        %v1527 = vpop.f32.mrf.mxu0
        %v1528 = vadd.f32 %v1470, %v1527
        %v1529 = vpop.f32.mrf.mxu0
        %v1530 = vadd.f32 %v1472, %v1529
        %1531 = vmatmul.bf16.gmra.mxu0 %v1233
        %v1532 = vpop.f32.mrf.mxu0
        %v1533 = vadd.f32 %v1475, %v1532
        %v1534 = vpop.f32.mrf.mxu0
        %v1535 = vadd.f32 %v1477, %v1534
        %1536 = vmatmul.bf16.gmra.mxu0 %v1235
        %v1537 = vpop.f32.mrf.mxu0
        %v1538 = vadd.f32 %v1480, %v1537
        %v1539 = vpop.f32.mrf.mxu0
        %v1540 = vadd.f32 %v1482, %v1539
        %1541 = vmatmul.bf16.gmra.mxu0 %v1237
        %v1542 = vpop.f32.mrf.mxu0
        %v1543 = vadd.f32 %v1485, %v1542
        %v1544 = vpop.f32.mrf.mxu0
        %v1545 = vadd.f32 %v1487, %v1544
        %1546 = vmatmul.bf16.gmra.mxu0 %v1239
        %v1547 = vpop.f32.mrf.mxu0
        %v1548 = vadd.f32 %v1490, %v1547
        %v1549 = vpop.f32.mrf.mxu0
        %v1550 = vadd.f32 %v1492, %v1549
        %1551 = vmatmul.bf16.gmra.mxu0 %v1241
        %v1552 = vpop.f32.mrf.mxu0
        %v1553 = vadd.f32 %v1495, %v1552
        %v1554 = vpop.f32.mrf.mxu0
        %1555 = vdwg.mxu0
        %1556 = vmatpush.bf16.msra.mxu0 %v1391
        %1557 = vmatpush.bf16.msra.mxu0 %v1389
        %1558 = vmatpush.bf16.msra.mxu0 %v1387
        %1559 = vmatpush.bf16.msra.mxu0 %v1385
        %1560 = vmatpush.bf16.msra.mxu0 %v1383
        %1561 = vmatpush.bf16.msra.mxu0 %v1381
        %1562 = vmatpush.bf16.msra.mxu0 %v1379
        %1563 = vmatpush.bf16.msra.mxu0 %v1377
        %1564 = vmatmul.bf16.gmra.mxu0 %v1222
        %v1565 = vpop.f32.mrf.mxu0
        %v1566 = vadd.f32 %v1277, %v1565
        %v1567 = vpop.f32.mrf.mxu0
        %v1568 = vadd.f32 %v1277, %v1567
        %1569 = vmatmul.bf16.gmra.mxu0 %v1224
        %v1570 = vpop.f32.mrf.mxu0
        %v1571 = vadd.f32 %v1277, %v1570
        %v1572 = vpop.f32.mrf.mxu0
        %v1573 = vadd.f32 %v1277, %v1572
        %1574 = vmatmul.bf16.gmra.mxu0 %v1226
        %v1575 = vpop.f32.mrf.mxu0
        %v1576 = vadd.f32 %v1277, %v1575
        %v1577 = vpop.f32.mrf.mxu0
        %v1578 = vadd.f32 %v1277, %v1577
        %1579 = vmatmul.bf16.gmra.mxu0 %v1228
        %v1580 = vpop.f32.mrf.mxu0
        %v1581 = vadd.f32 %v1277, %v1580
        %v1582 = vpop.f32.mrf.mxu0
        %v1583 = vadd.f32 %v1277, %v1582
        %1584 = vmatmul.bf16.gmra.mxu0 %v1230
        %v1585 = vpop.f32.mrf.mxu0
        %v1586 = vadd.f32 %v1277, %v1585
        %v1587 = vpop.f32.mrf.mxu0
        %v1588 = vadd.f32 %v1277, %v1587
        %1589 = vmatmul.bf16.gmra.mxu0 %v1232
        %v1590 = vpop.f32.mrf.mxu0
        %v1591 = vadd.f32 %v1277, %v1590
        %v1592 = vpop.f32.mrf.mxu0
        %v1593 = vadd.f32 %v1277, %v1592
        %1594 = vmatmul.bf16.gmra.mxu0 %v1234
        %v1595 = vpop.f32.mrf.mxu0
        %v1596 = vadd.f32 %v1277, %v1595
        %v1597 = vpop.f32.mrf.mxu0
        %v1598 = vadd.f32 %v1277, %v1597
        %1599 = vmatmul.bf16.gmra.mxu0 %v1236
        %v1600 = vpop.f32.mrf.mxu0
        %v1601 = vadd.f32 %v1277, %v1600
        %v1602 = vpop.f32.mrf.mxu0
        %v1603 = vadd.f32 %v1277, %v1602
        %1604 = vmatmul.bf16.gmra.mxu0 %v1238
        %v1605 = vpop.f32.mrf.mxu0
        %v1606 = vadd.f32 %v1277, %v1605
        %v1607 = vpop.f32.mrf.mxu0
        %v1608 = vadd.f32 %v1277, %v1607
        %1609 = vmatmul.bf16.gmra.mxu0 %v1240
        %v1610 = vpop.f32.mrf.mxu0
        %v1611 = vadd.f32 %v1277, %v1610
        %v1612 = vpop.f32.mrf.mxu0
        %1613 = vdwg.mxu0
        %1614 = vmatpush.bf16.msra.mxu0 %v1407
        %1615 = vmatpush.bf16.msra.mxu0 %v1405
        %1616 = vmatpush.bf16.msra.mxu0 %v1403
        %1617 = vmatpush.bf16.msra.mxu0 %v1401
        %1618 = vmatpush.bf16.msra.mxu0 %v1399
        %1619 = vmatpush.bf16.msra.mxu0 %v1397
        %1620 = vmatpush.bf16.msra.mxu0 %v1395
        %1621 = vmatpush.bf16.msra.mxu0 %v1393
        %1622 = vmatmul.bf16.gmra.mxu0 %v1223
        %v1623 = vpop.f32.mrf.mxu0
        %v1624 = vadd.f32 %v1566, %v1623
        %v1625 = vpop.f32.mrf.mxu0
        %v1626 = vadd.f32 %v1568, %v1625
        %1627 = vmatmul.bf16.gmra.mxu0 %v1225
        %v1628 = vpop.f32.mrf.mxu0
        %v1629 = vadd.f32 %v1571, %v1628
        %v1630 = vpop.f32.mrf.mxu0
        %v1631 = vadd.f32 %v1573, %v1630
        %1632 = vmatmul.bf16.gmra.mxu0 %v1227
        %v1633 = vpop.f32.mrf.mxu0
        %v1634 = vadd.f32 %v1576, %v1633
        %v1635 = vpop.f32.mrf.mxu0
        %v1636 = vadd.f32 %v1578, %v1635
        %1637 = vmatmul.bf16.gmra.mxu0 %v1229
        %v1638 = vpop.f32.mrf.mxu0
        %v1639 = vadd.f32 %v1581, %v1638
        %v1640 = vpop.f32.mrf.mxu0
        %v1641 = vadd.f32 %v1583, %v1640
        %1642 = vmatmul.bf16.gmra.mxu0 %v1231
        %v1643 = vpop.f32.mrf.mxu0
        %v1644 = vadd.f32 %v1586, %v1643
        %v1645 = vpop.f32.mrf.mxu0
        %v1646 = vadd.f32 %v1588, %v1645
        %1647 = vmatmul.bf16.gmra.mxu0 %v1233
        %v1648 = vpop.f32.mrf.mxu0
        %v1649 = vadd.f32 %v1591, %v1648
        %v1650 = vpop.f32.mrf.mxu0
        %v1651 = vadd.f32 %v1593, %v1650
        %1652 = vmatmul.bf16.gmra.mxu0 %v1235
        %v1653 = vpop.f32.mrf.mxu0
        %v1654 = vadd.f32 %v1596, %v1653
        %v1655 = vpop.f32.mrf.mxu0
        %v1656 = vadd.f32 %v1598, %v1655
        %1657 = vmatmul.bf16.gmra.mxu0 %v1237
        %v1658 = vpop.f32.mrf.mxu0
        %v1659 = vadd.f32 %v1601, %v1658
        %v1660 = vpop.f32.mrf.mxu0
        %v1661 = vadd.f32 %v1603, %v1660
        %1662 = vmatmul.bf16.gmra.mxu0 %v1239
        %v1663 = vpop.f32.mrf.mxu0
        %v1664 = vadd.f32 %v1606, %v1663
        %v1665 = vpop.f32.mrf.mxu0
        %v1666 = vadd.f32 %v1608, %v1665
        %1667 = vmatmul.bf16.gmra.mxu0 %v1241
        %v1668 = vpop.f32.mrf.mxu0
        %v1669 = vadd.f32 %v1611, %v1668
        %v1670 = vpop.f32.mrf.mxu0
        %1671 = vdwg.mxu0
        %v1672 = vmax.f32 %v1508, 0.0
        %v1673 = vmax.f32 %v1624, 0.0
        %v1674 = vmax.f32 %v1510, 0.0
        %v1675 = vmax.f32 %v1626, 0.0
        %v1676 = vmax.f32 %v1513, 0.0
        %v1677 = vmax.f32 %v1629, 0.0
        %v1678 = vmax.f32 %v1515, 0.0
        %v1679 = vmax.f32 %v1631, 0.0
        %v1680 = vmax.f32 %v1518, 0.0
        %v1681 = vmax.f32 %v1634, 0.0
        %v1682 = vmax.f32 %v1520, 0.0
        %v1683 = vmax.f32 %v1636, 0.0
        %v1684 = vmax.f32 %v1523, 0.0
        %v1685 = vmax.f32 %v1639, 0.0
        %v1686 = vmax.f32 %v1525, 0.0
        %v1687 = vmax.f32 %v1641, 0.0
        %v1688 = vmax.f32 %v1528, 0.0
        %v1689 = vmax.f32 %v1644, 0.0
        %v1690 = vmax.f32 %v1530, 0.0
        %v1691 = vmax.f32 %v1646, 0.0
        %v1692 = vmax.f32 %v1533, 0.0
        %v1693 = vmax.f32 %v1649, 0.0
        %v1694 = vmax.f32 %v1535, 0.0
        %v1695 = vmax.f32 %v1651, 0.0
        %v1696 = vmax.f32 %v1538, 0.0
        %v1697 = vmax.f32 %v1654, 0.0
        %v1698 = vmax.f32 %v1540, 0.0
        %v1699 = vmax.f32 %v1656, 0.0
        %v1700 = vmax.f32 %v1543, 0.0
        %v1701 = vmax.f32 %v1659, 0.0
        %v1702 = vmax.f32 %v1545, 0.0
        %v1703 = vmax.f32 %v1661, 0.0
        %v1704 = vmax.f32 %v1548, 0.0
        %v1705 = vmax.f32 %v1664, 0.0
        %v1706 = vmax.f32 %v1550, 0.0
        %v1707 = vmax.f32 %v1666, 0.0
        %v1708 = vmax.f32 %v1553, 0.0
        %v1709 = vmax.f32 %v1669, 0.0
        %v1710 = vpack.c.bf16 %v1674, %v1672
        %v1711 = vpack.c.bf16 %v1675, %v1673
        %v1712 = vpack.c.bf16 %v1678, %v1676
        %v1713 = vpack.c.bf16 %v1679, %v1677
        %v1714 = vpack.c.bf16 %v1682, %v1680
        %v1715 = vpack.c.bf16 %v1683, %v1681
        %v1716 = vpack.c.bf16 %v1686, %v1684
        %v1717 = vpack.c.bf16 %v1687, %v1685
        %v1718 = vpack.c.bf16 %v1690, %v1688
        %v1719 = vpack.c.bf16 %v1691, %v1689
        %v1720 = vpack.c.bf16 %v1694, %v1692
        %v1721 = vpack.c.bf16 %v1695, %v1693
        %v1722 = vpack.c.bf16 %v1698, %v1696
        %v1723 = vpack.c.bf16 %v1699, %v1697
        %v1724 = vpack.c.bf16 %v1702, %v1700
        %v1725 = vpack.c.bf16 %v1703, %v1701
        %v1726 = vpack.c.bf16 %v1706, %v1704
        %v1727 = vpack.c.bf16 %v1707, %v1705
        %v1728 = vpack.c.bf16 %v1708, %v1708
        %v1729 = vpack.c.bf16 %v1709, %v1709
        %v1730 = vld [vmem:[#allocation7] sm:$0xff]
        %v1731 = vld [vmem:[#allocation7 + $0x8] sm:$0xff]
        %v1732 = vld [vmem:[#allocation7 + $0x10] sm:$0xff]
        %v1733 = vld [vmem:[#allocation7 + $0x18] sm:$0xff]
        %v1734 = vld [vmem:[#allocation7 + $0x20] sm:$0xff]
        %v1735 = vld [vmem:[#allocation7 + $0x28] sm:$0xff]
        %v1736 = vld [vmem:[#allocation7 + $0x30] sm:$0xff]
        %v1737 = vld [vmem:[#allocation7 + $0x38] sm:$0xff]
        %v1738 = vld [vmem:[#allocation7 + $0x40] sm:$0xff]
        %v1739 = vld [vmem:[#allocation7 + $0x48] sm:$0xff]
        %v1740 = vld [vmem:[#allocation7 + $0x50] sm:$0xff]
        %v1741 = vld [vmem:[#allocation7 + $0x58] sm:$0xff]
        %v1742 = vld [vmem:[#allocation7 + $0x60] sm:$0xff]
        %v1743 = vld [vmem:[#allocation7 + $0x68] sm:$0xff]
        %v1744 = vld [vmem:[#allocation7 + $0x70] sm:$0xff]
        %v1745 = vld [vmem:[#allocation7 + $0x78] sm:$0xff]
        %v1746 = vld [vmem:[#allocation7 + $0x80] sm:$0xff]
        %v1747 = vld [vmem:[#allocation7 + $0x88] sm:$0xff]
        %v1748 = vld [vmem:[#allocation7 + $0x90] sm:$0xff]
        %v1749 = vld [vmem:[#allocation7 + $0x98] sm:$0xff]
        %v1750 = vld [vmem:[#allocation7 + $0xa0] sm:$0xff]
        %v1751 = vld [vmem:[#allocation7 + $0xa8] sm:$0xff]
        %v1752 = vld [vmem:[#allocation7 + $0xb0] sm:$0xff]
        %v1753 = vld [vmem:[#allocation7 + $0xb8] sm:$0xff]
        %v1754 = vld [vmem:[#allocation7 + $0xc0] sm:$0xff]
        %v1755 = vld [vmem:[#allocation7 + $0xc8] sm:$0xff]
        %v1756 = vld [vmem:[#allocation7 + $0xd0] sm:$0xff]
        %v1757 = vld [vmem:[#allocation7 + $0xd8] sm:$0xff]
        %v1758 = vld [vmem:[#allocation7 + $0xe0] sm:$0xff]
        %v1759 = vld [vmem:[#allocation7 + $0xe8] sm:$0xff]
        %v1760 = vld [vmem:[#allocation7 + $0xf0] sm:$0xff]
        %v1761 = vld [vmem:[#allocation7 + $0xf8] sm:$0xff]
        %v1762 = vld [vmem:[%s8] sm:$0x3]
        %v1764 = vperm.slane %v1762, 0
        %v1765 = vperm.slane %v1762, 1
        %v1800 = vunpack.c.l.b16 %v1730
        %v1801 = vunpack.c.h.b16 %v1730
        %v1802 = vunpack.c.l.b16 %v1731
        %v1803 = vunpack.c.h.b16 %v1731
        %v1804 = vunpack.c.l.b16 %v1732
        %v1805 = vunpack.c.h.b16 %v1732
        %v1806 = vunpack.c.l.b16 %v1733
        %v1807 = vunpack.c.h.b16 %v1733
        %v1808 = vunpack.c.l.b16 %v1734
        %v1809 = vunpack.c.h.b16 %v1734
        %v1810 = vunpack.c.l.b16 %v1735
        %v1811 = vunpack.c.h.b16 %v1735
        %v1812 = vunpack.c.l.b16 %v1736
        %v1813 = vunpack.c.h.b16 %v1736
        %v1814 = vunpack.c.l.b16 %v1737
        %v1815 = vunpack.c.h.b16 %v1737
        %v1816 = vunpack.c.l.b16 %v1738
        %v1817 = vunpack.c.h.b16 %v1738
        %v1818 = vunpack.c.l.b16 %v1739
        %v1819 = vunpack.c.h.b16 %v1739
        %v1820 = vunpack.c.l.b16 %v1740
        %v1821 = vunpack.c.h.b16 %v1740
        %v1822 = vunpack.c.l.b16 %v1741
        %v1823 = vunpack.c.h.b16 %v1741
        %v1824 = vunpack.c.l.b16 %v1742
        %v1825 = vunpack.c.h.b16 %v1742
        %v1826 = vunpack.c.l.b16 %v1743
        %v1827 = vunpack.c.h.b16 %v1743
        %v1828 = vunpack.c.l.b16 %v1744
        %v1829 = vunpack.c.h.b16 %v1744
        %v1830 = vunpack.c.l.b16 %v1745
        %v1831 = vunpack.c.h.b16 %v1745
        %v1832 = vunpack.c.l.b16 %v1746
        %v1833 = vunpack.c.h.b16 %v1746
        %v1834 = vunpack.c.l.b16 %v1747
        %v1835 = vunpack.c.h.b16 %v1747
        %v1836 = vunpack.c.l.b16 %v1748
        %v1837 = vunpack.c.h.b16 %v1748
        %v1838 = vunpack.c.l.b16 %v1749
        %v1839 = vunpack.c.h.b16 %v1749
        %v1840 = vunpack.c.l.b16 %v1750
        %v1841 = vunpack.c.h.b16 %v1750
        %v1842 = vunpack.c.l.b16 %v1751
        %v1843 = vunpack.c.h.b16 %v1751
        %v1844 = vunpack.c.l.b16 %v1752
        %v1845 = vunpack.c.h.b16 %v1752
        %v1846 = vunpack.c.l.b16 %v1753
        %v1847 = vunpack.c.h.b16 %v1753
        %v1848 = vunpack.c.l.b16 %v1754
        %v1849 = vunpack.c.h.b16 %v1754
        %v1850 = vunpack.c.l.b16 %v1755
        %v1851 = vunpack.c.h.b16 %v1755
        %v1852 = vunpack.c.l.b16 %v1756
        %v1853 = vunpack.c.h.b16 %v1756
        %v1854 = vunpack.c.l.b16 %v1757
        %v1855 = vunpack.c.h.b16 %v1757
        %v1856 = vunpack.c.l.b16 %v1758
        %v1857 = vunpack.c.h.b16 %v1758
        %v1858 = vunpack.c.l.b16 %v1759
        %v1859 = vunpack.c.h.b16 %v1759
        %v1860 = vunpack.c.l.b16 %v1760
        %v1861 = vunpack.c.h.b16 %v1760
        %v1862 = vunpack.c.l.b16 %v1761
        %v1863 = vunpack.c.h.b16 %v1761
        %v1864 = vpack.c.b16 %v1802, %v1800
        %v1865 = vpack.c.b16 %v1803, %v1801
        %v1866 = vpack.c.b16 %v1806, %v1804
        %v1867 = vpack.c.b16 %v1807, %v1805
        %v1868 = vpack.c.b16 %v1810, %v1808
        %v1869 = vpack.c.b16 %v1811, %v1809
        %v1870 = vpack.c.b16 %v1814, %v1812
        %v1871 = vpack.c.b16 %v1815, %v1813
        %v1872 = vpack.c.b16 %v1818, %v1816
        %v1873 = vpack.c.b16 %v1819, %v1817
        %v1874 = vpack.c.b16 %v1822, %v1820
        %v1875 = vpack.c.b16 %v1823, %v1821
        %v1876 = vpack.c.b16 %v1826, %v1824
        %v1877 = vpack.c.b16 %v1827, %v1825
        %v1878 = vpack.c.b16 %v1830, %v1828
        %v1879 = vpack.c.b16 %v1831, %v1829
        %v1880 = vpack.c.b16 %v1834, %v1832
        %v1881 = vpack.c.b16 %v1835, %v1833
        %v1882 = vpack.c.b16 %v1838, %v1836
        %v1883 = vpack.c.b16 %v1839, %v1837
        %v1884 = vpack.c.b16 %v1842, %v1840
        %v1885 = vpack.c.b16 %v1843, %v1841
        %v1886 = vpack.c.b16 %v1846, %v1844
        %v1887 = vpack.c.b16 %v1847, %v1845
        %v1888 = vpack.c.b16 %v1850, %v1848
        %v1889 = vpack.c.b16 %v1851, %v1849
        %v1890 = vpack.c.b16 %v1854, %v1852
        %v1891 = vpack.c.b16 %v1855, %v1853
        %v1892 = vpack.c.b16 %v1858, %v1856
        %v1893 = vpack.c.b16 %v1859, %v1857
        %v1894 = vpack.c.b16 %v1862, %v1860
        %v1895 = vpack.c.b16 %v1863, %v1861
        %1928 = vmatpush.bf16.msra.mxu0 %v1878
        %1929 = vmatpush.bf16.msra.mxu0 %v1876
        %1930 = vmatpush.bf16.msra.mxu0 %v1874
        %1931 = vmatpush.bf16.msra.mxu0 %v1872
        %1932 = vmatpush.bf16.msra.mxu0 %v1870
        %1933 = vmatpush.bf16.msra.mxu0 %v1868
        %1934 = vmatpush.bf16.msra.mxu0 %v1866
        %1935 = vmatpush.bf16.msra.mxu0 %v1864
        %1936 = vmatmul.bf16.gmra.mxu0 %v1710
        %v1937 = vpop.f32.mrf.mxu0
        %v1938 = vadd.f32 %v1764, %v1937
        %v1939 = vpop.f32.mrf.mxu0
        %v1940 = vadd.f32 %v1764, %v1939
        %1941 = vmatmul.bf16.gmra.mxu0 %v1712
        %v1942 = vpop.f32.mrf.mxu0
        %v1943 = vadd.f32 %v1764, %v1942
        %v1944 = vpop.f32.mrf.mxu0
        %v1945 = vadd.f32 %v1764, %v1944
        %1946 = vmatmul.bf16.gmra.mxu0 %v1714
        %v1947 = vpop.f32.mrf.mxu0
        %v1948 = vadd.f32 %v1764, %v1947
        %v1949 = vpop.f32.mrf.mxu0
        %v1950 = vadd.f32 %v1764, %v1949
        %1951 = vmatmul.bf16.gmra.mxu0 %v1716
        %v1952 = vpop.f32.mrf.mxu0
        %v1953 = vadd.f32 %v1764, %v1952
        %v1954 = vpop.f32.mrf.mxu0
        %v1955 = vadd.f32 %v1764, %v1954
        %1956 = vmatmul.bf16.gmra.mxu0 %v1718
        %v1957 = vpop.f32.mrf.mxu0
        %v1958 = vadd.f32 %v1764, %v1957
        %v1959 = vpop.f32.mrf.mxu0
        %v1960 = vadd.f32 %v1764, %v1959
        %1961 = vmatmul.bf16.gmra.mxu0 %v1720
        %v1962 = vpop.f32.mrf.mxu0
        %v1963 = vadd.f32 %v1764, %v1962
        %v1964 = vpop.f32.mrf.mxu0
        %v1965 = vadd.f32 %v1764, %v1964
        %1966 = vmatmul.bf16.gmra.mxu0 %v1722
        %v1967 = vpop.f32.mrf.mxu0
        %v1968 = vadd.f32 %v1764, %v1967
        %v1969 = vpop.f32.mrf.mxu0
        %v1970 = vadd.f32 %v1764, %v1969
        %1971 = vmatmul.bf16.gmra.mxu0 %v1724
        %v1972 = vpop.f32.mrf.mxu0
        %v1973 = vadd.f32 %v1764, %v1972
        %v1974 = vpop.f32.mrf.mxu0
        %v1975 = vadd.f32 %v1764, %v1974
        %1976 = vmatmul.bf16.gmra.mxu0 %v1726
        %v1977 = vpop.f32.mrf.mxu0
        %v1978 = vadd.f32 %v1764, %v1977
        %v1979 = vpop.f32.mrf.mxu0
        %v1980 = vadd.f32 %v1764, %v1979
        %1981 = vmatmul.bf16.gmra.mxu0 %v1728
        %v1982 = vpop.f32.mrf.mxu0
        %v1983 = vadd.f32 %v1764, %v1982
        %v1984 = vpop.f32.mrf.mxu0
        %1985 = vdwg.mxu0
        %1986 = vmatpush.bf16.msra.mxu0 %v1894
        %1987 = vmatpush.bf16.msra.mxu0 %v1892
        %1988 = vmatpush.bf16.msra.mxu0 %v1890
        %1989 = vmatpush.bf16.msra.mxu0 %v1888
        %1990 = vmatpush.bf16.msra.mxu0 %v1886
        %1991 = vmatpush.bf16.msra.mxu0 %v1884
        %1992 = vmatpush.bf16.msra.mxu0 %v1882
        %1993 = vmatpush.bf16.msra.mxu0 %v1880
        %1994 = vmatmul.bf16.gmra.mxu0 %v1711
        %v1995 = vpop.f32.mrf.mxu0
        %v1996 = vadd.f32 %v1938, %v1995
        %v1997 = vpop.f32.mrf.mxu0
        %v1998 = vadd.f32 %v1940, %v1997
        %1999 = vmatmul.bf16.gmra.mxu0 %v1713
        %v2000 = vpop.f32.mrf.mxu0
        %v2001 = vadd.f32 %v1943, %v2000
        %v2002 = vpop.f32.mrf.mxu0
        %v2003 = vadd.f32 %v1945, %v2002
        %2004 = vmatmul.bf16.gmra.mxu0 %v1715
        %v2005 = vpop.f32.mrf.mxu0
        %v2006 = vadd.f32 %v1948, %v2005
        %v2007 = vpop.f32.mrf.mxu0
        %v2008 = vadd.f32 %v1950, %v2007
        %2009 = vmatmul.bf16.gmra.mxu0 %v1717
        %v2010 = vpop.f32.mrf.mxu0
        %v2011 = vadd.f32 %v1953, %v2010
        %v2012 = vpop.f32.mrf.mxu0
        %v2013 = vadd.f32 %v1955, %v2012
        %2014 = vmatmul.bf16.gmra.mxu0 %v1719
        %v2015 = vpop.f32.mrf.mxu0
        %v2016 = vadd.f32 %v1958, %v2015
        %v2017 = vpop.f32.mrf.mxu0
        %v2018 = vadd.f32 %v1960, %v2017
        %2019 = vmatmul.bf16.gmra.mxu0 %v1721
        %v2020 = vpop.f32.mrf.mxu0
        %v2021 = vadd.f32 %v1963, %v2020
        %v2022 = vpop.f32.mrf.mxu0
        %v2023 = vadd.f32 %v1965, %v2022
        %2024 = vmatmul.bf16.gmra.mxu0 %v1723
        %v2025 = vpop.f32.mrf.mxu0
        %v2026 = vadd.f32 %v1968, %v2025
        %v2027 = vpop.f32.mrf.mxu0
        %v2028 = vadd.f32 %v1970, %v2027
        %2029 = vmatmul.bf16.gmra.mxu0 %v1725
        %v2030 = vpop.f32.mrf.mxu0
        %v2031 = vadd.f32 %v1973, %v2030
        %v2032 = vpop.f32.mrf.mxu0
        %v2033 = vadd.f32 %v1975, %v2032
        %2034 = vmatmul.bf16.gmra.mxu0 %v1727
        %v2035 = vpop.f32.mrf.mxu0
        %v2036 = vadd.f32 %v1978, %v2035
        %v2037 = vpop.f32.mrf.mxu0
        %v2038 = vadd.f32 %v1980, %v2037
        %2039 = vmatmul.bf16.gmra.mxu0 %v1729
        %v2040 = vpop.f32.mrf.mxu0
        %v2041 = vadd.f32 %v1983, %v2040
        %v2042 = vpop.f32.mrf.mxu0
        %2043 = vdwg.mxu0
        %2044 = vmatpush.bf16.msra.mxu0 %v1879
        %2045 = vmatpush.bf16.msra.mxu0 %v1877
        %2046 = vmatpush.bf16.msra.mxu0 %v1875
        %2047 = vmatpush.bf16.msra.mxu0 %v1873
        %2048 = vmatpush.bf16.msra.mxu0 %v1871
        %2049 = vmatpush.bf16.msra.mxu0 %v1869
        %2050 = vmatpush.bf16.msra.mxu0 %v1867
        %2051 = vmatpush.bf16.msra.mxu0 %v1865
        %2052 = vmatmul.bf16.gmra.mxu0 %v1710
        %v2053 = vpop.f32.mrf.mxu0
        %v2054 = vadd.f32 %v1765, %v2053
        %v2055 = vpop.f32.mrf.mxu0
        %v2056 = vadd.f32 %v1765, %v2055
        %2057 = vmatmul.bf16.gmra.mxu0 %v1712
        %v2058 = vpop.f32.mrf.mxu0
        %v2059 = vadd.f32 %v1765, %v2058
        %v2060 = vpop.f32.mrf.mxu0
        %v2061 = vadd.f32 %v1765, %v2060
        %2062 = vmatmul.bf16.gmra.mxu0 %v1714
        %v2063 = vpop.f32.mrf.mxu0
        %v2064 = vadd.f32 %v1765, %v2063
        %v2065 = vpop.f32.mrf.mxu0
        %v2066 = vadd.f32 %v1765, %v2065
        %2067 = vmatmul.bf16.gmra.mxu0 %v1716
        %v2068 = vpop.f32.mrf.mxu0
        %v2069 = vadd.f32 %v1765, %v2068
        %v2070 = vpop.f32.mrf.mxu0
        %v2071 = vadd.f32 %v1765, %v2070
        %2072 = vmatmul.bf16.gmra.mxu0 %v1718
        %v2073 = vpop.f32.mrf.mxu0
        %v2074 = vadd.f32 %v1765, %v2073
        %v2075 = vpop.f32.mrf.mxu0
        %v2076 = vadd.f32 %v1765, %v2075
        %2077 = vmatmul.bf16.gmra.mxu0 %v1720
        %v2078 = vpop.f32.mrf.mxu0
        %v2079 = vadd.f32 %v1765, %v2078
        %v2080 = vpop.f32.mrf.mxu0
        %v2081 = vadd.f32 %v1765, %v2080
        %2082 = vmatmul.bf16.gmra.mxu0 %v1722
        %v2083 = vpop.f32.mrf.mxu0
        %v2084 = vadd.f32 %v1765, %v2083
        %v2085 = vpop.f32.mrf.mxu0
        %v2086 = vadd.f32 %v1765, %v2085
        %2087 = vmatmul.bf16.gmra.mxu0 %v1724
        %v2088 = vpop.f32.mrf.mxu0
        %v2089 = vadd.f32 %v1765, %v2088
        %v2090 = vpop.f32.mrf.mxu0
        %v2091 = vadd.f32 %v1765, %v2090
        %2092 = vmatmul.bf16.gmra.mxu0 %v1726
        %v2093 = vpop.f32.mrf.mxu0
        %v2094 = vadd.f32 %v1765, %v2093
        %v2095 = vpop.f32.mrf.mxu0
        %v2096 = vadd.f32 %v1765, %v2095
        %2097 = vmatmul.bf16.gmra.mxu0 %v1728
        %v2098 = vpop.f32.mrf.mxu0
        %v2099 = vadd.f32 %v1765, %v2098
        %v2100 = vpop.f32.mrf.mxu0
        %2101 = vdwg.mxu0
        %2102 = vmatpush.bf16.msra.mxu0 %v1895
        %2103 = vmatpush.bf16.msra.mxu0 %v1893
        %2104 = vmatpush.bf16.msra.mxu0 %v1891
        %2105 = vmatpush.bf16.msra.mxu0 %v1889
        %2106 = vmatpush.bf16.msra.mxu0 %v1887
        %2107 = vmatpush.bf16.msra.mxu0 %v1885
        %2108 = vmatpush.bf16.msra.mxu0 %v1883
        %2109 = vmatpush.bf16.msra.mxu0 %v1881
        %2110 = vmatmul.bf16.gmra.mxu0 %v1711
        %v2111 = vpop.f32.mrf.mxu0
        %v2112 = vadd.f32 %v2054, %v2111
        %v2113 = vpop.f32.mrf.mxu0
        %v2114 = vadd.f32 %v2056, %v2113
        %2115 = vmatmul.bf16.gmra.mxu0 %v1713
        %v2116 = vpop.f32.mrf.mxu0
        %v2117 = vadd.f32 %v2059, %v2116
        %v2118 = vpop.f32.mrf.mxu0
        %v2119 = vadd.f32 %v2061, %v2118
        %2120 = vmatmul.bf16.gmra.mxu0 %v1715
        %v2121 = vpop.f32.mrf.mxu0
        %v2122 = vadd.f32 %v2064, %v2121
        %v2123 = vpop.f32.mrf.mxu0
        %v2124 = vadd.f32 %v2066, %v2123
        %2125 = vmatmul.bf16.gmra.mxu0 %v1717
        %v2126 = vpop.f32.mrf.mxu0
        %v2127 = vadd.f32 %v2069, %v2126
        %v2128 = vpop.f32.mrf.mxu0
        %v2129 = vadd.f32 %v2071, %v2128
        %2130 = vmatmul.bf16.gmra.mxu0 %v1719
        %v2131 = vpop.f32.mrf.mxu0
        %v2132 = vadd.f32 %v2074, %v2131
        %v2133 = vpop.f32.mrf.mxu0
        %v2134 = vadd.f32 %v2076, %v2133
        %2135 = vmatmul.bf16.gmra.mxu0 %v1721
        %v2136 = vpop.f32.mrf.mxu0
        %v2137 = vadd.f32 %v2079, %v2136
        %v2138 = vpop.f32.mrf.mxu0
        %v2139 = vadd.f32 %v2081, %v2138
        %2140 = vmatmul.bf16.gmra.mxu0 %v1723
        %v2141 = vpop.f32.mrf.mxu0
        %v2142 = vadd.f32 %v2084, %v2141
        %v2143 = vpop.f32.mrf.mxu0
        %v2144 = vadd.f32 %v2086, %v2143
        %2145 = vmatmul.bf16.gmra.mxu0 %v1725
        %v2146 = vpop.f32.mrf.mxu0
        %v2147 = vadd.f32 %v2089, %v2146
        %v2148 = vpop.f32.mrf.mxu0
        %v2149 = vadd.f32 %v2091, %v2148
        %2150 = vmatmul.bf16.gmra.mxu0 %v1727
        %v2151 = vpop.f32.mrf.mxu0
        %v2152 = vadd.f32 %v2094, %v2151
        %v2153 = vpop.f32.mrf.mxu0
        %v2154 = vadd.f32 %v2096, %v2153
        %2155 = vmatmul.bf16.gmra.mxu0 %v1729
        %v2156 = vpop.f32.mrf.mxu0
        %v2157 = vadd.f32 %v2099, %v2156
        %v2158 = vpop.f32.mrf.mxu0
        %2159 = vdwg.mxu0
        %v2160 = vmax.f32 %v1996, 0.0
        %v2161 = vmax.f32 %v2112, 0.0
        %v2162 = vmax.f32 %v1998, 0.0
        %v2163 = vmax.f32 %v2114, 0.0
        %v2164 = vmax.f32 %v2001, 0.0
        %v2165 = vmax.f32 %v2117, 0.0
        %v2166 = vmax.f32 %v2003, 0.0
        %v2167 = vmax.f32 %v2119, 0.0
        %v2168 = vmax.f32 %v2006, 0.0
        %v2169 = vmax.f32 %v2122, 0.0
        %v2170 = vmax.f32 %v2008, 0.0
        %v2171 = vmax.f32 %v2124, 0.0
        %v2172 = vmax.f32 %v2011, 0.0
        %v2173 = vmax.f32 %v2127, 0.0
        %v2174 = vmax.f32 %v2013, 0.0
        %v2175 = vmax.f32 %v2129, 0.0
        %v2176 = vmax.f32 %v2016, 0.0
        %v2177 = vmax.f32 %v2132, 0.0
        %v2178 = vmax.f32 %v2018, 0.0
        %v2179 = vmax.f32 %v2134, 0.0
        %v2180 = vmax.f32 %v2021, 0.0
        %v2181 = vmax.f32 %v2137, 0.0
        %v2182 = vmax.f32 %v2023, 0.0
        %v2183 = vmax.f32 %v2139, 0.0
        %v2184 = vmax.f32 %v2026, 0.0
        %v2185 = vmax.f32 %v2142, 0.0
        %v2186 = vmax.f32 %v2028, 0.0
        %v2187 = vmax.f32 %v2144, 0.0
        %v2188 = vmax.f32 %v2031, 0.0
        %v2189 = vmax.f32 %v2147, 0.0
        %v2190 = vmax.f32 %v2033, 0.0
        %v2191 = vmax.f32 %v2149, 0.0
        %v2192 = vmax.f32 %v2036, 0.0
        %v2193 = vmax.f32 %v2152, 0.0
        %v2194 = vmax.f32 %v2038, 0.0
        %v2195 = vmax.f32 %v2154, 0.0
        %v2196 = vmax.f32 %v2041, 0.0
        %v2197 = vmax.f32 %v2157, 0.0
        %v2198 = vpack.c.bf16 %v2162, %v2160
        %v2199 = vpack.c.bf16 %v2163, %v2161
        %v2200 = vpack.c.bf16 %v2166, %v2164
        %v2201 = vpack.c.bf16 %v2167, %v2165
        %v2202 = vpack.c.bf16 %v2170, %v2168
        %v2203 = vpack.c.bf16 %v2171, %v2169
        %v2204 = vpack.c.bf16 %v2174, %v2172
        %v2205 = vpack.c.bf16 %v2175, %v2173
        %v2206 = vpack.c.bf16 %v2178, %v2176
        %v2207 = vpack.c.bf16 %v2179, %v2177
        %v2208 = vpack.c.bf16 %v2182, %v2180
        %v2209 = vpack.c.bf16 %v2183, %v2181
        %v2210 = vpack.c.bf16 %v2186, %v2184
        %v2211 = vpack.c.bf16 %v2187, %v2185
        %v2212 = vpack.c.bf16 %v2190, %v2188
        %v2213 = vpack.c.bf16 %v2191, %v2189
        %v2214 = vpack.c.bf16 %v2194, %v2192
        %v2215 = vpack.c.bf16 %v2195, %v2193
        %v2216 = vpack.c.bf16 %v2196, %v2196
        %v2217 = vpack.c.bf16 %v2197, %v2197
        %v2218 = vld [vmem:[%s9] sm:$0xff]
        %v2219 = vld [vmem:[#allocation8] sm:$0xff]
        %v2220 = vld [vmem:[#allocation8 + $0x8] sm:$0xff]
        %v2221 = vld [vmem:[#allocation8 + $0x10] sm:$0xff]
        %v2222 = vld [vmem:[#allocation8 + $0x18] sm:$0xff]
        %v2223 = vld [vmem:[#allocation8 + $0x20] sm:$0xff]
        %v2224 = vld [vmem:[#allocation8 + $0x28] sm:$0xff]
        %v2225 = vld [vmem:[#allocation8 + $0x30] sm:$0xff]
        %v2226 = vld [vmem:[#allocation8 + $0x38] sm:$0xff]
        %v2227 = vld [vmem:[#allocation8 + $0x40] sm:$0xff]
        %v2228 = vld [vmem:[#allocation8 + $0x48] sm:$0xff]
        %v2229 = vld [vmem:[#allocation8 + $0x50] sm:$0xff]
        %v2230 = vld [vmem:[#allocation8 + $0x58] sm:$0xff]
        %v2231 = vld [vmem:[#allocation8 + $0x60] sm:$0xff]
        %v2232 = vld [vmem:[#allocation8 + $0x68] sm:$0xff]
        %v2233 = vld [vmem:[#allocation8 + $0x70] sm:$0xff]
        %v2234 = vld [vmem:[#allocation8 + $0x78] sm:$0xff]
        %v2235 = vld [vmem:[#allocation10] sm:$0xff]
        %v2236 = vld [vmem:[#allocation10 + $0x8] sm:$0xff]
        %v2237 = vld [vmem:[#allocation10 + $0x10] sm:$0xff]
        %v2238 = vld [vmem:[#allocation10 + $0x18] sm:$0xff]
        %v2239 = vld [vmem:[#allocation10 + $0x20] sm:$0xff]
        %v2240 = vld [vmem:[#allocation10 + $0x28] sm:$0xff]
        %v2241 = vld [vmem:[#allocation10 + $0x30] sm:$0xff]
        %v2242 = vld [vmem:[#allocation10 + $0x38] sm:$0xff]
        %v2243 = vld [vmem:[#allocation10 + $0x40] sm:$0xff]
        %v2244 = vld [vmem:[#allocation10 + $0x48] sm:$0xff]
        %v2245 = vld [vmem:[#allocation10 + $0x50] sm:$0xff]
        %v2246 = vld [vmem:[#allocation10 + $0x58] sm:$0xff]
        %v2247 = vld [vmem:[#allocation10 + $0x60] sm:$0xff]
        %v2248 = vld [vmem:[#allocation10 + $0x68] sm:$0xff]
        %v2249 = vld [vmem:[#allocation10 + $0x70] sm:$0xff]
        %v2250 = vld [vmem:[#allocation10 + $0x78] sm:$0xff]
        %v2251 = vld [vmem:[#allocation10 + $0x80] sm:$0xff]
        %v2252 = vld [vmem:[#allocation10 + $0x88] sm:$0xff]
        %v2253 = vld [vmem:[#allocation10 + $0x90] sm:$0xff]
        %v2254 = vld [vmem:[#allocation10 + $0x98] sm:$0xff]
        %v2255 = vld [vmem:[#allocation10 + $0xa0] sm:$0xff]
        %v2256 = vld [vmem:[#allocation10 + $0xa8] sm:$0xff]
        %v2257 = vld [vmem:[#allocation10 + $0xb0] sm:$0xff]
        %v2258 = vld [vmem:[#allocation10 + $0xb8] sm:$0xff]
        %v2259 = vld [vmem:[#allocation10 + $0xc0] sm:$0xff]
        %v2260 = vld [vmem:[#allocation10 + $0xc8] sm:$0xff]
        %v2261 = vld [vmem:[#allocation10 + $0xd0] sm:$0xff]
        %v2262 = vld [vmem:[#allocation10 + $0xd8] sm:$0xff]
        %v2263 = vld [vmem:[#allocation10 + $0xe0] sm:$0xff]
        %v2264 = vld [vmem:[#allocation10 + $0xe8] sm:$0xff]
        %v2265 = vld [vmem:[#allocation10 + $0xf0] sm:$0xff]
        %v2266 = vld [vmem:[#allocation10 + $0xf8] sm:$0xff]
        %v2267 = vld [vmem:[%s12] sm:$0x3]
        %v2284 = vunpack.c.l.b16 %v2219
        %v2285 = vunpack.c.h.b16 %v2219
        %v2286 = vunpack.c.l.b16 %v2220
        %v2287 = vunpack.c.h.b16 %v2220
        %v2288 = vunpack.c.l.b16 %v2221
        %v2289 = vunpack.c.h.b16 %v2221
        %v2290 = vunpack.c.l.b16 %v2222
        %v2291 = vunpack.c.h.b16 %v2222
        %v2292 = vunpack.c.l.b16 %v2223
        %v2293 = vunpack.c.h.b16 %v2223
        %v2294 = vunpack.c.l.b16 %v2224
        %v2295 = vunpack.c.h.b16 %v2224
        %v2296 = vunpack.c.l.b16 %v2225
        %v2297 = vunpack.c.h.b16 %v2225
        %v2298 = vunpack.c.l.b16 %v2226
        %v2299 = vunpack.c.h.b16 %v2226
        %v2300 = vunpack.c.l.b16 %v2227
        %v2301 = vunpack.c.h.b16 %v2227
        %v2302 = vunpack.c.l.b16 %v2228
        %v2303 = vunpack.c.h.b16 %v2228
        %v2304 = vunpack.c.l.b16 %v2229
        %v2305 = vunpack.c.h.b16 %v2229
        %v2306 = vunpack.c.l.b16 %v2230
        %v2307 = vunpack.c.h.b16 %v2230
        %v2308 = vunpack.c.l.b16 %v2231
        %v2309 = vunpack.c.h.b16 %v2231
        %v2310 = vunpack.c.l.b16 %v2232
        %v2311 = vunpack.c.h.b16 %v2232
        %v2312 = vunpack.c.l.b16 %v2233
        %v2313 = vunpack.c.h.b16 %v2233
        %v2314 = vunpack.c.l.b16 %v2234
        %v2315 = vunpack.c.h.b16 %v2234
        %v2316 = vpack.c.b16 %v2286, %v2284
        %v2317 = vpack.c.b16 %v2287, %v2285
        %v2318 = vpack.c.b16 %v2290, %v2288
        %v2319 = vpack.c.b16 %v2291, %v2289
        %v2320 = vpack.c.b16 %v2294, %v2292
        %v2321 = vpack.c.b16 %v2295, %v2293
        %v2322 = vpack.c.b16 %v2298, %v2296
        %v2323 = vpack.c.b16 %v2299, %v2297
        %v2324 = vpack.c.b16 %v2302, %v2300
        %v2325 = vpack.c.b16 %v2303, %v2301
        %v2326 = vpack.c.b16 %v2306, %v2304
        %v2327 = vpack.c.b16 %v2307, %v2305
        %v2328 = vpack.c.b16 %v2310, %v2308
        %v2329 = vpack.c.b16 %v2311, %v2309
        %v2330 = vpack.c.b16 %v2314, %v2312
        %v2331 = vpack.c.b16 %v2315, %v2313
        %2348 = vmatpush.bf16.msra.mxu0 %v2330
        %2349 = vmatpush.bf16.msra.mxu0 %v2328
        %2350 = vmatpush.bf16.msra.mxu0 %v2326
        %2351 = vmatpush.bf16.msra.mxu0 %v2324
        %2352 = vmatpush.bf16.msra.mxu0 %v2322
        %2353 = vmatpush.bf16.msra.mxu0 %v2320
        %2354 = vmatpush.bf16.msra.mxu0 %v2318
        %2355 = vmatpush.bf16.msra.mxu0 %v2316
        %2356 = vmatmul.bf16.gmra.mxu0 %v718
        %v2357 = vpop.f32.mrf.mxu0
        %v2358 = vadd.f32 0.0, %v2357
        %v2359 = vpop.f32.mrf.mxu0
        %v2360 = vadd.f32 0.0, %v2359
        %2361 = vmatmul.bf16.gmra.mxu0 %v719
        %v2362 = vpop.f32.mrf.mxu0
        %v2363 = vadd.f32 0.0, %v2362
        %v2364 = vpop.f32.mrf.mxu0
        %v2365 = vadd.f32 0.0, %v2364
        %2366 = vmatmul.bf16.gmra.mxu0 %v720
        %v2367 = vpop.f32.mrf.mxu0
        %v2368 = vadd.f32 0.0, %v2367
        %v2369 = vpop.f32.mrf.mxu0
        %v2370 = vadd.f32 0.0, %v2369
        %2371 = vmatmul.bf16.gmra.mxu0 %v721
        %v2372 = vpop.f32.mrf.mxu0
        %v2373 = vadd.f32 0.0, %v2372
        %v2374 = vpop.f32.mrf.mxu0
        %v2375 = vadd.f32 0.0, %v2374
        %2376 = vmatmul.bf16.gmra.mxu0 %v722
        %v2377 = vpop.f32.mrf.mxu0
        %v2378 = vadd.f32 0.0, %v2377
        %v2379 = vpop.f32.mrf.mxu0
        %v2380 = vadd.f32 0.0, %v2379
        %2381 = vmatmul.bf16.gmra.mxu0 %v723
        %v2382 = vpop.f32.mrf.mxu0
        %v2383 = vadd.f32 0.0, %v2382
        %v2384 = vpop.f32.mrf.mxu0
        %v2385 = vadd.f32 0.0, %v2384
        %2386 = vmatmul.bf16.gmra.mxu0 %v724
        %v2387 = vpop.f32.mrf.mxu0
        %v2388 = vadd.f32 0.0, %v2387
        %v2389 = vpop.f32.mrf.mxu0
        %v2390 = vadd.f32 0.0, %v2389
        %2391 = vmatmul.bf16.gmra.mxu0 %v725
        %v2392 = vpop.f32.mrf.mxu0
        %v2393 = vadd.f32 0.0, %v2392
        %v2394 = vpop.f32.mrf.mxu0
        %v2395 = vadd.f32 0.0, %v2394
        %2396 = vmatmul.bf16.gmra.mxu0 %v726
        %v2397 = vpop.f32.mrf.mxu0
        %v2398 = vadd.f32 0.0, %v2397
        %v2399 = vpop.f32.mrf.mxu0
        %v2400 = vadd.f32 0.0, %v2399
        %2401 = vmatmul.bf16.gmra.mxu0 %v727
        %v2402 = vpop.f32.mrf.mxu0
        %v2403 = vadd.f32 0.0, %v2402
        %v2404 = vpop.f32.mrf.mxu0
        %2405 = vdwg.mxu0
        %2406 = vmatpush.bf16.msra.mxu0 %v2331
        %2407 = vmatpush.bf16.msra.mxu0 %v2329
        %2408 = vmatpush.bf16.msra.mxu0 %v2327
        %2409 = vmatpush.bf16.msra.mxu0 %v2325
        %2410 = vmatpush.bf16.msra.mxu0 %v2323
        %2411 = vmatpush.bf16.msra.mxu0 %v2321
        %2412 = vmatpush.bf16.msra.mxu0 %v2319
        %2413 = vmatpush.bf16.msra.mxu0 %v2317
        %2414 = vmatmul.bf16.gmra.mxu0 %v718
        %v2415 = vpop.f32.mrf.mxu0
        %v2416 = vadd.f32 0.0, %v2415
        %v2417 = vpop.f32.mrf.mxu0
        %v2418 = vadd.f32 0.0, %v2417
        %2419 = vmatmul.bf16.gmra.mxu0 %v719
        %v2420 = vpop.f32.mrf.mxu0
        %v2421 = vadd.f32 0.0, %v2420
        %v2422 = vpop.f32.mrf.mxu0
        %v2423 = vadd.f32 0.0, %v2422
        %2424 = vmatmul.bf16.gmra.mxu0 %v720
        %v2425 = vpop.f32.mrf.mxu0
        %v2426 = vadd.f32 0.0, %v2425
        %v2427 = vpop.f32.mrf.mxu0
        %v2428 = vadd.f32 0.0, %v2427
        %2429 = vmatmul.bf16.gmra.mxu0 %v721
        %v2430 = vpop.f32.mrf.mxu0
        %v2431 = vadd.f32 0.0, %v2430
        %v2432 = vpop.f32.mrf.mxu0
        %v2433 = vadd.f32 0.0, %v2432
        %2434 = vmatmul.bf16.gmra.mxu0 %v722
        %v2435 = vpop.f32.mrf.mxu0
        %v2436 = vadd.f32 0.0, %v2435
        %v2437 = vpop.f32.mrf.mxu0
        %v2438 = vadd.f32 0.0, %v2437
        %2439 = vmatmul.bf16.gmra.mxu0 %v723
        %v2440 = vpop.f32.mrf.mxu0
        %v2441 = vadd.f32 0.0, %v2440
        %v2442 = vpop.f32.mrf.mxu0
        %v2443 = vadd.f32 0.0, %v2442
        %2444 = vmatmul.bf16.gmra.mxu0 %v724
        %v2445 = vpop.f32.mrf.mxu0
        %v2446 = vadd.f32 0.0, %v2445
        %v2447 = vpop.f32.mrf.mxu0
        %v2448 = vadd.f32 0.0, %v2447
        %2449 = vmatmul.bf16.gmra.mxu0 %v725
        %v2450 = vpop.f32.mrf.mxu0
        %v2451 = vadd.f32 0.0, %v2450
        %v2452 = vpop.f32.mrf.mxu0
        %v2453 = vadd.f32 0.0, %v2452
        %2454 = vmatmul.bf16.gmra.mxu0 %v726
        %v2455 = vpop.f32.mrf.mxu0
        %v2456 = vadd.f32 0.0, %v2455
        %v2457 = vpop.f32.mrf.mxu0
        %v2458 = vadd.f32 0.0, %v2457
        %2459 = vmatmul.bf16.gmra.mxu0 %v727
        %v2460 = vpop.f32.mrf.mxu0
        %v2461 = vadd.f32 0.0, %v2460
        %v2462 = vpop.f32.mrf.mxu0
        %2463 = vdwg.mxu0
        %v2465 = vunpack.c.l.b16 %v2218
        %v2466 = vunpack.c.h.b16 %v2218
        %v2467 = vpack.c.b16 %v2465, %v2465
        %v2468 = vpack.c.b16 %v2466, %v2466
        %v2470 = vsel %vm1018, %v2467, 0
        %v2473 = vsel %vm1018, %v2468, 0
        %2475 = vmatpush.bf16.msra.mxu0 0
        %2476 = vmatpush.bf16.msra.mxu0 0
        %2477 = vmatpush.bf16.msra.mxu0 0
        %2478 = vmatpush.bf16.msra.mxu0 0
        %2479 = vmatpush.bf16.msra.mxu0 0
        %2480 = vmatpush.bf16.msra.mxu0 0
        %2481 = vmatpush.bf16.msra.mxu0 0
        %2482 = vmatpush.bf16.msra.mxu0 %v2470
        %2483 = vmatmul.bf16.gmra.mxu0 %v989
        %v2484 = vpop.f32.mrf.mxu0
        %v2485 = vadd.f32 %v2358, %v2484
        %v2486 = vpop.f32.mrf.mxu0
        %v2487 = vadd.f32 %v2360, %v2486
        %2488 = vmatmul.bf16.gmra.mxu0 %v992
        %v2489 = vpop.f32.mrf.mxu0
        %v2490 = vadd.f32 %v2363, %v2489
        %v2491 = vpop.f32.mrf.mxu0
        %v2492 = vadd.f32 %v2365, %v2491
        %2493 = vmatmul.bf16.gmra.mxu0 %v995
        %v2494 = vpop.f32.mrf.mxu0
        %v2495 = vadd.f32 %v2368, %v2494
        %v2496 = vpop.f32.mrf.mxu0
        %v2497 = vadd.f32 %v2370, %v2496
        %2498 = vmatmul.bf16.gmra.mxu0 %v998
        %v2499 = vpop.f32.mrf.mxu0
        %v2500 = vadd.f32 %v2373, %v2499
        %v2501 = vpop.f32.mrf.mxu0
        %v2502 = vadd.f32 %v2375, %v2501
        %2503 = vmatmul.bf16.gmra.mxu0 %v1001
        %v2504 = vpop.f32.mrf.mxu0
        %v2505 = vadd.f32 %v2378, %v2504
        %v2506 = vpop.f32.mrf.mxu0
        %v2507 = vadd.f32 %v2380, %v2506
        %2508 = vmatmul.bf16.gmra.mxu0 %v1004
        %v2509 = vpop.f32.mrf.mxu0
        %v2510 = vadd.f32 %v2383, %v2509
        %v2511 = vpop.f32.mrf.mxu0
        %v2512 = vadd.f32 %v2385, %v2511
        %2513 = vmatmul.bf16.gmra.mxu0 %v1007
        %v2514 = vpop.f32.mrf.mxu0
        %v2515 = vadd.f32 %v2388, %v2514
        %v2516 = vpop.f32.mrf.mxu0
        %v2517 = vadd.f32 %v2390, %v2516
        %2518 = vmatmul.bf16.gmra.mxu0 %v1010
        %v2519 = vpop.f32.mrf.mxu0
        %v2520 = vadd.f32 %v2393, %v2519
        %v2521 = vpop.f32.mrf.mxu0
        %v2522 = vadd.f32 %v2395, %v2521
        %2523 = vmatmul.bf16.gmra.mxu0 %v1013
        %v2524 = vpop.f32.mrf.mxu0
        %v2525 = vadd.f32 %v2398, %v2524
        %v2526 = vpop.f32.mrf.mxu0
        %v2527 = vadd.f32 %v2400, %v2526
        %2528 = vmatmul.bf16.gmra.mxu0 %v1016
        %v2529 = vpop.f32.mrf.mxu0
        %v2530 = vadd.f32 %v2403, %v2529
        %v2531 = vpop.f32.mrf.mxu0
        %2532 = vdwg.mxu0
        %2533 = vmatpush.bf16.msra.mxu0 0
        %2534 = vmatpush.bf16.msra.mxu0 0
        %2535 = vmatpush.bf16.msra.mxu0 0
        %2536 = vmatpush.bf16.msra.mxu0 0
        %2537 = vmatpush.bf16.msra.mxu0 0
        %2538 = vmatpush.bf16.msra.mxu0 0
        %2539 = vmatpush.bf16.msra.mxu0 0
        %2540 = vmatpush.bf16.msra.mxu0 %v2473
        %2541 = vmatmul.bf16.gmra.mxu0 %v989
        %v2542 = vpop.f32.mrf.mxu0
        %v2543 = vadd.f32 %v2416, %v2542
        %v2544 = vpop.f32.mrf.mxu0
        %v2545 = vadd.f32 %v2418, %v2544
        %2546 = vmatmul.bf16.gmra.mxu0 %v992
        %v2547 = vpop.f32.mrf.mxu0
        %v2548 = vadd.f32 %v2421, %v2547
        %v2549 = vpop.f32.mrf.mxu0
        %v2550 = vadd.f32 %v2423, %v2549
        %2551 = vmatmul.bf16.gmra.mxu0 %v995
        %v2552 = vpop.f32.mrf.mxu0
        %v2553 = vadd.f32 %v2426, %v2552
        %v2554 = vpop.f32.mrf.mxu0
        %v2555 = vadd.f32 %v2428, %v2554
        %2556 = vmatmul.bf16.gmra.mxu0 %v998
        %v2557 = vpop.f32.mrf.mxu0
        %v2558 = vadd.f32 %v2431, %v2557
        %v2559 = vpop.f32.mrf.mxu0
        %v2560 = vadd.f32 %v2433, %v2559
        %2561 = vmatmul.bf16.gmra.mxu0 %v1001
        %v2562 = vpop.f32.mrf.mxu0
        %v2563 = vadd.f32 %v2436, %v2562
        %v2564 = vpop.f32.mrf.mxu0
        %v2565 = vadd.f32 %v2438, %v2564
        %2566 = vmatmul.bf16.gmra.mxu0 %v1004
        %v2567 = vpop.f32.mrf.mxu0
        %v2568 = vadd.f32 %v2441, %v2567
        %v2569 = vpop.f32.mrf.mxu0
        %v2570 = vadd.f32 %v2443, %v2569
        %2571 = vmatmul.bf16.gmra.mxu0 %v1007
        %v2572 = vpop.f32.mrf.mxu0
        %v2573 = vadd.f32 %v2446, %v2572
        %v2574 = vpop.f32.mrf.mxu0
        %v2575 = vadd.f32 %v2448, %v2574
        %2576 = vmatmul.bf16.gmra.mxu0 %v1010
        %v2577 = vpop.f32.mrf.mxu0
        %v2578 = vadd.f32 %v2451, %v2577
        %v2579 = vpop.f32.mrf.mxu0
        %v2580 = vadd.f32 %v2453, %v2579
        %2581 = vmatmul.bf16.gmra.mxu0 %v1013
        %v2582 = vpop.f32.mrf.mxu0
        %v2583 = vadd.f32 %v2456, %v2582
        %v2584 = vpop.f32.mrf.mxu0
        %v2585 = vadd.f32 %v2458, %v2584
        %2586 = vmatmul.bf16.gmra.mxu0 %v1016
        %v2587 = vpop.f32.mrf.mxu0
        %v2588 = vadd.f32 %v2461, %v2587
        %v2589 = vpop.f32.mrf.mxu0
        %2590 = vdwg.mxu0
        %v2623 = vunpack.c.l.b16 %v2235
        %v2624 = vunpack.c.h.b16 %v2235
        %v2625 = vunpack.c.l.b16 %v2236
        %v2626 = vunpack.c.h.b16 %v2236
        %v2627 = vunpack.c.l.b16 %v2237
        %v2628 = vunpack.c.h.b16 %v2237
        %v2629 = vunpack.c.l.b16 %v2238
        %v2630 = vunpack.c.h.b16 %v2238
        %v2631 = vunpack.c.l.b16 %v2239
        %v2632 = vunpack.c.h.b16 %v2239
        %v2633 = vunpack.c.l.b16 %v2240
        %v2634 = vunpack.c.h.b16 %v2240
        %v2635 = vunpack.c.l.b16 %v2241
        %v2636 = vunpack.c.h.b16 %v2241
        %v2637 = vunpack.c.l.b16 %v2242
        %v2638 = vunpack.c.h.b16 %v2242
        %v2639 = vunpack.c.l.b16 %v2243
        %v2640 = vunpack.c.h.b16 %v2243
        %v2641 = vunpack.c.l.b16 %v2244
        %v2642 = vunpack.c.h.b16 %v2244
        %v2643 = vunpack.c.l.b16 %v2245
        %v2644 = vunpack.c.h.b16 %v2245
        %v2645 = vunpack.c.l.b16 %v2246
        %v2646 = vunpack.c.h.b16 %v2246
        %v2647 = vunpack.c.l.b16 %v2247
        %v2648 = vunpack.c.h.b16 %v2247
        %v2649 = vunpack.c.l.b16 %v2248
        %v2650 = vunpack.c.h.b16 %v2248
        %v2651 = vunpack.c.l.b16 %v2249
        %v2652 = vunpack.c.h.b16 %v2249
        %v2653 = vunpack.c.l.b16 %v2250
        %v2654 = vunpack.c.h.b16 %v2250
        %v2655 = vunpack.c.l.b16 %v2251
        %v2656 = vunpack.c.h.b16 %v2251
        %v2657 = vunpack.c.l.b16 %v2252
        %v2658 = vunpack.c.h.b16 %v2252
        %v2659 = vunpack.c.l.b16 %v2253
        %v2660 = vunpack.c.h.b16 %v2253
        %v2661 = vunpack.c.l.b16 %v2254
        %v2662 = vunpack.c.h.b16 %v2254
        %v2663 = vunpack.c.l.b16 %v2255
        %v2664 = vunpack.c.h.b16 %v2255
        %v2665 = vunpack.c.l.b16 %v2256
        %v2666 = vunpack.c.h.b16 %v2256
        %v2667 = vunpack.c.l.b16 %v2257
        %v2668 = vunpack.c.h.b16 %v2257
        %v2669 = vunpack.c.l.b16 %v2258
        %v2670 = vunpack.c.h.b16 %v2258
        %v2671 = vunpack.c.l.b16 %v2259
        %v2672 = vunpack.c.h.b16 %v2259
        %v2673 = vunpack.c.l.b16 %v2260
        %v2674 = vunpack.c.h.b16 %v2260
        %v2675 = vunpack.c.l.b16 %v2261
        %v2676 = vunpack.c.h.b16 %v2261
        %v2677 = vunpack.c.l.b16 %v2262
        %v2678 = vunpack.c.h.b16 %v2262
        %v2679 = vunpack.c.l.b16 %v2263
        %v2680 = vunpack.c.h.b16 %v2263
        %v2681 = vunpack.c.l.b16 %v2264
        %v2682 = vunpack.c.h.b16 %v2264
        %v2683 = vunpack.c.l.b16 %v2265
        %v2684 = vunpack.c.h.b16 %v2265
        %v2685 = vunpack.c.l.b16 %v2266
        %v2686 = vunpack.c.h.b16 %v2266
        %v2687 = vpack.c.b16 %v2625, %v2623
        %v2688 = vpack.c.b16 %v2626, %v2624
        %v2689 = vpack.c.b16 %v2629, %v2627
        %v2690 = vpack.c.b16 %v2630, %v2628
        %v2691 = vpack.c.b16 %v2633, %v2631
        %v2692 = vpack.c.b16 %v2634, %v2632
        %v2693 = vpack.c.b16 %v2637, %v2635
        %v2694 = vpack.c.b16 %v2638, %v2636
        %v2695 = vpack.c.b16 %v2641, %v2639
        %v2696 = vpack.c.b16 %v2642, %v2640
        %v2697 = vpack.c.b16 %v2645, %v2643
        %v2698 = vpack.c.b16 %v2646, %v2644
        %v2699 = vpack.c.b16 %v2649, %v2647
        %v2700 = vpack.c.b16 %v2650, %v2648
        %v2701 = vpack.c.b16 %v2653, %v2651
        %v2702 = vpack.c.b16 %v2654, %v2652
        %v2703 = vpack.c.b16 %v2657, %v2655
        %v2704 = vpack.c.b16 %v2658, %v2656
        %v2705 = vpack.c.b16 %v2661, %v2659
        %v2706 = vpack.c.b16 %v2662, %v2660
        %v2707 = vpack.c.b16 %v2665, %v2663
        %v2708 = vpack.c.b16 %v2666, %v2664
        %v2709 = vpack.c.b16 %v2669, %v2667
        %v2710 = vpack.c.b16 %v2670, %v2668
        %v2711 = vpack.c.b16 %v2673, %v2671
        %v2712 = vpack.c.b16 %v2674, %v2672
        %v2713 = vpack.c.b16 %v2677, %v2675
        %v2714 = vpack.c.b16 %v2678, %v2676
        %v2715 = vpack.c.b16 %v2681, %v2679
        %v2716 = vpack.c.b16 %v2682, %v2680
        %v2717 = vpack.c.b16 %v2685, %v2683
        %v2718 = vpack.c.b16 %v2686, %v2684
        %2751 = vmatpush.bf16.msra.mxu0 %v2701
        %2752 = vmatpush.bf16.msra.mxu0 %v2699
        %2753 = vmatpush.bf16.msra.mxu0 %v2697
        %2754 = vmatpush.bf16.msra.mxu0 %v2695
        %2755 = vmatpush.bf16.msra.mxu0 %v2693
        %2756 = vmatpush.bf16.msra.mxu0 %v2691
        %2757 = vmatpush.bf16.msra.mxu0 %v2689
        %2758 = vmatpush.bf16.msra.mxu0 %v2687
        %2759 = vmatmul.bf16.gmra.mxu0 %v2198
        %v2760 = vpop.f32.mrf.mxu0
        %v2761 = vadd.f32 0.0, %v2760
        %v2762 = vpop.f32.mrf.mxu0
        %v2763 = vadd.f32 0.0, %v2762
        %2764 = vmatmul.bf16.gmra.mxu0 %v2200
        %v2765 = vpop.f32.mrf.mxu0
        %v2766 = vadd.f32 0.0, %v2765
        %v2767 = vpop.f32.mrf.mxu0
        %v2768 = vadd.f32 0.0, %v2767
        %2769 = vmatmul.bf16.gmra.mxu0 %v2202
        %v2770 = vpop.f32.mrf.mxu0
        %v2771 = vadd.f32 0.0, %v2770
        %v2772 = vpop.f32.mrf.mxu0
        %v2773 = vadd.f32 0.0, %v2772
        %2774 = vmatmul.bf16.gmra.mxu0 %v2204
        %v2775 = vpop.f32.mrf.mxu0
        %v2776 = vadd.f32 0.0, %v2775
        %v2777 = vpop.f32.mrf.mxu0
        %v2778 = vadd.f32 0.0, %v2777
        %2779 = vmatmul.bf16.gmra.mxu0 %v2206
        %v2780 = vpop.f32.mrf.mxu0
        %v2781 = vadd.f32 0.0, %v2780
        %v2782 = vpop.f32.mrf.mxu0
        %v2783 = vadd.f32 0.0, %v2782
        %2784 = vmatmul.bf16.gmra.mxu0 %v2208
        %v2785 = vpop.f32.mrf.mxu0
        %v2786 = vadd.f32 0.0, %v2785
        %v2787 = vpop.f32.mrf.mxu0
        %v2788 = vadd.f32 0.0, %v2787
        %2789 = vmatmul.bf16.gmra.mxu0 %v2210
        %v2790 = vpop.f32.mrf.mxu0
        %v2791 = vadd.f32 0.0, %v2790
        %v2792 = vpop.f32.mrf.mxu0
        %v2793 = vadd.f32 0.0, %v2792
        %2794 = vmatmul.bf16.gmra.mxu0 %v2212
        %v2795 = vpop.f32.mrf.mxu0
        %v2796 = vadd.f32 0.0, %v2795
        %v2797 = vpop.f32.mrf.mxu0
        %v2798 = vadd.f32 0.0, %v2797
        %2799 = vmatmul.bf16.gmra.mxu0 %v2214
        %v2800 = vpop.f32.mrf.mxu0
        %v2801 = vadd.f32 0.0, %v2800
        %v2802 = vpop.f32.mrf.mxu0
        %v2803 = vadd.f32 0.0, %v2802
        %2804 = vmatmul.bf16.gmra.mxu0 %v2216
        %v2805 = vpop.f32.mrf.mxu0
        %v2806 = vadd.f32 0.0, %v2805
        %v2807 = vpop.f32.mrf.mxu0
        %2808 = vdwg.mxu0
        %2809 = vmatpush.bf16.msra.mxu0 %v2717
        %2810 = vmatpush.bf16.msra.mxu0 %v2715
        %2811 = vmatpush.bf16.msra.mxu0 %v2713
        %2812 = vmatpush.bf16.msra.mxu0 %v2711
        %2813 = vmatpush.bf16.msra.mxu0 %v2709
        %2814 = vmatpush.bf16.msra.mxu0 %v2707
        %2815 = vmatpush.bf16.msra.mxu0 %v2705
        %2816 = vmatpush.bf16.msra.mxu0 %v2703
        %2817 = vmatmul.bf16.gmra.mxu0 %v2199
        %v2818 = vpop.f32.mrf.mxu0
        %v2819 = vadd.f32 %v2761, %v2818
        %v2820 = vpop.f32.mrf.mxu0
        %v2821 = vadd.f32 %v2763, %v2820
        %2822 = vmatmul.bf16.gmra.mxu0 %v2201
        %v2823 = vpop.f32.mrf.mxu0
        %v2824 = vadd.f32 %v2766, %v2823
        %v2825 = vpop.f32.mrf.mxu0
        %v2826 = vadd.f32 %v2768, %v2825
        %2827 = vmatmul.bf16.gmra.mxu0 %v2203
        %v2828 = vpop.f32.mrf.mxu0
        %v2829 = vadd.f32 %v2771, %v2828
        %v2830 = vpop.f32.mrf.mxu0
        %v2831 = vadd.f32 %v2773, %v2830
        %2832 = vmatmul.bf16.gmra.mxu0 %v2205
        %v2833 = vpop.f32.mrf.mxu0
        %v2834 = vadd.f32 %v2776, %v2833
        %v2835 = vpop.f32.mrf.mxu0
        %v2836 = vadd.f32 %v2778, %v2835
        %2837 = vmatmul.bf16.gmra.mxu0 %v2207
        %v2838 = vpop.f32.mrf.mxu0
        %v2839 = vadd.f32 %v2781, %v2838
        %v2840 = vpop.f32.mrf.mxu0
        %v2841 = vadd.f32 %v2783, %v2840
        %2842 = vmatmul.bf16.gmra.mxu0 %v2209
        %v2843 = vpop.f32.mrf.mxu0
        %v2844 = vadd.f32 %v2786, %v2843
        %v2845 = vpop.f32.mrf.mxu0
        %v2846 = vadd.f32 %v2788, %v2845
        %2847 = vmatmul.bf16.gmra.mxu0 %v2211
        %v2848 = vpop.f32.mrf.mxu0
        %v2849 = vadd.f32 %v2791, %v2848
        %v2850 = vpop.f32.mrf.mxu0
        %v2851 = vadd.f32 %v2793, %v2850
        %2852 = vmatmul.bf16.gmra.mxu0 %v2213
        %v2853 = vpop.f32.mrf.mxu0
        %v2854 = vadd.f32 %v2796, %v2853
        %v2855 = vpop.f32.mrf.mxu0
        %v2856 = vadd.f32 %v2798, %v2855
        %2857 = vmatmul.bf16.gmra.mxu0 %v2215
        %v2858 = vpop.f32.mrf.mxu0
        %v2859 = vadd.f32 %v2801, %v2858
        %v2860 = vpop.f32.mrf.mxu0
        %v2861 = vadd.f32 %v2803, %v2860
        %2862 = vmatmul.bf16.gmra.mxu0 %v2217
        %v2863 = vpop.f32.mrf.mxu0
        %v2864 = vadd.f32 %v2806, %v2863
        %v2865 = vpop.f32.mrf.mxu0
        %2866 = vdwg.mxu0
        %2867 = vmatpush.bf16.msra.mxu0 %v2702
        %2868 = vmatpush.bf16.msra.mxu0 %v2700
        %2869 = vmatpush.bf16.msra.mxu0 %v2698
        %2870 = vmatpush.bf16.msra.mxu0 %v2696
        %2871 = vmatpush.bf16.msra.mxu0 %v2694
        %2872 = vmatpush.bf16.msra.mxu0 %v2692
        %2873 = vmatpush.bf16.msra.mxu0 %v2690
        %2874 = vmatpush.bf16.msra.mxu0 %v2688
        %2875 = vmatmul.bf16.gmra.mxu0 %v2198
        %v2876 = vpop.f32.mrf.mxu0
        %v2877 = vadd.f32 0.0, %v2876
        %v2878 = vpop.f32.mrf.mxu0
        %v2879 = vadd.f32 0.0, %v2878
        %2880 = vmatmul.bf16.gmra.mxu0 %v2200
        %v2881 = vpop.f32.mrf.mxu0
        %v2882 = vadd.f32 0.0, %v2881
        %v2883 = vpop.f32.mrf.mxu0
        %v2884 = vadd.f32 0.0, %v2883
        %2885 = vmatmul.bf16.gmra.mxu0 %v2202
        %v2886 = vpop.f32.mrf.mxu0
        %v2887 = vadd.f32 0.0, %v2886
        %v2888 = vpop.f32.mrf.mxu0
        %v2889 = vadd.f32 0.0, %v2888
        %2890 = vmatmul.bf16.gmra.mxu0 %v2204
        %v2891 = vpop.f32.mrf.mxu0
        %v2892 = vadd.f32 0.0, %v2891
        %v2893 = vpop.f32.mrf.mxu0
        %v2894 = vadd.f32 0.0, %v2893
        %2895 = vmatmul.bf16.gmra.mxu0 %v2206
        %v2896 = vpop.f32.mrf.mxu0
        %v2897 = vadd.f32 0.0, %v2896
        %v2898 = vpop.f32.mrf.mxu0
        %v2899 = vadd.f32 0.0, %v2898
        %2900 = vmatmul.bf16.gmra.mxu0 %v2208
        %v2901 = vpop.f32.mrf.mxu0
        %v2902 = vadd.f32 0.0, %v2901
        %v2903 = vpop.f32.mrf.mxu0
        %v2904 = vadd.f32 0.0, %v2903
        %2905 = vmatmul.bf16.gmra.mxu0 %v2210
        %v2906 = vpop.f32.mrf.mxu0
        %v2907 = vadd.f32 0.0, %v2906
        %v2908 = vpop.f32.mrf.mxu0
        %v2909 = vadd.f32 0.0, %v2908
        %2910 = vmatmul.bf16.gmra.mxu0 %v2212
        %v2911 = vpop.f32.mrf.mxu0
        %v2912 = vadd.f32 0.0, %v2911
        %v2913 = vpop.f32.mrf.mxu0
        %v2914 = vadd.f32 0.0, %v2913
        %2915 = vmatmul.bf16.gmra.mxu0 %v2214
        %v2916 = vpop.f32.mrf.mxu0
        %v2917 = vadd.f32 0.0, %v2916
        %v2918 = vpop.f32.mrf.mxu0
        %v2919 = vadd.f32 0.0, %v2918
        %2920 = vmatmul.bf16.gmra.mxu0 %v2216
        %v2921 = vpop.f32.mrf.mxu0
        %v2922 = vadd.f32 0.0, %v2921
        %v2923 = vpop.f32.mrf.mxu0
        %2924 = vdwg.mxu0
        %2925 = vmatpush.bf16.msra.mxu0 %v2718
        %2926 = vmatpush.bf16.msra.mxu0 %v2716
        %2927 = vmatpush.bf16.msra.mxu0 %v2714
        %2928 = vmatpush.bf16.msra.mxu0 %v2712
        %2929 = vmatpush.bf16.msra.mxu0 %v2710
        %2930 = vmatpush.bf16.msra.mxu0 %v2708
        %2931 = vmatpush.bf16.msra.mxu0 %v2706
        %2932 = vmatpush.bf16.msra.mxu0 %v2704
        %2933 = vmatmul.bf16.gmra.mxu0 %v2199
        %v2934 = vpop.f32.mrf.mxu0
        %v2935 = vadd.f32 %v2877, %v2934
        %v2936 = vpop.f32.mrf.mxu0
        %v2937 = vadd.f32 %v2879, %v2936
        %2938 = vmatmul.bf16.gmra.mxu0 %v2201
        %v2939 = vpop.f32.mrf.mxu0
        %v2940 = vadd.f32 %v2882, %v2939
        %v2941 = vpop.f32.mrf.mxu0
        %v2942 = vadd.f32 %v2884, %v2941
        %2943 = vmatmul.bf16.gmra.mxu0 %v2203
        %v2944 = vpop.f32.mrf.mxu0
        %v2945 = vadd.f32 %v2887, %v2944
        %v2946 = vpop.f32.mrf.mxu0
        %v2947 = vadd.f32 %v2889, %v2946
        %2948 = vmatmul.bf16.gmra.mxu0 %v2205
        %v2949 = vpop.f32.mrf.mxu0
        %v2950 = vadd.f32 %v2892, %v2949
        %v2951 = vpop.f32.mrf.mxu0
        %v2952 = vadd.f32 %v2894, %v2951
        %2953 = vmatmul.bf16.gmra.mxu0 %v2207
        %v2954 = vpop.f32.mrf.mxu0
        %v2955 = vadd.f32 %v2897, %v2954
        %v2956 = vpop.f32.mrf.mxu0
        %v2957 = vadd.f32 %v2899, %v2956
        %2958 = vmatmul.bf16.gmra.mxu0 %v2209
        %v2959 = vpop.f32.mrf.mxu0
        %v2960 = vadd.f32 %v2902, %v2959
        %v2961 = vpop.f32.mrf.mxu0
        %v2962 = vadd.f32 %v2904, %v2961
        %2963 = vmatmul.bf16.gmra.mxu0 %v2211
        %v2964 = vpop.f32.mrf.mxu0
        %v2965 = vadd.f32 %v2907, %v2964
        %v2966 = vpop.f32.mrf.mxu0
        %v2967 = vadd.f32 %v2909, %v2966
        %2968 = vmatmul.bf16.gmra.mxu0 %v2213
        %v2969 = vpop.f32.mrf.mxu0
        %v2970 = vadd.f32 %v2912, %v2969
        %v2971 = vpop.f32.mrf.mxu0
        %v2972 = vadd.f32 %v2914, %v2971
        %2973 = vmatmul.bf16.gmra.mxu0 %v2215
        %v2974 = vpop.f32.mrf.mxu0
        %v2975 = vadd.f32 %v2917, %v2974
        %v2976 = vpop.f32.mrf.mxu0
        %v2977 = vadd.f32 %v2919, %v2976
        %2978 = vmatmul.bf16.gmra.mxu0 %v2217
        %v2979 = vpop.f32.mrf.mxu0
        %v2980 = vadd.f32 %v2922, %v2979
        %v2981 = vpop.f32.mrf.mxu0
        %2982 = vdwg.mxu0
        %v2983 = vadd.f32 %v2485, %v2819
        %v2984 = vadd.f32 %v2543, %v2935
        %v2985 = vadd.f32 %v2487, %v2821
        %v2986 = vadd.f32 %v2545, %v2937
        %v2987 = vadd.f32 %v2490, %v2824
        %v2988 = vadd.f32 %v2548, %v2940
        %v2989 = vadd.f32 %v2492, %v2826
        %v2990 = vadd.f32 %v2550, %v2942
        %v2991 = vadd.f32 %v2495, %v2829
        %v2992 = vadd.f32 %v2553, %v2945
        %v2993 = vadd.f32 %v2497, %v2831
        %v2994 = vadd.f32 %v2555, %v2947
        %v2995 = vadd.f32 %v2500, %v2834
        %v2996 = vadd.f32 %v2558, %v2950
        %v2997 = vadd.f32 %v2502, %v2836
        %v2998 = vadd.f32 %v2560, %v2952
        %v2999 = vadd.f32 %v2505, %v2839
        %v3000 = vadd.f32 %v2563, %v2955
        %v3001 = vadd.f32 %v2507, %v2841
        %v3002 = vadd.f32 %v2565, %v2957
        %v3003 = vadd.f32 %v2510, %v2844
        %v3004 = vadd.f32 %v2568, %v2960
        %v3005 = vadd.f32 %v2512, %v2846
        %v3006 = vadd.f32 %v2570, %v2962
        %v3007 = vadd.f32 %v2515, %v2849
        %v3008 = vadd.f32 %v2573, %v2965
        %v3009 = vadd.f32 %v2517, %v2851
        %v3010 = vadd.f32 %v2575, %v2967
        %v3011 = vadd.f32 %v2520, %v2854
        %v3012 = vadd.f32 %v2578, %v2970
        %v3013 = vadd.f32 %v2522, %v2856
        %v3014 = vadd.f32 %v2580, %v2972
        %v3015 = vadd.f32 %v2525, %v2859
        %v3016 = vadd.f32 %v2583, %v2975
        %v3017 = vadd.f32 %v2527, %v2861
        %v3018 = vadd.f32 %v2585, %v2977
        %v3019 = vadd.f32 %v2530, %v2864
        %v3020 = vadd.f32 %v2588, %v2980
        %v3022 = vperm.slane %v2267, 0
        %v3023 = vperm.slane %v2267, 1
        %v3026 = vadd.f32 %v2983, %v3022
        %v3027 = vadd.f32 %v2984, %v3023
        %v3028 = vadd.f32 %v2985, %v3022
        %v3029 = vadd.f32 %v2986, %v3023
        %v3030 = vadd.f32 %v2987, %v3022
        %v3031 = vadd.f32 %v2988, %v3023
        %v3032 = vadd.f32 %v2989, %v3022
        %v3033 = vadd.f32 %v2990, %v3023
        %v3034 = vadd.f32 %v2991, %v3022
        %v3035 = vadd.f32 %v2992, %v3023
        %v3036 = vadd.f32 %v2993, %v3022
        %v3037 = vadd.f32 %v2994, %v3023
        %v3038 = vadd.f32 %v2995, %v3022
        %v3039 = vadd.f32 %v2996, %v3023
        %v3040 = vadd.f32 %v2997, %v3022
        %v3041 = vadd.f32 %v2998, %v3023
        %v3042 = vadd.f32 %v2999, %v3022
        %v3043 = vadd.f32 %v3000, %v3023
        %v3044 = vadd.f32 %v3001, %v3022
        %v3045 = vadd.f32 %v3002, %v3023
        %v3046 = vadd.f32 %v3003, %v3022
        %v3047 = vadd.f32 %v3004, %v3023
        %v3048 = vadd.f32 %v3005, %v3022
        %v3049 = vadd.f32 %v3006, %v3023
        %v3050 = vadd.f32 %v3007, %v3022
        %v3051 = vadd.f32 %v3008, %v3023
        %v3052 = vadd.f32 %v3009, %v3022
        %v3053 = vadd.f32 %v3010, %v3023
        %v3054 = vadd.f32 %v3011, %v3022
        %v3055 = vadd.f32 %v3012, %v3023
        %v3056 = vadd.f32 %v3013, %v3022
        %v3057 = vadd.f32 %v3014, %v3023
        %v3058 = vadd.f32 %v3015, %v3022
        %v3059 = vadd.f32 %v3016, %v3023
        %v3060 = vadd.f32 %v3017, %v3022
        %v3061 = vadd.f32 %v3018, %v3023
        %v3062 = vadd.f32 %v3019, %v3022
        %v3063 = vadd.f32 %v3020, %v3023
        %v3064 = vmax.f32 %v3026, 0.0
        %v3065 = vmax.f32 %v3027, 0.0
        %v3066 = vmax.f32 %v3028, 0.0
        %v3067 = vmax.f32 %v3029, 0.0
        %v3068 = vmax.f32 %v3030, 0.0
        %v3069 = vmax.f32 %v3031, 0.0
        %v3070 = vmax.f32 %v3032, 0.0
        %v3071 = vmax.f32 %v3033, 0.0
        %v3072 = vmax.f32 %v3034, 0.0
        %v3073 = vmax.f32 %v3035, 0.0
        %v3074 = vmax.f32 %v3036, 0.0
        %v3075 = vmax.f32 %v3037, 0.0
        %v3076 = vmax.f32 %v3038, 0.0
        %v3077 = vmax.f32 %v3039, 0.0
        %v3078 = vmax.f32 %v3040, 0.0
        %v3079 = vmax.f32 %v3041, 0.0
        %v3080 = vmax.f32 %v3042, 0.0
        %v3081 = vmax.f32 %v3043, 0.0
        %v3082 = vmax.f32 %v3044, 0.0
        %v3083 = vmax.f32 %v3045, 0.0
        %v3084 = vmax.f32 %v3046, 0.0
        %v3085 = vmax.f32 %v3047, 0.0
        %v3086 = vmax.f32 %v3048, 0.0
        %v3087 = vmax.f32 %v3049, 0.0
        %v3088 = vmax.f32 %v3050, 0.0
        %v3089 = vmax.f32 %v3051, 0.0
        %v3090 = vmax.f32 %v3052, 0.0
        %v3091 = vmax.f32 %v3053, 0.0
        %v3092 = vmax.f32 %v3054, 0.0
        %v3093 = vmax.f32 %v3055, 0.0
        %v3094 = vmax.f32 %v3056, 0.0
        %v3095 = vmax.f32 %v3057, 0.0
        %v3096 = vmax.f32 %v3058, 0.0
        %v3097 = vmax.f32 %v3059, 0.0
        %v3098 = vmax.f32 %v3060, 0.0
        %v3099 = vmax.f32 %v3061, 0.0
        %v3100 = vmax.f32 %v3062, 0.0
        %v3101 = vmax.f32 %v3063, 0.0
        %v3102 = vpack.c.bf16 %v3066, %v3064
        %v3103 = vpack.c.bf16 %v3067, %v3065
        %v3104 = vpack.c.bf16 %v3070, %v3068
        %v3105 = vpack.c.bf16 %v3071, %v3069
        %v3106 = vpack.c.bf16 %v3074, %v3072
        %v3107 = vpack.c.bf16 %v3075, %v3073
        %v3108 = vpack.c.bf16 %v3078, %v3076
        %v3109 = vpack.c.bf16 %v3079, %v3077
        %v3110 = vpack.c.bf16 %v3082, %v3080
        %v3111 = vpack.c.bf16 %v3083, %v3081
        %v3112 = vpack.c.bf16 %v3086, %v3084
        %v3113 = vpack.c.bf16 %v3087, %v3085
        %v3114 = vpack.c.bf16 %v3090, %v3088
        %v3115 = vpack.c.bf16 %v3091, %v3089
        %v3116 = vpack.c.bf16 %v3094, %v3092
        %v3117 = vpack.c.bf16 %v3095, %v3093
        %v3118 = vpack.c.bf16 %v3098, %v3096
        %v3119 = vpack.c.bf16 %v3099, %v3097
        %v3120 = vpack.c.bf16 %v3100, %v3100
        %v3121 = vpack.c.bf16 %v3101, %v3101
        %v3122 = vld [vmem:[#allocation11] sm:$0xf]
        %v3123 = vld [vmem:[#allocation11 + $0x4] sm:$0xf]
        %v3124 = vld [vmem:[#allocation11 + $0x8] sm:$0xf]
        %v3125 = vld [vmem:[#allocation11 + $0xc] sm:$0xf]
        %v3126 = vld [vmem:[#allocation11 + $0x10] sm:$0xf]
        %v3127 = vld [vmem:[#allocation11 + $0x14] sm:$0xf]
        %v3128 = vld [vmem:[#allocation11 + $0x18] sm:$0xf]
        %v3129 = vld [vmem:[#allocation11 + $0x1c] sm:$0xf]
        %v3130 = vld [vmem:[#allocation11 + $0x20] sm:$0xf]
        %v3131 = vld [vmem:[#allocation11 + $0x24] sm:$0xf]
        %v3132 = vld [vmem:[#allocation11 + $0x28] sm:$0xf]
        %v3133 = vld [vmem:[#allocation11 + $0x2c] sm:$0xf]
        %v3134 = vld [vmem:[#allocation11 + $0x30] sm:$0xf]
        %v3135 = vld [vmem:[#allocation11 + $0x34] sm:$0xf]
        %v3136 = vld [vmem:[#allocation11 + $0x38] sm:$0xf]
        %v3137 = vld [vmem:[#allocation11 + $0x3c] sm:$0xf]
        %v3138 = vld [vmem:[#allocation11 + $0x40] sm:$0xf]
        %v3139 = vld [vmem:[#allocation11 + $0x44] sm:$0xf]
        %v3140 = vld [vmem:[#allocation11 + $0x48] sm:$0xf]
        %v3141 = vld [vmem:[#allocation11 + $0x4c] sm:$0xf]
        %v3142 = vld [vmem:[#allocation11 + $0x50] sm:$0xf]
        %v3143 = vld [vmem:[#allocation11 + $0x54] sm:$0xf]
        %v3144 = vld [vmem:[#allocation11 + $0x58] sm:$0xf]
        %v3145 = vld [vmem:[#allocation11 + $0x5c] sm:$0xf]
        %v3146 = vld [vmem:[#allocation11 + $0x60] sm:$0xf]
        %v3147 = vld [vmem:[#allocation11 + $0x64] sm:$0xf]
        %v3148 = vld [vmem:[#allocation11 + $0x68] sm:$0xf]
        %v3149 = vld [vmem:[#allocation11 + $0x6c] sm:$0xf]
        %v3150 = vld [vmem:[#allocation11 + $0x70] sm:$0xf]
        %v3151 = vld [vmem:[#allocation11 + $0x74] sm:$0xf]
        %v3152 = vld [vmem:[#allocation11 + $0x78] sm:$0xf]
        %v3153 = vld [vmem:[#allocation11 + $0x7c] sm:$0xf]
        %v3154 = vld [vmem:[%s14] sm:$0x1]
        %v3156 = vperm.slane %v3154, 0
        %v3190 = vunpack.c.l.b16 %v3122
        %v3191 = vunpack.c.l.b16 %v3123
        %v3192 = vunpack.c.l.b16 %v3124
        %v3193 = vunpack.c.l.b16 %v3125
        %v3194 = vunpack.c.l.b16 %v3126
        %v3195 = vunpack.c.l.b16 %v3127
        %v3196 = vunpack.c.l.b16 %v3128
        %v3197 = vunpack.c.l.b16 %v3129
        %v3198 = vunpack.c.l.b16 %v3130
        %v3199 = vunpack.c.l.b16 %v3131
        %v3200 = vunpack.c.l.b16 %v3132
        %v3201 = vunpack.c.l.b16 %v3133
        %v3202 = vunpack.c.l.b16 %v3134
        %v3203 = vunpack.c.l.b16 %v3135
        %v3204 = vunpack.c.l.b16 %v3136
        %v3205 = vunpack.c.l.b16 %v3137
        %v3206 = vunpack.c.l.b16 %v3138
        %v3207 = vunpack.c.l.b16 %v3139
        %v3208 = vunpack.c.l.b16 %v3140
        %v3209 = vunpack.c.l.b16 %v3141
        %v3210 = vunpack.c.l.b16 %v3142
        %v3211 = vunpack.c.l.b16 %v3143
        %v3212 = vunpack.c.l.b16 %v3144
        %v3213 = vunpack.c.l.b16 %v3145
        %v3214 = vunpack.c.l.b16 %v3146
        %v3215 = vunpack.c.l.b16 %v3147
        %v3216 = vunpack.c.l.b16 %v3148
        %v3217 = vunpack.c.l.b16 %v3149
        %v3218 = vunpack.c.l.b16 %v3150
        %v3219 = vunpack.c.l.b16 %v3151
        %v3220 = vunpack.c.l.b16 %v3152
        %v3221 = vunpack.c.l.b16 %v3153
        %v3222 = vpack.c.b16 %v3191, %v3190
        %v3223 = vpack.c.b16 %v3193, %v3192
        %v3224 = vpack.c.b16 %v3195, %v3194
        %v3225 = vpack.c.b16 %v3197, %v3196
        %v3226 = vpack.c.b16 %v3199, %v3198
        %v3227 = vpack.c.b16 %v3201, %v3200
        %v3228 = vpack.c.b16 %v3203, %v3202
        %v3229 = vpack.c.b16 %v3205, %v3204
        %v3230 = vpack.c.b16 %v3207, %v3206
        %v3231 = vpack.c.b16 %v3209, %v3208
        %v3232 = vpack.c.b16 %v3211, %v3210
        %v3233 = vpack.c.b16 %v3213, %v3212
        %v3234 = vpack.c.b16 %v3215, %v3214
        %v3235 = vpack.c.b16 %v3217, %v3216
        %v3236 = vpack.c.b16 %v3219, %v3218
        %v3237 = vpack.c.b16 %v3221, %v3220
        %3254 = vmatpush.bf16.msra.mxu0 %v3229
        %3255 = vmatpush.bf16.msra.mxu0 %v3228
        %3256 = vmatpush.bf16.msra.mxu0 %v3227
        %3257 = vmatpush.bf16.msra.mxu0 %v3226
        %3258 = vmatpush.bf16.msra.mxu0 %v3225
        %3259 = vmatpush.bf16.msra.mxu0 %v3224
        %3260 = vmatpush.bf16.msra.mxu0 %v3223
        %3261 = vmatpush.bf16.msra.mxu0 %v3222
        %3262 = vmatmul.bf16.gmra.mxu0 %v3102
        %v3263 = vpop.f32.mrf.mxu0
        %v3264 = vadd.f32 %v3156, %v3263
        %v3265 = vpop.f32.mrf.mxu0
        %v3266 = vadd.f32 %v3156, %v3265
        %3267 = vmatmul.bf16.gmra.mxu0 %v3104
        %v3268 = vpop.f32.mrf.mxu0
        %v3269 = vadd.f32 %v3156, %v3268
        %v3270 = vpop.f32.mrf.mxu0
        %v3271 = vadd.f32 %v3156, %v3270
        %3272 = vmatmul.bf16.gmra.mxu0 %v3106
        %v3273 = vpop.f32.mrf.mxu0
        %v3274 = vadd.f32 %v3156, %v3273
        %v3275 = vpop.f32.mrf.mxu0
        %v3276 = vadd.f32 %v3156, %v3275
        %3277 = vmatmul.bf16.gmra.mxu0 %v3108
        %v3278 = vpop.f32.mrf.mxu0
        %v3279 = vadd.f32 %v3156, %v3278
        %v3280 = vpop.f32.mrf.mxu0
        %v3281 = vadd.f32 %v3156, %v3280
        %3282 = vmatmul.bf16.gmra.mxu0 %v3110
        %v3283 = vpop.f32.mrf.mxu0
        %v3284 = vadd.f32 %v3156, %v3283
        %v3285 = vpop.f32.mrf.mxu0
        %v3286 = vadd.f32 %v3156, %v3285
        %3287 = vmatmul.bf16.gmra.mxu0 %v3112
        %v3288 = vpop.f32.mrf.mxu0
        %v3289 = vadd.f32 %v3156, %v3288
        %v3290 = vpop.f32.mrf.mxu0
        %v3291 = vadd.f32 %v3156, %v3290
        %3292 = vmatmul.bf16.gmra.mxu0 %v3114
        %v3293 = vpop.f32.mrf.mxu0
        %v3294 = vadd.f32 %v3156, %v3293
        %v3295 = vpop.f32.mrf.mxu0
        %v3296 = vadd.f32 %v3156, %v3295
        %3297 = vmatmul.bf16.gmra.mxu0 %v3116
        %v3298 = vpop.f32.mrf.mxu0
        %v3299 = vadd.f32 %v3156, %v3298
        %v3300 = vpop.f32.mrf.mxu0
        %v3301 = vadd.f32 %v3156, %v3300
        %3302 = vmatmul.bf16.gmra.mxu0 %v3118
        %v3303 = vpop.f32.mrf.mxu0
        %v3304 = vadd.f32 %v3156, %v3303
        %v3305 = vpop.f32.mrf.mxu0
        %v3306 = vadd.f32 %v3156, %v3305
        %3307 = vmatmul.bf16.gmra.mxu0 %v3120
        %v3308 = vpop.f32.mrf.mxu0
        %v3309 = vadd.f32 %v3156, %v3308
        %v3310 = vpop.f32.mrf.mxu0
        %3311 = vdwg.mxu0
        %3312 = vmatpush.bf16.msra.mxu0 %v3237
        %3313 = vmatpush.bf16.msra.mxu0 %v3236
        %3314 = vmatpush.bf16.msra.mxu0 %v3235
        %3315 = vmatpush.bf16.msra.mxu0 %v3234
        %3316 = vmatpush.bf16.msra.mxu0 %v3233
        %3317 = vmatpush.bf16.msra.mxu0 %v3232
        %3318 = vmatpush.bf16.msra.mxu0 %v3231
        %3319 = vmatpush.bf16.msra.mxu0 %v3230
        %3320 = vmatmul.bf16.gmra.mxu0 %v3103
        %v3321 = vpop.f32.mrf.mxu0
        %v3322 = vadd.f32 %v3264, %v3321
        %v3323 = vpop.f32.mrf.mxu0
        %v3324 = vadd.f32 %v3266, %v3323
        %3325 = vmatmul.bf16.gmra.mxu0 %v3105
        %v3326 = vpop.f32.mrf.mxu0
        %v3327 = vadd.f32 %v3269, %v3326
        %v3328 = vpop.f32.mrf.mxu0
        %v3329 = vadd.f32 %v3271, %v3328
        %3330 = vmatmul.bf16.gmra.mxu0 %v3107
        %v3331 = vpop.f32.mrf.mxu0
        %v3332 = vadd.f32 %v3274, %v3331
        %v3333 = vpop.f32.mrf.mxu0
        %v3334 = vadd.f32 %v3276, %v3333
        %3335 = vmatmul.bf16.gmra.mxu0 %v3109
        %v3336 = vpop.f32.mrf.mxu0
        %v3337 = vadd.f32 %v3279, %v3336
        %v3338 = vpop.f32.mrf.mxu0
        %v3339 = vadd.f32 %v3281, %v3338
        %3340 = vmatmul.bf16.gmra.mxu0 %v3111
        %v3341 = vpop.f32.mrf.mxu0
        %v3342 = vadd.f32 %v3284, %v3341
        %v3343 = vpop.f32.mrf.mxu0
        %v3344 = vadd.f32 %v3286, %v3343
        %3345 = vmatmul.bf16.gmra.mxu0 %v3113
        %v3346 = vpop.f32.mrf.mxu0
        %v3347 = vadd.f32 %v3289, %v3346
        %v3348 = vpop.f32.mrf.mxu0
        %v3349 = vadd.f32 %v3291, %v3348
        %3350 = vmatmul.bf16.gmra.mxu0 %v3115
        %v3351 = vpop.f32.mrf.mxu0
        %v3352 = vadd.f32 %v3294, %v3351
        %v3353 = vpop.f32.mrf.mxu0
        %v3354 = vadd.f32 %v3296, %v3353
        %3355 = vmatmul.bf16.gmra.mxu0 %v3117
        %v3356 = vpop.f32.mrf.mxu0
        %v3357 = vadd.f32 %v3299, %v3356
        %v3358 = vpop.f32.mrf.mxu0
        %v3359 = vadd.f32 %v3301, %v3358
        %3360 = vmatmul.bf16.gmra.mxu0 %v3119
        %v3361 = vpop.f32.mrf.mxu0
        %v3362 = vadd.f32 %v3304, %v3361
        %v3363 = vpop.f32.mrf.mxu0
        %v3364 = vadd.f32 %v3306, %v3363
        %3365 = vmatmul.bf16.gmra.mxu0 %v3121
        %v3366 = vpop.f32.mrf.mxu0
        %v3367 = vadd.f32 %v3309, %v3366
        %v3368 = vpop.f32.mrf.mxu0
        %3369 = vdwg.mxu0
        %3370 = vst [vmem:[%s614] sm:$0xff] %v3322
        %3371 = vst [vmem:[%s614 + $0x8] sm:$0xff] %v3324
        %3372 = vst [vmem:[%s614 + $0x10] sm:$0xff] %v3327
        %3373 = vst [vmem:[%s614 + $0x18] sm:$0xff] %v3329
        %3374 = vst [vmem:[%s614 + $0x20] sm:$0xff] %v3332
        %3375 = vst [vmem:[%s614 + $0x28] sm:$0xff] %v3334
        %3376 = vst [vmem:[%s614 + $0x30] sm:$0xff] %v3337
        %3377 = vst [vmem:[%s614 + $0x38] sm:$0xff] %v3339
        %3378 = vst [vmem:[%s614 + $0x40] sm:$0xff] %v3342
        %3379 = vst [vmem:[%s614 + $0x48] sm:$0xff] %v3344
        %3380 = vst [vmem:[%s614 + $0x50] sm:$0xff] %v3347
        %3381 = vst [vmem:[%s614 + $0x58] sm:$0xff] %v3349
        %3382 = vst [vmem:[%s614 + $0x60] sm:$0xff] %v3352
        %3383 = vst [vmem:[%s614 + $0x68] sm:$0xff] %v3354
        %3384 = vst [vmem:[%s614 + $0x70] sm:$0xff] %v3357
        %3385 = vst [vmem:[%s614 + $0x78] sm:$0xff] %v3359
        %3386 = vst [vmem:[%s614 + $0x80] sm:$0xff] %v3362
        %3387 = vst [vmem:[%s614 + $0x88] sm:$0xff] %v3364
        %3388 = vst [vmem:[%s614 + $0x90] sm:$0xff] %v3367
        %s3389 = sand.u32 %s368, 1
        %s3390 = scalar_lea.sflag [#allocation4], %s3389
        %s3391 = sand.u32 %s368, 1
        %s3392 = smul.addr %s3391, 152
        %s3393 = scalar_lea.vmem [#allocation13], %s3392
        // Predicated region
        $region105: #{tpu_custom_call.1} parent=79 // pred_check
          %p3394 = pneg %p378
        $region106: #{tpu_custom_call.1} parent=79 // pred_check_branch
          %3396 = sbr.rel (%p3394) target = $region108
        $region107: #{tpu_custom_call.1} parent=79 // pred_region
          %s3397 = smul.u32 19, %s35
          %3399 = vsyncadd %s3390, 0
          %s3400 = smul.addr %s3397, 8
          %s3401 = scalar_lea.hbm %s15, %s3400
          %s3402 = sshll.u32 %s3393, 4
          %s3403 = int_to_ptr.vmem [resolvable:$true] %s3402
          %s3404 = sshll.u32 %s3401, 4
          %s3405 = int_to_ptr.hbm [resolvable:$true] %s3404
          %3410 = dma.vmem_to_hbm [thread:$0]  %s3403, 2432, %s3405, %s3390, 128, 128, 8
        $region108: #{tpu_custom_call.1} parent=79 // pred_fallthru
          _
      $region80: #{tpu_custom_call.1} parent=5 // pred_fallthru
        _
      %p3411 = scmp.le.s32.totalorder 2, %s30
      // Predicated region
      $region109: #{tpu_custom_call.1} parent=5 // pred_check
        %p3412 = pneg %p3411
      $region110: #{tpu_custom_call.1} parent=5 // pred_check_branch
        %3414 = sbr.rel (%p3412) target = $region112
      $region111: #{tpu_custom_call.1} parent=5 // pred_region
        %s3415 = ssub.s32 %s30, 2
        // Predicated region
        $region113: #{tpu_custom_call.1} parent=111 // pred_check
          %p3416 = pneg %p384
        $region114: #{tpu_custom_call.1} parent=111 // pred_check_branch
          %3418 = sbr.rel (%p3416) target = $region116
        $region115: #{tpu_custom_call.1} parent=111 // pred_region
          %s3419 = sand.u32 %s369, 1
          %s3420 = scalar_lea.sflag [#allocation4], %s3419
          %s3421 = sand.u32 %s369, 1
          %s3422 = smul.addr %s3421, 152
          %s3423 = scalar_lea.vmem [#allocation13], %s3422
          %3425 = dma.done %s3420, 2432
        $region116: #{tpu_custom_call.1} parent=111 // pred_fallthru
          _
      $region112: #{tpu_custom_call.1} parent=5 // pred_fallthru
        _
    $region6: #{tpu_custom_call.1} parent=1 // loop_footer
      %s34 = sadd.s32 1, %s30
    $region7: #{tpu_custom_call.1} parent=1 // loop_footer_branch
      %29 = sbr.rel target = $region3
    $region8: #{tpu_custom_call.1} parent=1 // loop_exit
      _
    %3426 = vsyncpa [#allocation3], 1
    %s3427 = scalar_lea.sflag [#allocation3], 1
    %3428 = vsyncpa %s3427, 1
    %3429 = vsyncpa [#allocation6], 1
    %3430 = vsyncpa [#allocation9], 1
    %3431 = vsyncpa [#allocation12], 1
    %3432 = vsyncpa [#allocation4], 1
    %s3433 = scalar_lea.sflag [#allocation4], 1
    %3434 = vsyncpa %s3433, 1

</llo_original>
